<compile_context>
chip_gen: v7x
topology: tpu7x:2x2x1
jax: 0.10.0
libtpu: 0.0.40
codegen_flags: <defaults>
</compile_context>

<pallas_src>
import functools
import math

import jax
import jax.numpy as jnp
from jax import lax
from jax.experimental import pallas as pl
from jax.experimental.pallas import tpu as pltpu

LN_EPS = 1e-12                 # espnet LayerNorm eps
MXU_DTYPE = jnp.bfloat16       # MXU operand dtype (accumulation stays f32)
MASK_BIG = 1.0e30              # masked_fill magnitude pre-softmax


def _round_up(x, m):
    return ((x + m - 1) // m) * m


def _vmem_limit(est_bytes):
    """Scoped-VMEM request: never below the default scoped limit of any generation,
    never above a v7x-safe budget (64 MiB physical per TC)."""
    return int(min(max(32 << 20, 2 * est_bytes + (2 << 20)), 48 << 20))


def _layer_norm(x, g, b):
    m = jnp.mean(x, axis=-1, keepdims=True)
    var = jnp.mean((x - m) ** 2, axis=-1, keepdims=True)
    return (x - m) * lax.rsqrt(var + LN_EPS) * g + b


# --------------------- front-end kernels (Conv2dSubsampling) -----------------

def _dense_kernel(x_ref, w_ref, b_ref, o_ref, *, relu):
    y = jnp.dot(x_ref[...].astype(MXU_DTYPE), w_ref[...].astype(MXU_DTYPE),
                preferred_element_type=jnp.float32) + b_ref[...]
    if relu:
        y = jnp.maximum(y, 0.0)
    o_ref[...] = y.astype(o_ref.dtype)


def dense(x, w, b, relu=False, block_m=512, out_dtype=jnp.float32):
    """y = x @ w + b (opt. ReLU), M-tiled so large im2col inputs pipeline in VMEM.
    block_m=512 keeps HBM-bound im2col matmuls near roofline on v5e/v6e and still
    fits v7x VMEM with double buffering."""
    M, K = x.shape
    N = w.shape[1]
    tm = block_m if M > block_m else _round_up(M, 8)
    Mp = _round_up(M, tm)
    if Mp != M:
        x = jnp.pad(x, ((0, Mp - M), (0, 0)))
    est = 2 * (tm * K * x.dtype.itemsize + K * N * w.dtype.itemsize
               + N * 4 + tm * N * jnp.dtype(out_dtype).itemsize)
    out = pl.pallas_call(
        functools.partial(_dense_kernel, relu=relu),
        grid=(Mp // tm,),
        out_shape=jax.ShapeDtypeStruct((Mp, N), out_dtype),
        in_specs=[pl.BlockSpec((tm, K), lambda i: (i, 0)),
                  pl.BlockSpec((K, N), lambda i: (0, 0)),
                  pl.BlockSpec((1, N), lambda i: (0, 0))],
        out_specs=pl.BlockSpec((tm, N), lambda i: (i, 0)),
        compiler_params=pltpu.CompilerParams(
            dimension_semantics=("parallel",),
            vmem_limit_bytes=_vmem_limit(est)),
    )(x, w, b.reshape(1, N))
    return out[:M]


def _embed_kernel(x_ref, w_ref, b_ref, pe_ref, o_ref, *, scale):
    """Fused: input linear + x*sqrt(D) + positional encoding add (one batch row)."""
    y = jnp.dot(x_ref[...].astype(MXU_DTYPE), w_ref[...].astype(MXU_DTYPE),
                preferred_element_type=jnp.float32) + b_ref[...]
    o_ref[...] = y * scale + pe_ref[...]


def embed_linear(x_btk, w, b, pe, scale):
    """x_btk: (B, Tp, D*F2) padded conv features; pe: (Tp, D) — PE is NOT tiled over
    batch in HBM, it is a single resident block indexed (0, 0) by every grid step."""
    B, Tp, K = x_btk.shape
    N = w.shape[1]
    est = 2 * (Tp * K * x_btk.dtype.itemsize + K * N * w.dtype.itemsize
               + N * 4 + Tp * N * 4 + Tp * N * 4)
    return pl.pallas_call(
        functools.partial(_embed_kernel, scale=scale),
        grid=(B,),
        out_shape=jax.ShapeDtypeStruct((B, Tp, N), jnp.float32),
        in_specs=[pl.BlockSpec((None, Tp, K), lambda i: (i, 0, 0)),
                  pl.BlockSpec((K, N), lambda i: (0, 0)),
                  pl.BlockSpec((1, N), lambda i: (0, 0)),
                  pl.BlockSpec((Tp, N), lambda i: (0, 0))],
        out_specs=pl.BlockSpec((None, Tp, N), lambda i: (i, 0, 0)),
        compiler_params=pltpu.CompilerParams(
            dimension_semantics=("parallel",),
            vmem_limit_bytes=_vmem_limit(est)),
    )(x_btk, w, b.reshape(1, N), pe)


# --------------------------- fused encoder kernel ----------------------------

def _fused_encoder_kernel(tbl_ref, x_ref, keep_ref,
                          ln1g_ref, ln1b_ref, wqkv_ref, bqkv_ref,
                          wo_ref, bo_ref, ln2g_ref, ln2b_ref,
                          w1_ref, b1_ref, w2_ref, b2_ref,
                          afg_ref, afb_ref,
                          o_ref, *, n_heads, batch, seq):
    """One pre-LN transformer layer per grid step; residual stream stays in o_ref."""
    del tbl_ref  # only used by the index_maps
    layer = pl.program_id(1)

    @pl.when(layer == 0)
    def _():
        o_ref[...] = x_ref[...]        # start of this speaker's stack

    D = o_ref.shape[-1]
    dk = D // n_heads
    scale = 1.0 / math.sqrt(dk)

    # ---- multi-headed self attention (normalize_before=True, concat_after=False) ----
    # Batch handled by a real loop (bounds live ranges, no B*H traced copies);
    # per-head contexts are folded straight into the wo projection (no ctx scratch).
    def attn_batch(b, carry):
        row0 = pl.multiple_of(b * seq, 8)            # seq padded to sublane multiple
        rows = pl.ds(row0, seq)
        xb = o_ref[rows, :]                          # (seq, D) residual rows
        keep = keep_ref[rows, :]                     # (seq, seq) 1=valid key, 0=pad
        neg_bias = (keep - 1.0) * MASK_BIG           # 0 where valid, -1e30 where pad

        xnb = _layer_norm(xb, ln1g_ref[...], ln1b_ref[...])
        qkvb = jnp.dot(xnb.astype(MXU_DTYPE), wqkv_ref[...],
                       preferred_element_type=jnp.float32) + bqkv_ref[...]

        att = jnp.zeros((seq, D), jnp.float32)
        # TODO(synk): production D/dk (multiples of 128) -> pack heads into one MXU
        # pass and tile queries flash-style; per-head dots are the toy-size fallback.
        for h in range(n_heads):
            c0 = h * dk
            qh = qkvb[:, c0:c0 + dk].astype(MXU_DTYPE)
            kh = qkvb[:, D + c0:D + c0 + dk].astype(MXU_DTYPE)
            vh = qkvb[:, 2 * D + c0:2 * D + c0 + dk].astype(MXU_DTYPE)
            s = jnp.einsum('qd,kd->qk', qh, kh,
                           preferred_element_type=jnp.float32) * scale + neg_bias
            s = s - jnp.max(s, axis=-1, keepdims=True)
            e = jnp.exp(s)
            p = e * pl.reciprocal(jnp.sum(e, axis=-1, keepdims=True), approx=True)
            p = p * keep                             # masked_fill(0.0) after softmax
            ctx = jnp.dot(p.astype(MXU_DTYPE), vh, preferred_element_type=jnp.float32)
            att = att + jnp.dot(ctx.astype(MXU_DTYPE), wo_ref[c0:c0 + dk, :],
                                preferred_element_type=jnp.float32)

        o_ref[rows, :] = xb + att + bo_ref[...]      # residual add (dropout=id in eval)
        return carry

    lax.fori_loop(0, batch, attn_batch, 0, unroll=batch <= 4)

    # ---- position-wise feed forward (whole residual block) ----
    # TODO(synk): row-tile this over BT (emit_pipeline) for production BT/U on v7x.
    x = o_ref[...]
    xn2 = _layer_norm(x, ln2g_ref[...], ln2b_ref[...])
    h1 = jnp.dot(xn2.astype(MXU_DTYPE), w1_ref[...],
                 preferred_element_type=jnp.float32) + b1_ref[...]
    h1 = jnp.maximum(h1, 0.0)
    ff = jnp.dot(h1.astype(MXU_DTYPE), w2_ref[...],
                 preferred_element_type=jnp.float32) + b2_ref[...]
    o_ref[...] = x + ff

    # ---- after_norm folded into the last (recognition) layer ----
    @pl.when(layer == pl.num_programs(1) - 1)
    def _():
        o_ref[...] = _layer_norm(o_ref[...], afg_ref[...], afb_ref[...])


def fused_encoder(x_emb, keepmask, params, *, n_heads, batch, seq):
    """Run all (speaker-dependent + recognition) layers + after_norm in ONE call."""
    BT, D = x_emb.shape
    layer_tbl = params['layer_tbl']                  # (n_spkrs, n_layers) int32
    n_spkrs, n_layers = layer_tbl.shape

    names = ['ln1_g', 'ln1_b', 'wqkv', 'bqkv', 'wo', 'bo',
             'ln2_g', 'ln2_b', 'w1', 'b1', 'w2', 'b2']
    w_args = [params[n] for n in names]

    def w_spec(a):
        # pick this layer's weight row via the scalar-prefetched table
        return pl.BlockSpec((None,) + a.shape[1:],
                            lambda s, l, tbl: (tbl[s, l], 0, 0))

    # VMEM budget: double-buffered inputs + resident residual stream + headroom.
    est = (2 * x_emb.size * x_emb.dtype.itemsize
           + 2 * keepmask.size * keepmask.dtype.itemsize
           + 2 * sum(math.prod(a.shape[1:]) * a.dtype.itemsize for a in w_args)
           + 4 * params['after_g'].size * 4
           + 2 * BT * D * 4                              # residual-stream output
           + BT * max(params['w1'].shape[-1], 3 * D) * 4)  # in-kernel temporaries

    grid_spec = pltpu.PrefetchScalarGridSpec(
        num_scalar_prefetch=1,
        grid=(n_spkrs, n_layers),
        in_specs=[pl.BlockSpec((BT, D), lambda s, l, tbl: (0, 0)),       # embedding
                  pl.BlockSpec((BT, seq), lambda s, l, tbl: (0, 0))]     # keep mask
                 + [w_spec(a) for a in w_args]
                 + [pl.BlockSpec((1, D), lambda s, l, tbl: (0, 0)),      # after_norm g
                    pl.BlockSpec((1, D), lambda s, l, tbl: (0, 0))],     # after_norm b
        # constant over the layer axis -> residual stream stays resident in VMEM,
        # written back to HBM once per speaker.
        out_specs=pl.BlockSpec((None, BT, D), lambda s, l, tbl: (s, 0, 0)),
    )
    return pl.pallas_call(
        functools.partial(_fused_encoder_kernel,
                          n_heads=n_heads, batch=batch, seq=seq),
        grid_spec=grid_spec,
        out_shape=jax.ShapeDtypeStruct((n_spkrs, BT, D), jnp.float32),
        compiler_params=pltpu.CompilerParams(
            dimension_semantics=("parallel", "arbitrary"),   # speaker/TC on v7x
            vmem_limit_bytes=_vmem_limit(est)),
    )(layer_tbl, x_emb, keepmask, *w_args, params['after_g'], params['after_b'])


# ------------------------------- JAX glue -------------------------------------

def _im2col(x, kh, kw, stride):
    """x: NHWC (B, H, W, C) -> patches (B, Ho, Wo, C*kh*kw)."""
    B, H, W, C = x.shape
    Ho = (H - kh) // stride + 1
    Wo = (W - kw) // stride + 1
    taps = []
    for i in range(kh):
        for j in range(kw):
            taps.append(x[:, i:i + Ho * stride:stride, j:j + Wo * stride:stride, :])
    p = jnp.stack(taps, axis=-1)                     # (B, Ho, Wo, C, kh*kw)
    return p.reshape(B, Ho, Wo, C * kh * kw), Ho, Wo


def _positional_encoding(T, D):
    pos = jnp.arange(T, dtype=jnp.float32)[:, None]
    div = jnp.exp(jnp.arange(0, D, 2, dtype=jnp.float32) * -(math.log(10000.0) / D))
    pe = jnp.zeros((T, D), jnp.float32)
    pe = pe.at[:, 0::2].set(jnp.sin(pos * div))
    pe = pe.at[:, 1::2].set(jnp.cos(pos * div))
    return pe


def conv2d_subsampling(xs, masks, p):
    """Conv2dSubsampling: 2x (3x3 conv, stride 2, ReLU) + fused(linear + PE).
    Conv intermediates are emitted in bf16 to halve the im2col HBM traffic."""
    B, T, idim = xs.shape
    D = p['conv1_w'].shape[1]
    x = xs[..., None]                                   # NHWC, C=1

    # TODO(synk): conv1's K=9 underfills the MXU K dim; fold into lax.conv or pad K
    # at production sizes — kept as a tiny matmul here.
    pat1, T1, F1 = _im2col(x, 3, 3, 2)
    y = dense(pat1.reshape(B * T1 * F1, -1), p['conv1_w'], p['conv1_b'],
              relu=True, out_dtype=MXU_DTYPE)
    y = y.reshape(B, T1, F1, D)

    pat2, T2, F2 = _im2col(y, 3, 3, 2)
    y2 = dense(pat2.reshape(B * T2 * F2, -1), p['conv2_w'], p['conv2_b'],
               relu=True, out_dtype=MXU_DTYPE)
    y2 = y2.reshape(B, T2, F2, D)

    # PyTorch: (B, C, T2, F2).transpose(1, 2).view(B, T2, C*F2) -> channel-major flatten
    y2 = jnp.transpose(y2, (0, 1, 3, 2)).reshape(B, T2, D * F2)

    # pad the subsampled sequence to a sublane multiple; padded frames become masked keys
    T2p = _round_up(T2, 8)
    if T2p != T2:
        y2 = jnp.pad(y2, ((0, 0), (0, T2p - T2), (0, 0)))

    pe = _positional_encoding(T2p, D)                   # single (T2p, D) array
    out = embed_linear(y2, p['lin_w'], p['lin_b'], pe, math.sqrt(D))  # (B, T2p, D)

    # mask subsampling: masks[:, :, :-2:2][:, :, :-2:2]
    new_masks = masks[:, :, :-2:2][:, :, :-2:2]
    return out, new_masks, T2, T2p


def init_params(key, idim, D=32, H=4, U=64, n_sd=2, n_rec=2, n_spkrs=2):
    keys = iter(jax.random.split(key, 64))

    def w(shape, scale=0.05):
        return scale * jax.random.normal(next(keys), shape, jnp.float32)

    F1 = (idim - 3) // 2 + 1
    F2 = (F1 - 3) // 2 + 1
    L = n_spkrs * n_sd + n_rec          # stacked layer rows: [sd spk0 | sd spk1 | rec]
    n_layers = n_sd + n_rec

    params = {
        # conv weights already in matmul form: (C_in*kh*kw, C_out)
        'conv1_w': w((1 * 3 * 3, D)), 'conv1_b': w((D,)),
        'conv2_w': w((D * 3 * 3, D)), 'conv2_b': w((D,)),
        'lin_w': w((D * F2, D)), 'lin_b': w((D,)),
        'after_g': jnp.ones((1, D), jnp.float32),
        'after_b': jnp.zeros((1, D), jnp.float32),
        # stacked per-layer encoder weights (matmul weights pre-cast to bf16 for MXU)
        # TODO(synk): int8 weights are a 2x MXU/DMA win on v5e/v6e but not portable
        # to v7x (fp8-only MXU) — keep bf16 here.
        'ln1_g': jnp.ones((L, 1, D), jnp.float32), 'ln1_b': jnp.zeros((L, 1, D), jnp.float32),
        'wqkv': w((L, D, 3 * D)).astype(MXU_DTYPE), 'bqkv': w((L, 1, 3 * D)),
        'wo': w((L, D, D)).astype(MXU_DTYPE), 'bo': w((L, 1, D)),
        'ln2_g': jnp.ones((L, 1, D), jnp.float32), 'ln2_b': jnp.zeros((L, 1, D), jnp.float32),
        'w1': w((L, D, U)).astype(MXU_DTYPE), 'b1': w((L, 1, U)),
        'w2': w((L, U, D)).astype(MXU_DTYPE), 'b2': w((L, 1, D)),
    }
    # (speaker, layer) -> row in the stacked weight arrays
    tbl = [[(s * n_sd + l) if l < n_sd else (n_spkrs * n_sd + (l - n_sd))
            for l in range(n_layers)] for s in range(n_spkrs)]
    params['layer_tbl'] = jnp.asarray(tbl, jnp.int32)
    return params


def encoder_mix_forward(xs, masks, params, n_heads):
    """EncoderMix.forward: returns ([xs_spk0, xs_spk1, ...], [mask, mask, ...])."""
    B = xs.shape[0]
    x_emb, m_emb, T2, T2p = conv2d_subsampling(xs, masks, params)  # (B, T2p, D)
    D = x_emb.shape[-1]

    # 0/1 float key-validity, expanded per query row -> aligned (B*T2p, T2p) block.
    key_valid = m_emb[:, 0, :].astype(jnp.float32)                  # explicit cast
    if T2p != T2:
        key_valid = jnp.concatenate(
            [key_valid, jnp.zeros((B, T2p - T2), jnp.float32)], axis=-1)
    keepmask = jnp.broadcast_to(key_valid[:, None, :], (B, T2p, T2p))
    keepmask = keepmask.reshape(B * T2p, T2p)

    out = fused_encoder(x_emb.reshape(B * T2p, D), keepmask, params,
                        n_heads=n_heads, batch=B, seq=T2p)   # (n_spkrs, B*T2p, D)
    n_spkrs = out.shape[0]
    out = out.reshape(n_spkrs, B, T2p, D)[:, :, :T2, :]      # drop padded frames
    xs_sd = [out[s] for s in range(n_spkrs)]
    masks_sd = [m_emb for _ in range(n_spkrs)]
    return xs_sd, masks_sd


# --------------------------------- main ----------------------------------------

if __name__ == "__main__":
    key = jax.random.PRNGKey(0)
    k_x, k_p = jax.random.split(key)

    # Small synthetic config: idim=16, attention_dim=32, heads=4, linear_units=64,
    # num_blocks_sd=2, num_blocks_rec=2, num_spkrs=2, batch=2, T=16.
    B, T, idim = 2, 16, 16
    D, H, U = 32, 4, 64

    xs = jax.random.normal(k_x, (B, T, idim), jnp.float32)
    masks = jnp.ones((B, 1, T), jnp.float32)     # all frames valid

    params = init_params(k_p, idim, D=D, H=H, U=U, n_sd=2, n_rec=2, n_spkrs=2)

    fwd = jax.jit(functools.partial(encoder_mix_forward, n_heads=H))
    xs_sd, masks_sd = fwd(xs, masks, params)
    for x in xs_sd:
        jax.block_until_ready(x)
    for m in masks_sd:
        jax.block_until_ready(m)

    assert len(xs_sd) == 2 and xs_sd[0].shape == (B, 3, D) and masks_sd[0].shape == (B, 1, 3)
    assert all(bool(jnp.all(jnp.isfinite(x))) for x in xs_sd)
    print("KERNEL_OK")
</pallas_src>

<mosaic_0001>
module attributes {stable_mosaic.version = 11 : i64} {
  func.func @_dense_kernel(%arg0: i32, %arg1: memref<104x9xf32, #tpu.memory_space<vmem>>, %arg2: memref<9x32xf32, #tpu.memory_space<vmem>>, %arg3: memref<1x32xf32, #tpu.memory_space<vmem>>, %arg4: memref<104x32xbf16, #tpu.memory_space<vmem>>) attributes {dimension_semantics = [#tpu.dimension_semantics<parallel>], iteration_bounds = array<i64: 1>, scalar_prefetch = 0 : i64, scratch_operands = 0 : i64, tpu.core_type = #tpu.core_type<tc>, window_params = [{transform_indices = @transform_0, window_bounds = array<i64: 104, 9>}, {pipeline_mode = #tpu.pipeline_mode<synchronous>, transform_indices = @transform_1, window_bounds = array<i64: 9, 32>}, {pipeline_mode = #tpu.pipeline_mode<synchronous>, transform_indices = @transform_2, window_bounds = array<i64: 1, 32>}, {transform_indices = @transform_3, window_bounds = array<i64: 104, 32>}]} {
    %c0 = arith.constant 0 : index
    %c0_0 = arith.constant 0 : index
    %0 = vector.load %arg1[%c0, %c0_0] : memref<104x9xf32, #tpu.memory_space<vmem>>, vector<104x9xf32>
    %1 = arith.truncf %0 : vector<104x9xf32> to vector<104x9xbf16>
    %c0_1 = arith.constant 0 : index
    %c0_2 = arith.constant 0 : index
    %2 = vector.load %arg2[%c0_1, %c0_2] : memref<9x32xf32, #tpu.memory_space<vmem>>, vector<9x32xf32>
    %3 = arith.truncf %2 : vector<9x32xf32> to vector<9x32xbf16>
    %cst = arith.constant dense<0.000000e+00> : vector<104x32xf32>
    %4 = tpu.matmul %1, %3, %cst {dimension_numbers = #tpu.dot_dimension_numbers<[1], [0], [0], [1], [0, 0, 1, 1], [], []>} : vector<104x9xbf16>, vector<9x32xbf16>, vector<104x32xf32> -> vector<104x32xf32>
    %c0_3 = arith.constant 0 : index
    %c0_4 = arith.constant 0 : index
    %5 = vector.load %arg3[%c0_3, %c0_4] : memref<1x32xf32, #tpu.memory_space<vmem>>, vector<1x32xf32>
    %6 = vector.broadcast %5 : vector<1x32xf32> to vector<104x32xf32>
    %7 = arith.addf %4, %6 : vector<104x32xf32>
    %cst_5 = arith.constant 0.000000e+00 : f32
    %8 = vector.broadcast %cst_5 : f32 to vector<104x32xf32>
    %9 = arith.maximumf %7, %8 : vector<104x32xf32>
    %10 = arith.truncf %9 : vector<104x32xf32> to vector<104x32xbf16>
    %c0_6 = arith.constant 0 : index
    %c0_7 = arith.constant 0 : index
    %11 = vector.load %arg4[%c0_6, %c0_7] : memref<104x32xbf16, #tpu.memory_space<vmem>>, vector<104x32xbf16>
    tpu.vector_store %arg4[%c0_6, %c0_7], %10 {strides = array<i32>} : memref<104x32xbf16, #tpu.memory_space<vmem>>, vector<104x32xbf16>,
    return
  }
  func.func @transform_0(%arg0: i32) -> (i32, i32) {
    %c0_i32 = arith.constant 0 : i32
    %c0_i32_0 = arith.constant 0 : i32
    return %arg0, %c0_i32 : i32, i32
  }
  func.func @transform_1(%arg0: i32) -> (i32, i32) {
    %c0_i32 = arith.constant 0 : i32
    %c0_i32_0 = arith.constant 0 : i32
    %c0_i32_1 = arith.constant 0 : i32
    return %c0_i32, %c0_i32_0 : i32, i32
  }
  func.func @transform_2(%arg0: i32) -> (i32, i32) {
    %c0_i32 = arith.constant 0 : i32
    %c0_i32_0 = arith.constant 0 : i32
    %c0_i32_1 = arith.constant 0 : i32
    return %c0_i32, %c0_i32_0 : i32, i32
  }
  func.func @transform_3(%arg0: i32) -> (i32, i32) {
    %c0_i32 = arith.constant 0 : i32
    %c0_i32_0 = arith.constant 0 : i32
    return %arg0, %c0_i32 : i32, i32
  }
}

module attributes {stable_mosaic.version = 11 : i64} {
  func.func @_dense_kernel(%arg0: i32, %arg1: memref<24x288xbf16, #tpu.memory_space<vmem>>, %arg2: memref<288x32xf32, #tpu.memory_space<vmem>>, %arg3: memref<1x32xf32, #tpu.memory_space<vmem>>, %arg4: memref<24x32xbf16, #tpu.memory_space<vmem>>) attributes {dimension_semantics = [#tpu.dimension_semantics<parallel>], iteration_bounds = array<i64: 1>, scalar_prefetch = 0 : i64, scratch_operands = 0 : i64, tpu.core_type = #tpu.core_type<tc>, window_params = [{transform_indices = @transform_0, window_bounds = array<i64: 24, 288>}, {pipeline_mode = #tpu.pipeline_mode<synchronous>, transform_indices = @transform_1, window_bounds = array<i64: 288, 32>}, {pipeline_mode = #tpu.pipeline_mode<synchronous>, transform_indices = @transform_2, window_bounds = array<i64: 1, 32>}, {transform_indices = @transform_3, window_bounds = array<i64: 24, 32>}]} {
    %c0 = arith.constant 0 : index
    %c0_0 = arith.constant 0 : index
    %0 = vector.load %arg1[%c0, %c0_0] : memref<24x288xbf16, #tpu.memory_space<vmem>>, vector<24x288xbf16>
    %c0_1 = arith.constant 0 : index
    %c0_2 = arith.constant 0 : index
    %1 = vector.load %arg2[%c0_1, %c0_2] : memref<288x32xf32, #tpu.memory_space<vmem>>, vector<288x32xf32>
    %2 = arith.truncf %1 : vector<288x32xf32> to vector<288x32xbf16>
    %cst = arith.constant dense<0.000000e+00> : vector<24x32xf32>
    %3 = tpu.matmul %0, %2, %cst {dimension_numbers = #tpu.dot_dimension_numbers<[1], [0], [0], [1], [0, 0, 1, 1], [], []>} : vector<24x288xbf16>, vector<288x32xbf16>, vector<24x32xf32> -> vector<24x32xf32>
    %c0_3 = arith.constant 0 : index
    %c0_4 = arith.constant 0 : index
    %4 = vector.load %arg3[%c0_3, %c0_4] : memref<1x32xf32, #tpu.memory_space<vmem>>, vector<1x32xf32>
    %5 = vector.broadcast %4 : vector<1x32xf32> to vector<24x32xf32>
    %6 = arith.addf %3, %5 : vector<24x32xf32>
    %cst_5 = arith.constant 0.000000e+00 : f32
    %7 = vector.broadcast %cst_5 : f32 to vector<24x32xf32>
    %8 = arith.maximumf %6, %7 : vector<24x32xf32>
    %9 = arith.truncf %8 : vector<24x32xf32> to vector<24x32xbf16>
    %c0_6 = arith.constant 0 : index
    %c0_7 = arith.constant 0 : index
    %10 = vector.load %arg4[%c0_6, %c0_7] : memref<24x32xbf16, #tpu.memory_space<vmem>>, vector<24x32xbf16>
    tpu.vector_store %arg4[%c0_6, %c0_7], %9 {strides = array<i32>} : memref<24x32xbf16, #tpu.memory_space<vmem>>, vector<24x32xbf16>,
    return
  }
  func.func @transform_0(%arg0: i32) -> (i32, i32) {
    %c0_i32 = arith.constant 0 : i32
    %c0_i32_0 = arith.constant 0 : i32
    return %arg0, %c0_i32 : i32, i32
  }
  func.func @transform_1(%arg0: i32) -> (i32, i32) {
    %c0_i32 = arith.constant 0 : i32
    %c0_i32_0 = arith.constant 0 : i32
    %c0_i32_1 = arith.constant 0 : i32
    return %c0_i32, %c0_i32_0 : i32, i32
  }
  func.func @transform_2(%arg0: i32) -> (i32, i32) {
    %c0_i32 = arith.constant 0 : i32
    %c0_i32_0 = arith.constant 0 : i32
    %c0_i32_1 = arith.constant 0 : i32
    return %c0_i32, %c0_i32_0 : i32, i32
  }
  func.func @transform_3(%arg0: i32) -> (i32, i32) {
    %c0_i32 = arith.constant 0 : i32
    %c0_i32_0 = arith.constant 0 : i32
    return %arg0, %c0_i32 : i32, i32
  }
}

module attributes {stable_mosaic.version = 11 : i64} {
  func.func @_embed_kernel(%arg0: i32, %arg1: memref<1x8x96xbf16, #tpu.memory_space<vmem>>, %arg2: memref<96x32xf32, #tpu.memory_space<vmem>>, %arg3: memref<1x32xf32, #tpu.memory_space<vmem>>, %arg4: memref<8x32xf32, #tpu.memory_space<vmem>>, %arg5: memref<1x8x32xf32, #tpu.memory_space<vmem>>) attributes {dimension_semantics = [#tpu.dimension_semantics<parallel>], iteration_bounds = array<i64: 2>, scalar_prefetch = 0 : i64, scratch_operands = 0 : i64, tpu.core_type = #tpu.core_type<tc>, window_params = [{transform_indices = @transform_0, window_bounds = array<i64: 1, 8, 96>}, {pipeline_mode = #tpu.pipeline_mode<synchronous>, transform_indices = @transform_1, window_bounds = array<i64: 96, 32>}, {pipeline_mode = #tpu.pipeline_mode<synchronous>, transform_indices = @transform_2, window_bounds = array<i64: 1, 32>}, {pipeline_mode = #tpu.pipeline_mode<synchronous>, transform_indices = @transform_3, window_bounds = array<i64: 8, 32>}, {transform_indices = @transform_4, window_bounds = array<i64: 1, 8, 32>}]} {
    %c0 = arith.constant 0 : index
    %c0_0 = arith.constant 0 : index
    %c0_1 = arith.constant 0 : index
    %0 = vector.load %arg1[%c0, %c0_0, %c0_1] : memref<1x8x96xbf16, #tpu.memory_space<vmem>>, vector<1x8x96xbf16>
    %1 = vector.shape_cast %0 : vector<1x8x96xbf16> to vector<8x96xbf16>
    %c0_2 = arith.constant 0 : index
    %c0_3 = arith.constant 0 : index
    %2 = vector.load %arg2[%c0_2, %c0_3] : memref<96x32xf32, #tpu.memory_space<vmem>>, vector<96x32xf32>
    %3 = arith.truncf %2 : vector<96x32xf32> to vector<96x32xbf16>
    %cst = arith.constant dense<0.000000e+00> : vector<8x32xf32>
    %4 = tpu.matmul %1, %3, %cst {dimension_numbers = #tpu.dot_dimension_numbers<[1], [0], [0], [1], [0, 0, 1, 1], [], []>} : vector<8x96xbf16>, vector<96x32xbf16>, vector<8x32xf32> -> vector<8x32xf32>
    %c0_4 = arith.constant 0 : index
    %c0_5 = arith.constant 0 : index
    %5 = vector.load %arg3[%c0_4, %c0_5] : memref<1x32xf32, #tpu.memory_space<vmem>>, vector<1x32xf32>
    %6 = vector.broadcast %5 : vector<1x32xf32> to vector<8x32xf32>
    %7 = arith.addf %4, %6 : vector<8x32xf32>
    %cst_6 = arith.constant 5.65685415 : f32
    %8 = vector.broadcast %cst_6 : f32 to vector<8x32xf32>
    %9 = arith.mulf %7, %8 : vector<8x32xf32>
    %c0_7 = arith.constant 0 : index
    %c0_8 = arith.constant 0 : index
    %10 = vector.load %arg4[%c0_7, %c0_8] : memref<8x32xf32, #tpu.memory_space<vmem>>, vector<8x32xf32>
    %11 = arith.addf %9, %10 : vector<8x32xf32>
    %c0_9 = arith.constant 0 : index
    %c0_10 = arith.constant 0 : index
    %c0_11 = arith.constant 0 : index
    %12 = vector.load %arg5[%c0_9, %c0_10, %c0_11] : memref<1x8x32xf32, #tpu.memory_space<vmem>>, vector<1x8x32xf32>
    %13 = vector.shape_cast %12 : vector<1x8x32xf32> to vector<8x32xf32>
    %14 = vector.shape_cast %11 : vector<8x32xf32> to vector<1x8x32xf32>
    tpu.vector_store %arg5[%c0_9, %c0_10, %c0_11], %14 {strides = array<i32>} : memref<1x8x32xf32, #tpu.memory_space<vmem>>, vector<1x8x32xf32>,
    return
  }
  func.func @transform_0(%arg0: i32) -> (i32, i32, i32) {
    %c0_i32 = arith.constant 0 : i32
    %c0_i32_0 = arith.constant 0 : i32
    %c0_i32_1 = arith.constant 0 : i32
    return %arg0, %c0_i32, %c0_i32_0 : i32, i32, i32
  }
  func.func @transform_1(%arg0: i32) -> (i32, i32) {
    %c0_i32 = arith.constant 0 : i32
    %c0_i32_0 = arith.constant 0 : i32
    %c0_i32_1 = arith.constant 0 : i32
    return %c0_i32, %c0_i32_0 : i32, i32
  }
  func.func @transform_2(%arg0: i32) -> (i32, i32) {
    %c0_i32 = arith.constant 0 : i32
    %c0_i32_0 = arith.constant 0 : i32
    %c0_i32_1 = arith.constant 0 : i32
    return %c0_i32, %c0_i32_0 : i32, i32
  }
  func.func @transform_3(%arg0: i32) -> (i32, i32) {
    %c0_i32 = arith.constant 0 : i32
    %c0_i32_0 = arith.constant 0 : i32
    %c0_i32_1 = arith.constant 0 : i32
    return %c0_i32, %c0_i32_0 : i32, i32
  }
  func.func @transform_4(%arg0: i32) -> (i32, i32, i32) {
    %c0_i32 = arith.constant 0 : i32
    %c0_i32_0 = arith.constant 0 : i32
    %c0_i32_1 = arith.constant 0 : i32
    return %arg0, %c0_i32, %c0_i32_0 : i32, i32, i32
  }
}

module attributes {stable_mosaic.version = 11 : i64} {
  func.func @_fused_encoder_kernel(%arg0: i32, %arg1: i32, %arg2: memref<2x4xi32, #tpu.memory_space<smem>>, %arg3: memref<16x32xf32, #tpu.memory_space<vmem>>, %arg4: memref<16x8xf32, #tpu.memory_space<vmem>>, %arg5: memref<1x1x32xf32, #tpu.memory_space<vmem>>, %arg6: memref<1x1x32xf32, #tpu.memory_space<vmem>>, %arg7: memref<1x32x96xbf16, #tpu.memory_space<vmem>>, %arg8: memref<1x1x96xf32, #tpu.memory_space<vmem>>, %arg9: memref<1x32x32xbf16, #tpu.memory_space<vmem>>, %arg10: memref<1x1x32xf32, #tpu.memory_space<vmem>>, %arg11: memref<1x1x32xf32, #tpu.memory_space<vmem>>, %arg12: memref<1x1x32xf32, #tpu.memory_space<vmem>>, %arg13: memref<1x32x64xbf16, #tpu.memory_space<vmem>>, %arg14: memref<1x1x64xf32, #tpu.memory_space<vmem>>, %arg15: memref<1x64x32xbf16, #tpu.memory_space<vmem>>, %arg16: memref<1x1x32xf32, #tpu.memory_space<vmem>>, %arg17: memref<1x32xf32, #tpu.memory_space<vmem>>, %arg18: memref<1x32xf32, #tpu.memory_space<vmem>>, %arg19: memref<1x16x32xf32, #tpu.memory_space<vmem>>) attributes {dimension_semantics = [#tpu.dimension_semantics<parallel>, #tpu.dimension_semantics<arbitrary>], iteration_bounds = array<i64: 2, 4>, scalar_prefetch = 1 : i64, scratch_operands = 0 : i64, tpu.core_type = #tpu.core_type<tc>, window_params = [{pipeline_mode = #tpu.pipeline_mode<synchronous>, transform_indices = @transform_0, window_bounds = array<i64: 16, 32>}, {pipeline_mode = #tpu.pipeline_mode<synchronous>, transform_indices = @transform_1, window_bounds = array<i64: 16, 8>}, {transform_indices = @transform_2, window_bounds = array<i64: 1, 1, 32>}, {transform_indices = @transform_3, window_bounds = array<i64: 1, 1, 32>}, {transform_indices = @transform_4, window_bounds = array<i64: 1, 32, 96>}, {transform_indices = @transform_5, window_bounds = array<i64: 1, 1, 96>}, {transform_indices = @transform_6, window_bounds = array<i64: 1, 32, 32>}, {transform_indices = @transform_7, window_bounds = array<i64: 1, 1, 32>}, {transform_indices = @transform_8, window_bounds = array<i64: 1, 1, 32>}, {transform_indices = @transform_9, window_bounds = array<i64: 1, 1, 32>}, {transform_indices = @transform_10, window_bounds = array<i64: 1, 32, 64>}, {transform_indices = @transform_11, window_bounds = array<i64: 1, 1, 64>}, {transform_indices = @transform_12, window_bounds = array<i64: 1, 64, 32>}, {transform_indices = @transform_13, window_bounds = array<i64: 1, 1, 32>}, {pipeline_mode = #tpu.pipeline_mode<synchronous>, transform_indices = @transform_14, window_bounds = array<i64: 1, 32>}, {pipeline_mode = #tpu.pipeline_mode<synchronous>, transform_indices = @transform_15, window_bounds = array<i64: 1, 32>}, {transform_indices = @transform_16, window_bounds = array<i64: 1, 16, 32>}]} {
    %c0_i32 = arith.constant 0 : i32
    %0 = arith.cmpi eq, %arg1, %c0_i32 : i32
    %1 = arith.extui %0 : i1 to i32
    %c0_i32_0 = arith.constant 0 : i32
    %2 = arith.cmpi ne, %1, %c0_i32_0 : i32
    scf.if %2 {
      %c0_161 = arith.constant 0 : index
      %c0_162 = arith.constant 0 : index
      %390 = vector.load %arg3[%c0_161, %c0_162] : memref<16x32xf32, #tpu.memory_space<vmem>>, vector<16x32xf32>
      %c0_163 = arith.constant 0 : index
      %c0_164 = arith.constant 0 : index
      %c0_165 = arith.constant 0 : index
      %391 = vector.load %arg19[%c0_163, %c0_164, %c0_165] : memref<1x16x32xf32, #tpu.memory_space<vmem>>, vector<1x16x32xf32>
      %392 = vector.shape_cast %391 : vector<1x16x32xf32> to vector<16x32xf32>
      %393 = vector.shape_cast %390 : vector<16x32xf32> to vector<1x16x32xf32>
      tpu.vector_store %arg19[%c0_163, %c0_164, %c0_165], %393 {strides = array<i32>} : memref<1x16x32xf32, #tpu.memory_space<vmem>>, vector<1x16x32xf32>,
    } else {
    }
    %c0_i32_1 = arith.constant 0 : i32
    %c8_i32 = arith.constant 8 : i32
    %3 = arith.muli %c0_i32_1, %c8_i32 : i32
    %4 = tpu.assume_multiple %3, 8 : i32
    %c0 = arith.constant 0 : index
    %5 = arith.index_cast %4 : i32 to index
    %c0_2 = arith.constant 0 : index
    %6 = vector.load %arg19[%c0, %5, %c0_2] : memref<1x16x32xf32, #tpu.memory_space<vmem>>, vector<1x8x32xf32>
    %7 = vector.shape_cast %6 : vector<1x8x32xf32> to vector<8x32xf32>
    %8 = arith.index_cast %4 : i32 to index
    %c0_3 = arith.constant 0 : index
    %9 = vector.load %arg4[%8, %c0_3] : memref<16x8xf32, #tpu.memory_space<vmem>>, vector<8x8xf32>
    %cst = arith.constant 1.000000e+00 : f32
    %10 = vector.broadcast %cst : f32 to vector<8x8xf32>
    %11 = arith.subf %9, %10 : vector<8x8xf32>
    %cst_4 = arith.constant 1.000000e+30 : f32
    %12 = vector.broadcast %cst_4 : f32 to vector<8x8xf32>
    %13 = arith.mulf %11, %12 : vector<8x8xf32>
    %c0_5 = arith.constant 0 : index
    %c0_6 = arith.constant 0 : index
    %c0_7 = arith.constant 0 : index
    %14 = vector.load %arg5[%c0_5, %c0_6, %c0_7] : memref<1x1x32xf32, #tpu.memory_space<vmem>>, vector<1x1x32xf32>
    %15 = vector.shape_cast %14 : vector<1x1x32xf32> to vector<1x32xf32>
    %c0_8 = arith.constant 0 : index
    %c0_9 = arith.constant 0 : index
    %c0_10 = arith.constant 0 : index
    %16 = vector.load %arg6[%c0_8, %c0_9, %c0_10] : memref<1x1x32xf32, #tpu.memory_space<vmem>>, vector<1x1x32xf32>
    %17 = vector.shape_cast %16 : vector<1x1x32xf32> to vector<1x32xf32>
    %cst_11 = arith.constant dense<0.000000e+00> : vector<8xf32>
    %18 = vector.multi_reduction <add>, %7, %cst_11 [1] : vector<8x32xf32> to vector<8xf32>
    %19 = vector.shape_cast %18 : vector<8xf32> to vector<8x1xf32>
    %cst_12 = arith.constant 3.200000e+01 : f32
    %20 = vector.broadcast %cst_12 : f32 to vector<8x1xf32>
    %21 = arith.divf %19, %20 : vector<8x1xf32>
    %22 = vector.broadcast %21 : vector<8x1xf32> to vector<8x32xf32>
    %23 = arith.subf %7, %22 : vector<8x32xf32>
    %24 = arith.mulf %23, %23 : vector<8x32xf32>
    %cst_13 = arith.constant dense<0.000000e+00> : vector<8xf32>
    %25 = vector.multi_reduction <add>, %24, %cst_13 [1] : vector<8x32xf32> to vector<8xf32>
    %26 = vector.shape_cast %25 : vector<8xf32> to vector<8x1xf32>
    %cst_14 = arith.constant 3.200000e+01 : f32
    %27 = vector.broadcast %cst_14 : f32 to vector<8x1xf32>
    %28 = arith.divf %26, %27 : vector<8x1xf32>
    %29 = vector.broadcast %21 : vector<8x1xf32> to vector<8x32xf32>
    %30 = arith.subf %7, %29 : vector<8x32xf32>
    %cst_15 = arith.constant 9.99999996E-13 : f32
    %31 = vector.broadcast %cst_15 : f32 to vector<8x1xf32>
    %32 = arith.addf %28, %31 : vector<8x1xf32>
    %33 = math.rsqrt %32 : vector<8x1xf32>
    %34 = vector.broadcast %33 : vector<8x1xf32> to vector<8x32xf32>
    %35 = arith.mulf %30, %34 : vector<8x32xf32>
    %36 = vector.broadcast %15 : vector<1x32xf32> to vector<8x32xf32>
    %37 = arith.mulf %35, %36 : vector<8x32xf32>
    %38 = vector.broadcast %17 : vector<1x32xf32> to vector<8x32xf32>
    %39 = arith.addf %37, %38 : vector<8x32xf32>
    %40 = arith.truncf %39 : vector<8x32xf32> to vector<8x32xbf16>
    %c0_16 = arith.constant 0 : index
    %c0_17 = arith.constant 0 : index
    %c0_18 = arith.constant 0 : index
    %41 = vector.load %arg7[%c0_16, %c0_17, %c0_18] : memref<1x32x96xbf16, #tpu.memory_space<vmem>>, vector<1x32x96xbf16>
    %42 = vector.shape_cast %41 : vector<1x32x96xbf16> to vector<32x96xbf16>
    %cst_19 = arith.constant dense<0.000000e+00> : vector<8x96xf32>
    %43 = tpu.matmul %40, %42, %cst_19 {dimension_numbers = #tpu.dot_dimension_numbers<[1], [0], [0], [1], [0, 0, 1, 1], [], []>} : vector<8x32xbf16>, vector<32x96xbf16>, vector<8x96xf32> -> vector<8x96xf32>
    %c0_20 = arith.constant 0 : index
    %c0_21 = arith.constant 0 : index
    %c0_22 = arith.constant 0 : index
    %44 = vector.load %arg8[%c0_20, %c0_21, %c0_22] : memref<1x1x96xf32, #tpu.memory_space<vmem>>, vector<1x1x96xf32>
    %45 = vector.shape_cast %44 : vector<1x1x96xf32> to vector<1x96xf32>
    %46 = vector.broadcast %45 : vector<1x96xf32> to vector<8x96xf32>
    %47 = arith.addf %43, %46 : vector<8x96xf32>
    %cst_23 = arith.constant 0.000000e+00 : f32
    %48 = vector.broadcast %cst_23 : f32 to vector<8x32xf32>
    %49 = vector.extract_strided_slice %47 {offsets = [0, 0], sizes = [8, 8], strides = [1, 1]} : vector<8x96xf32> to vector<8x8xf32>
    %50 = arith.truncf %49 : vector<8x8xf32> to vector<8x8xbf16>
    %51 = vector.extract_strided_slice %47 {offsets = [0, 32], sizes = [8, 8], strides = [1, 1]} : vector<8x96xf32> to vector<8x8xf32>
    %52 = arith.truncf %51 : vector<8x8xf32> to vector<8x8xbf16>
    %53 = vector.extract_strided_slice %47 {offsets = [0, 64], sizes = [8, 8], strides = [1, 1]} : vector<8x96xf32> to vector<8x8xf32>
    %54 = arith.truncf %53 : vector<8x8xf32> to vector<8x8xbf16>
    "tpu.trace_start"() <{level = 10 : i32, message = "qd,kd->qk"}> : () -> ()
    %cst_24 = arith.constant dense<0.000000e+00> : vector<8x8xf32>
    %55 = tpu.matmul %50, %52, %cst_24 {dimension_numbers = #tpu.dot_dimension_numbers<[1], [1], [0], [0], [0, 0, 1, 0], [], []>} : vector<8x8xbf16>, vector<8x8xbf16>, vector<8x8xf32> -> vector<8x8xf32>
    "tpu.trace_stop"() : () -> ()
    %cst_25 = arith.constant 0.353553385 : f32
    %56 = vector.broadcast %cst_25 : f32 to vector<8x8xf32>
    %57 = arith.mulf %55, %56 : vector<8x8xf32>
    %58 = arith.addf %57, %13 : vector<8x8xf32>
    %cst_26 = arith.constant dense<0xFF800000> : vector<8xf32>
    %59 = vector.multi_reduction <maximumf>, %58, %cst_26 [1] : vector<8x8xf32> to vector<8xf32>
    %60 = vector.shape_cast %59 : vector<8xf32> to vector<8x1xf32>
    %61 = vector.broadcast %60 : vector<8x1xf32> to vector<8x8xf32>
    %62 = arith.subf %58, %61 : vector<8x8xf32>
    %63 = math.exp %62 : vector<8x8xf32>
    %cst_27 = arith.constant dense<0.000000e+00> : vector<8xf32>
    %64 = vector.multi_reduction <add>, %63, %cst_27 [1] : vector<8x8xf32> to vector<8xf32>
    %65 = vector.shape_cast %64 : vector<8xf32> to vector<8x1xf32>
    %66 = tpu.reciprocal %65 {approx = true} : vector<8x1xf32> -> vector<8x1xf32>
    %67 = vector.broadcast %66 : vector<8x1xf32> to vector<8x8xf32>
    %68 = arith.mulf %63, %67 : vector<8x8xf32>
    %69 = arith.mulf %68, %9 : vector<8x8xf32>
    %70 = arith.truncf %69 : vector<8x8xf32> to vector<8x8xbf16>
    %cst_28 = arith.constant dense<0.000000e+00> : vector<8x8xf32>
    %71 = tpu.matmul %70, %54, %cst_28 {dimension_numbers = #tpu.dot_dimension_numbers<[1], [0], [0], [1], [0, 0, 1, 1], [], []>} : vector<8x8xbf16>, vector<8x8xbf16>, vector<8x8xf32> -> vector<8x8xf32>
    %72 = arith.truncf %71 : vector<8x8xf32> to vector<8x8xbf16>
    %c0_29 = arith.constant 0 : index
    %c0_30 = arith.constant 0 : index
    %c0_31 = arith.constant 0 : index
    %73 = vector.load %arg9[%c0_29, %c0_30, %c0_31] : memref<1x32x32xbf16, #tpu.memory_space<vmem>>, vector<1x8x32xbf16>
    %74 = vector.shape_cast %73 : vector<1x8x32xbf16> to vector<8x32xbf16>
    %cst_32 = arith.constant dense<0.000000e+00> : vector<8x32xf32>
    %75 = tpu.matmul %72, %74, %cst_32 {dimension_numbers = #tpu.dot_dimension_numbers<[1], [0], [0], [1], [0, 0, 1, 1], [], []>} : vector<8x8xbf16>, vector<8x32xbf16>, vector<8x32xf32> -> vector<8x32xf32>
    %76 = arith.addf %48, %75 : vector<8x32xf32>
    %77 = vector.extract_strided_slice %47 {offsets = [0, 8], sizes = [8, 8], strides = [1, 1]} : vector<8x96xf32> to vector<8x8xf32>
    %78 = arith.truncf %77 : vector<8x8xf32> to vector<8x8xbf16>
    %79 = vector.extract_strided_slice %47 {offsets = [0, 40], sizes = [8, 8], strides = [1, 1]} : vector<8x96xf32> to vector<8x8xf32>
    %80 = arith.truncf %79 : vector<8x8xf32> to vector<8x8xbf16>
    %81 = vector.extract_strided_slice %47 {offsets = [0, 72], sizes = [8, 8], strides = [1, 1]} : vector<8x96xf32> to vector<8x8xf32>
    %82 = arith.truncf %81 : vector<8x8xf32> to vector<8x8xbf16>
    "tpu.trace_start"() <{level = 10 : i32, message = "qd,kd->qk"}> : () -> ()
    %cst_33 = arith.constant dense<0.000000e+00> : vector<8x8xf32>
    %83 = tpu.matmul %78, %80, %cst_33 {dimension_numbers = #tpu.dot_dimension_numbers<[1], [1], [0], [0], [0, 0, 1, 0], [], []>} : vector<8x8xbf16>, vector<8x8xbf16>, vector<8x8xf32> -> vector<8x8xf32>
    "tpu.trace_stop"() : () -> ()
    %cst_34 = arith.constant 0.353553385 : f32
    %84 = vector.broadcast %cst_34 : f32 to vector<8x8xf32>
    %85 = arith.mulf %83, %84 : vector<8x8xf32>
    %86 = arith.addf %85, %13 : vector<8x8xf32>
    %cst_35 = arith.constant dense<0xFF800000> : vector<8xf32>
    %87 = vector.multi_reduction <maximumf>, %86, %cst_35 [1] : vector<8x8xf32> to vector<8xf32>
    %88 = vector.shape_cast %87 : vector<8xf32> to vector<8x1xf32>
    %89 = vector.broadcast %88 : vector<8x1xf32> to vector<8x8xf32>
    %90 = arith.subf %86, %89 : vector<8x8xf32>
    %91 = math.exp %90 : vector<8x8xf32>
    %cst_36 = arith.constant dense<0.000000e+00> : vector<8xf32>
    %92 = vector.multi_reduction <add>, %91, %cst_36 [1] : vector<8x8xf32> to vector<8xf32>
    %93 = vector.shape_cast %92 : vector<8xf32> to vector<8x1xf32>
    %94 = tpu.reciprocal %93 {approx = true} : vector<8x1xf32> -> vector<8x1xf32>
    %95 = vector.broadcast %94 : vector<8x1xf32> to vector<8x8xf32>
    %96 = arith.mulf %91, %95 : vector<8x8xf32>
    %97 = arith.mulf %96, %9 : vector<8x8xf32>
    %98 = arith.truncf %97 : vector<8x8xf32> to vector<8x8xbf16>
    %cst_37 = arith.constant dense<0.000000e+00> : vector<8x8xf32>
    %99 = tpu.matmul %98, %82, %cst_37 {dimension_numbers = #tpu.dot_dimension_numbers<[1], [0], [0], [1], [0, 0, 1, 1], [], []>} : vector<8x8xbf16>, vector<8x8xbf16>, vector<8x8xf32> -> vector<8x8xf32>
    %100 = arith.truncf %99 : vector<8x8xf32> to vector<8x8xbf16>
    %c0_38 = arith.constant 0 : index
    %c8 = arith.constant 8 : index
    %c0_39 = arith.constant 0 : index
    %101 = vector.load %arg9[%c0_38, %c8, %c0_39] : memref<1x32x32xbf16, #tpu.memory_space<vmem>>, vector<1x8x32xbf16>
    %102 = vector.shape_cast %101 : vector<1x8x32xbf16> to vector<8x32xbf16>
    %cst_40 = arith.constant dense<0.000000e+00> : vector<8x32xf32>
    %103 = tpu.matmul %100, %102, %cst_40 {dimension_numbers = #tpu.dot_dimension_numbers<[1], [0], [0], [1], [0, 0, 1, 1], [], []>} : vector<8x8xbf16>, vector<8x32xbf16>, vector<8x32xf32> -> vector<8x32xf32>
    %104 = arith.addf %76, %103 : vector<8x32xf32>
    %105 = vector.extract_strided_slice %47 {offsets = [0, 16], sizes = [8, 8], strides = [1, 1]} : vector<8x96xf32> to vector<8x8xf32>
    %106 = arith.truncf %105 : vector<8x8xf32> to vector<8x8xbf16>
    %107 = vector.extract_strided_slice %47 {offsets = [0, 48], sizes = [8, 8], strides = [1, 1]} : vector<8x96xf32> to vector<8x8xf32>
    %108 = arith.truncf %107 : vector<8x8xf32> to vector<8x8xbf16>
    %109 = vector.extract_strided_slice %47 {offsets = [0, 80], sizes = [8, 8], strides = [1, 1]} : vector<8x96xf32> to vector<8x8xf32>
    %110 = arith.truncf %109 : vector<8x8xf32> to vector<8x8xbf16>
    "tpu.trace_start"() <{level = 10 : i32, message = "qd,kd->qk"}> : () -> ()
    %cst_41 = arith.constant dense<0.000000e+00> : vector<8x8xf32>
    %111 = tpu.matmul %106, %108, %cst_41 {dimension_numbers = #tpu.dot_dimension_numbers<[1], [1], [0], [0], [0, 0, 1, 0], [], []>} : vector<8x8xbf16>, vector<8x8xbf16>, vector<8x8xf32> -> vector<8x8xf32>
    "tpu.trace_stop"() : () -> ()
    %cst_42 = arith.constant 0.353553385 : f32
    %112 = vector.broadcast %cst_42 : f32 to vector<8x8xf32>
    %113 = arith.mulf %111, %112 : vector<8x8xf32>
    %114 = arith.addf %113, %13 : vector<8x8xf32>
    %cst_43 = arith.constant dense<0xFF800000> : vector<8xf32>
    %115 = vector.multi_reduction <maximumf>, %114, %cst_43 [1] : vector<8x8xf32> to vector<8xf32>
    %116 = vector.shape_cast %115 : vector<8xf32> to vector<8x1xf32>
    %117 = vector.broadcast %116 : vector<8x1xf32> to vector<8x8xf32>
    %118 = arith.subf %114, %117 : vector<8x8xf32>
    %119 = math.exp %118 : vector<8x8xf32>
    %cst_44 = arith.constant dense<0.000000e+00> : vector<8xf32>
    %120 = vector.multi_reduction <add>, %119, %cst_44 [1] : vector<8x8xf32> to vector<8xf32>
    %121 = vector.shape_cast %120 : vector<8xf32> to vector<8x1xf32>
    %122 = tpu.reciprocal %121 {approx = true} : vector<8x1xf32> -> vector<8x1xf32>
    %123 = vector.broadcast %122 : vector<8x1xf32> to vector<8x8xf32>
    %124 = arith.mulf %119, %123 : vector<8x8xf32>
    %125 = arith.mulf %124, %9 : vector<8x8xf32>
    %126 = arith.truncf %125 : vector<8x8xf32> to vector<8x8xbf16>
    %cst_45 = arith.constant dense<0.000000e+00> : vector<8x8xf32>
    %127 = tpu.matmul %126, %110, %cst_45 {dimension_numbers = #tpu.dot_dimension_numbers<[1], [0], [0], [1], [0, 0, 1, 1], [], []>} : vector<8x8xbf16>, vector<8x8xbf16>, vector<8x8xf32> -> vector<8x8xf32>
    %128 = arith.truncf %127 : vector<8x8xf32> to vector<8x8xbf16>
    %c0_46 = arith.constant 0 : index
    %c16 = arith.constant 16 : index
    %c0_47 = arith.constant 0 : index
    %129 = vector.load %arg9[%c0_46, %c16, %c0_47] : memref<1x32x32xbf16, #tpu.memory_space<vmem>>, vector<1x8x32xbf16>
    %130 = vector.shape_cast %129 : vector<1x8x32xbf16> to vector<8x32xbf16>
    %cst_48 = arith.constant dense<0.000000e+00> : vector<8x32xf32>
    %131 = tpu.matmul %128, %130, %cst_48 {dimension_numbers = #tpu.dot_dimension_numbers<[1], [0], [0], [1], [0, 0, 1, 1], [], []>} : vector<8x8xbf16>, vector<8x32xbf16>, vector<8x32xf32> -> vector<8x32xf32>
    %132 = arith.addf %104, %131 : vector<8x32xf32>
    %133 = vector.extract_strided_slice %47 {offsets = [0, 24], sizes = [8, 8], strides = [1, 1]} : vector<8x96xf32> to vector<8x8xf32>
    %134 = arith.truncf %133 : vector<8x8xf32> to vector<8x8xbf16>
    %135 = vector.extract_strided_slice %47 {offsets = [0, 56], sizes = [8, 8], strides = [1, 1]} : vector<8x96xf32> to vector<8x8xf32>
    %136 = arith.truncf %135 : vector<8x8xf32> to vector<8x8xbf16>
    %137 = vector.extract_strided_slice %47 {offsets = [0, 88], sizes = [8, 8], strides = [1, 1]} : vector<8x96xf32> to vector<8x8xf32>
    %138 = arith.truncf %137 : vector<8x8xf32> to vector<8x8xbf16>
    "tpu.trace_start"() <{level = 10 : i32, message = "qd,kd->qk"}> : () -> ()
    %cst_49 = arith.constant dense<0.000000e+00> : vector<8x8xf32>
    %139 = tpu.matmul %134, %136, %cst_49 {dimension_numbers = #tpu.dot_dimension_numbers<[1], [1], [0], [0], [0, 0, 1, 0], [], []>} : vector<8x8xbf16>, vector<8x8xbf16>, vector<8x8xf32> -> vector<8x8xf32>
    "tpu.trace_stop"() : () -> ()
    %cst_50 = arith.constant 0.353553385 : f32
    %140 = vector.broadcast %cst_50 : f32 to vector<8x8xf32>
    %141 = arith.mulf %139, %140 : vector<8x8xf32>
    %142 = arith.addf %141, %13 : vector<8x8xf32>
    %cst_51 = arith.constant dense<0xFF800000> : vector<8xf32>
    %143 = vector.multi_reduction <maximumf>, %142, %cst_51 [1] : vector<8x8xf32> to vector<8xf32>
    %144 = vector.shape_cast %143 : vector<8xf32> to vector<8x1xf32>
    %145 = vector.broadcast %144 : vector<8x1xf32> to vector<8x8xf32>
    %146 = arith.subf %142, %145 : vector<8x8xf32>
    %147 = math.exp %146 : vector<8x8xf32>
    %cst_52 = arith.constant dense<0.000000e+00> : vector<8xf32>
    %148 = vector.multi_reduction <add>, %147, %cst_52 [1] : vector<8x8xf32> to vector<8xf32>
    %149 = vector.shape_cast %148 : vector<8xf32> to vector<8x1xf32>
    %150 = tpu.reciprocal %149 {approx = true} : vector<8x1xf32> -> vector<8x1xf32>
    %151 = vector.broadcast %150 : vector<8x1xf32> to vector<8x8xf32>
    %152 = arith.mulf %147, %151 : vector<8x8xf32>
    %153 = arith.mulf %152, %9 : vector<8x8xf32>
    %154 = arith.truncf %153 : vector<8x8xf32> to vector<8x8xbf16>
    %cst_53 = arith.constant dense<0.000000e+00> : vector<8x8xf32>
    %155 = tpu.matmul %154, %138, %cst_53 {dimension_numbers = #tpu.dot_dimension_numbers<[1], [0], [0], [1], [0, 0, 1, 1], [], []>} : vector<8x8xbf16>, vector<8x8xbf16>, vector<8x8xf32> -> vector<8x8xf32>
    %156 = arith.truncf %155 : vector<8x8xf32> to vector<8x8xbf16>
    %c0_54 = arith.constant 0 : index
    %c24 = arith.constant 24 : index
    %c0_55 = arith.constant 0 : index
    %157 = vector.load %arg9[%c0_54, %c24, %c0_55] : memref<1x32x32xbf16, #tpu.memory_space<vmem>>, vector<1x8x32xbf16>
    %158 = vector.shape_cast %157 : vector<1x8x32xbf16> to vector<8x32xbf16>
    %cst_56 = arith.constant dense<0.000000e+00> : vector<8x32xf32>
    %159 = tpu.matmul %156, %158, %cst_56 {dimension_numbers = #tpu.dot_dimension_numbers<[1], [0], [0], [1], [0, 0, 1, 1], [], []>} : vector<8x8xbf16>, vector<8x32xbf16>, vector<8x32xf32> -> vector<8x32xf32>
    %160 = arith.addf %132, %159 : vector<8x32xf32>
    %161 = arith.addf %7, %160 : vector<8x32xf32>
    %c0_57 = arith.constant 0 : index
    %c0_58 = arith.constant 0 : index
    %c0_59 = arith.constant 0 : index
    %162 = vector.load %arg10[%c0_57, %c0_58, %c0_59] : memref<1x1x32xf32, #tpu.memory_space<vmem>>, vector<1x1x32xf32>
    %163 = vector.shape_cast %162 : vector<1x1x32xf32> to vector<1x32xf32>
    %164 = vector.broadcast %163 : vector<1x32xf32> to vector<8x32xf32>
    %165 = arith.addf %161, %164 : vector<8x32xf32>
    %c0_60 = arith.constant 0 : index
    %166 = arith.index_cast %4 : i32 to index
    %c0_61 = arith.constant 0 : index
    %167 = vector.load %arg19[%c0_60, %166, %c0_61] : memref<1x16x32xf32, #tpu.memory_space<vmem>>, vector<1x8x32xf32>
    %168 = vector.shape_cast %167 : vector<1x8x32xf32> to vector<8x32xf32>
    %169 = vector.shape_cast %165 : vector<8x32xf32> to vector<1x8x32xf32>
    tpu.vector_store %arg19[%c0_60, %166, %c0_61], %169 {strides = array<i32>} : memref<1x16x32xf32, #tpu.memory_space<vmem>>, vector<1x8x32xf32>,
    %c1_i32 = arith.constant 1 : i32
    %c8_i32_62 = arith.constant 8 : i32
    %170 = arith.muli %c1_i32, %c8_i32_62 : i32
    %171 = tpu.assume_multiple %170, 8 : i32
    %c0_63 = arith.constant 0 : index
    %172 = arith.index_cast %171 : i32 to index
    %c0_64 = arith.constant 0 : index
    %173 = vector.load %arg19[%c0_63, %172, %c0_64] : memref<1x16x32xf32, #tpu.memory_space<vmem>>, vector<1x8x32xf32>
    %174 = vector.shape_cast %173 : vector<1x8x32xf32> to vector<8x32xf32>
    %175 = arith.index_cast %171 : i32 to index
    %c0_65 = arith.constant 0 : index
    %176 = vector.load %arg4[%175, %c0_65] : memref<16x8xf32, #tpu.memory_space<vmem>>, vector<8x8xf32>
    %cst_66 = arith.constant 1.000000e+00 : f32
    %177 = vector.broadcast %cst_66 : f32 to vector<8x8xf32>
    %178 = arith.subf %176, %177 : vector<8x8xf32>
    %cst_67 = arith.constant 1.000000e+30 : f32
    %179 = vector.broadcast %cst_67 : f32 to vector<8x8xf32>
    %180 = arith.mulf %178, %179 : vector<8x8xf32>
    %c0_68 = arith.constant 0 : index
    %c0_69 = arith.constant 0 : index
    %c0_70 = arith.constant 0 : index
    %181 = vector.load %arg5[%c0_68, %c0_69, %c0_70] : memref<1x1x32xf32, #tpu.memory_space<vmem>>, vector<1x1x32xf32>
    %182 = vector.shape_cast %181 : vector<1x1x32xf32> to vector<1x32xf32>
    %c0_71 = arith.constant 0 : index
    %c0_72 = arith.constant 0 : index
    %c0_73 = arith.constant 0 : index
    %183 = vector.load %arg6[%c0_71, %c0_72, %c0_73] : memref<1x1x32xf32, #tpu.memory_space<vmem>>, vector<1x1x32xf32>
    %184 = vector.shape_cast %183 : vector<1x1x32xf32> to vector<1x32xf32>
    %cst_74 = arith.constant dense<0.000000e+00> : vector<8xf32>
    %185 = vector.multi_reduction <add>, %174, %cst_74 [1] : vector<8x32xf32> to vector<8xf32>
    %186 = vector.shape_cast %185 : vector<8xf32> to vector<8x1xf32>
    %cst_75 = arith.constant 3.200000e+01 : f32
    %187 = vector.broadcast %cst_75 : f32 to vector<8x1xf32>
    %188 = arith.divf %186, %187 : vector<8x1xf32>
    %189 = vector.broadcast %188 : vector<8x1xf32> to vector<8x32xf32>
    %190 = arith.subf %174, %189 : vector<8x32xf32>
    %191 = arith.mulf %190, %190 : vector<8x32xf32>
    %cst_76 = arith.constant dense<0.000000e+00> : vector<8xf32>
    %192 = vector.multi_reduction <add>, %191, %cst_76 [1] : vector<8x32xf32> to vector<8xf32>
    %193 = vector.shape_cast %192 : vector<8xf32> to vector<8x1xf32>
    %cst_77 = arith.constant 3.200000e+01 : f32
    %194 = vector.broadcast %cst_77 : f32 to vector<8x1xf32>
    %195 = arith.divf %193, %194 : vector<8x1xf32>
    %196 = vector.broadcast %188 : vector<8x1xf32> to vector<8x32xf32>
    %197 = arith.subf %174, %196 : vector<8x32xf32>
    %cst_78 = arith.constant 9.99999996E-13 : f32
    %198 = vector.broadcast %cst_78 : f32 to vector<8x1xf32>
    %199 = arith.addf %195, %198 : vector<8x1xf32>
    %200 = math.rsqrt %199 : vector<8x1xf32>
    %201 = vector.broadcast %200 : vector<8x1xf32> to vector<8x32xf32>
    %202 = arith.mulf %197, %201 : vector<8x32xf32>
    %203 = vector.broadcast %182 : vector<1x32xf32> to vector<8x32xf32>
    %204 = arith.mulf %202, %203 : vector<8x32xf32>
    %205 = vector.broadcast %184 : vector<1x32xf32> to vector<8x32xf32>
    %206 = arith.addf %204, %205 : vector<8x32xf32>
    %207 = arith.truncf %206 : vector<8x32xf32> to vector<8x32xbf16>
    %c0_79 = arith.constant 0 : index
    %c0_80 = arith.constant 0 : index
    %c0_81 = arith.constant 0 : index
    %208 = vector.load %arg7[%c0_79, %c0_80, %c0_81] : memref<1x32x96xbf16, #tpu.memory_space<vmem>>, vector<1x32x96xbf16>
    %209 = vector.shape_cast %208 : vector<1x32x96xbf16> to vector<32x96xbf16>
    %cst_82 = arith.constant dense<0.000000e+00> : vector<8x96xf32>
    %210 = tpu.matmul %207, %209, %cst_82 {dimension_numbers = #tpu.dot_dimension_numbers<[1], [0], [0], [1], [0, 0, 1, 1], [], []>} : vector<8x32xbf16>, vector<32x96xbf16>, vector<8x96xf32> -> vector<8x96xf32>
    %c0_83 = arith.constant 0 : index
    %c0_84 = arith.constant 0 : index
    %c0_85 = arith.constant 0 : index
    %211 = vector.load %arg8[%c0_83, %c0_84, %c0_85] : memref<1x1x96xf32, #tpu.memory_space<vmem>>, vector<1x1x96xf32>
    %212 = vector.shape_cast %211 : vector<1x1x96xf32> to vector<1x96xf32>
    %213 = vector.broadcast %212 : vector<1x96xf32> to vector<8x96xf32>
    %214 = arith.addf %210, %213 : vector<8x96xf32>
    %cst_86 = arith.constant 0.000000e+00 : f32
    %215 = vector.broadcast %cst_86 : f32 to vector<8x32xf32>
    %216 = vector.extract_strided_slice %214 {offsets = [0, 0], sizes = [8, 8], strides = [1, 1]} : vector<8x96xf32> to vector<8x8xf32>
    %217 = arith.truncf %216 : vector<8x8xf32> to vector<8x8xbf16>
    %218 = vector.extract_strided_slice %214 {offsets = [0, 32], sizes = [8, 8], strides = [1, 1]} : vector<8x96xf32> to vector<8x8xf32>
    %219 = arith.truncf %218 : vector<8x8xf32> to vector<8x8xbf16>
    %220 = vector.extract_strided_slice %214 {offsets = [0, 64], sizes = [8, 8], strides = [1, 1]} : vector<8x96xf32> to vector<8x8xf32>
    %221 = arith.truncf %220 : vector<8x8xf32> to vector<8x8xbf16>
    "tpu.trace_start"() <{level = 10 : i32, message = "qd,kd->qk"}> : () -> ()
    %cst_87 = arith.constant dense<0.000000e+00> : vector<8x8xf32>
    %222 = tpu.matmul %217, %219, %cst_87 {dimension_numbers = #tpu.dot_dimension_numbers<[1], [1], [0], [0], [0, 0, 1, 0], [], []>} : vector<8x8xbf16>, vector<8x8xbf16>, vector<8x8xf32> -> vector<8x8xf32>
    "tpu.trace_stop"() : () -> ()
    %cst_88 = arith.constant 0.353553385 : f32
    %223 = vector.broadcast %cst_88 : f32 to vector<8x8xf32>
    %224 = arith.mulf %222, %223 : vector<8x8xf32>
    %225 = arith.addf %224, %180 : vector<8x8xf32>
    %cst_89 = arith.constant dense<0xFF800000> : vector<8xf32>
    %226 = vector.multi_reduction <maximumf>, %225, %cst_89 [1] : vector<8x8xf32> to vector<8xf32>
    %227 = vector.shape_cast %226 : vector<8xf32> to vector<8x1xf32>
    %228 = vector.broadcast %227 : vector<8x1xf32> to vector<8x8xf32>
    %229 = arith.subf %225, %228 : vector<8x8xf32>
    %230 = math.exp %229 : vector<8x8xf32>
    %cst_90 = arith.constant dense<0.000000e+00> : vector<8xf32>
    %231 = vector.multi_reduction <add>, %230, %cst_90 [1] : vector<8x8xf32> to vector<8xf32>
    %232 = vector.shape_cast %231 : vector<8xf32> to vector<8x1xf32>
    %233 = tpu.reciprocal %232 {approx = true} : vector<8x1xf32> -> vector<8x1xf32>
    %234 = vector.broadcast %233 : vector<8x1xf32> to vector<8x8xf32>
    %235 = arith.mulf %230, %234 : vector<8x8xf32>
    %236 = arith.mulf %235, %176 : vector<8x8xf32>
    %237 = arith.truncf %236 : vector<8x8xf32> to vector<8x8xbf16>
    %cst_91 = arith.constant dense<0.000000e+00> : vector<8x8xf32>
    %238 = tpu.matmul %237, %221, %cst_91 {dimension_numbers = #tpu.dot_dimension_numbers<[1], [0], [0], [1], [0, 0, 1, 1], [], []>} : vector<8x8xbf16>, vector<8x8xbf16>, vector<8x8xf32> -> vector<8x8xf32>
    %239 = arith.truncf %238 : vector<8x8xf32> to vector<8x8xbf16>
    %c0_92 = arith.constant 0 : index
    %c0_93 = arith.constant 0 : index
    %c0_94 = arith.constant 0 : index
    %240 = vector.load %arg9[%c0_92, %c0_93, %c0_94] : memref<1x32x32xbf16, #tpu.memory_space<vmem>>, vector<1x8x32xbf16>
    %241 = vector.shape_cast %240 : vector<1x8x32xbf16> to vector<8x32xbf16>
    %cst_95 = arith.constant dense<0.000000e+00> : vector<8x32xf32>
    %242 = tpu.matmul %239, %241, %cst_95 {dimension_numbers = #tpu.dot_dimension_numbers<[1], [0], [0], [1], [0, 0, 1, 1], [], []>} : vector<8x8xbf16>, vector<8x32xbf16>, vector<8x32xf32> -> vector<8x32xf32>
    %243 = arith.addf %215, %242 : vector<8x32xf32>
    %244 = vector.extract_strided_slice %214 {offsets = [0, 8], sizes = [8, 8], strides = [1, 1]} : vector<8x96xf32> to vector<8x8xf32>
    %245 = arith.truncf %244 : vector<8x8xf32> to vector<8x8xbf16>
    %246 = vector.extract_strided_slice %214 {offsets = [0, 40], sizes = [8, 8], strides = [1, 1]} : vector<8x96xf32> to vector<8x8xf32>
    %247 = arith.truncf %246 : vector<8x8xf32> to vector<8x8xbf16>
    %248 = vector.extract_strided_slice %214 {offsets = [0, 72], sizes = [8, 8], strides = [1, 1]} : vector<8x96xf32> to vector<8x8xf32>
    %249 = arith.truncf %248 : vector<8x8xf32> to vector<8x8xbf16>
    "tpu.trace_start"() <{level = 10 : i32, message = "qd,kd->qk"}> : () -> ()
    %cst_96 = arith.constant dense<0.000000e+00> : vector<8x8xf32>
    %250 = tpu.matmul %245, %247, %cst_96 {dimension_numbers = #tpu.dot_dimension_numbers<[1], [1], [0], [0], [0, 0, 1, 0], [], []>} : vector<8x8xbf16>, vector<8x8xbf16>, vector<8x8xf32> -> vector<8x8xf32>
    "tpu.trace_stop"() : () -> ()
    %cst_97 = arith.constant 0.353553385 : f32
    %251 = vector.broadcast %cst_97 : f32 to vector<8x8xf32>
    %252 = arith.mulf %250, %251 : vector<8x8xf32>
    %253 = arith.addf %252, %180 : vector<8x8xf32>
    %cst_98 = arith.constant dense<0xFF800000> : vector<8xf32>
    %254 = vector.multi_reduction <maximumf>, %253, %cst_98 [1] : vector<8x8xf32> to vector<8xf32>
    %255 = vector.shape_cast %254 : vector<8xf32> to vector<8x1xf32>
    %256 = vector.broadcast %255 : vector<8x1xf32> to vector<8x8xf32>
    %257 = arith.subf %253, %256 : vector<8x8xf32>
    %258 = math.exp %257 : vector<8x8xf32>
    %cst_99 = arith.constant dense<0.000000e+00> : vector<8xf32>
    %259 = vector.multi_reduction <add>, %258, %cst_99 [1] : vector<8x8xf32> to vector<8xf32>
    %260 = vector.shape_cast %259 : vector<8xf32> to vector<8x1xf32>
    %261 = tpu.reciprocal %260 {approx = true} : vector<8x1xf32> -> vector<8x1xf32>
    %262 = vector.broadcast %261 : vector<8x1xf32> to vector<8x8xf32>
    %263 = arith.mulf %258, %262 : vector<8x8xf32>
    %264 = arith.mulf %263, %176 : vector<8x8xf32>
    %265 = arith.truncf %264 : vector<8x8xf32> to vector<8x8xbf16>
    %cst_100 = arith.constant dense<0.000000e+00> : vector<8x8xf32>
    %266 = tpu.matmul %265, %249, %cst_100 {dimension_numbers = #tpu.dot_dimension_numbers<[1], [0], [0], [1], [0, 0, 1, 1], [], []>} : vector<8x8xbf16>, vector<8x8xbf16>, vector<8x8xf32> -> vector<8x8xf32>
    %267 = arith.truncf %266 : vector<8x8xf32> to vector<8x8xbf16>
    %c0_101 = arith.constant 0 : index
    %c8_102 = arith.constant 8 : index
    %c0_103 = arith.constant 0 : index
    %268 = vector.load %arg9[%c0_101, %c8_102, %c0_103] : memref<1x32x32xbf16, #tpu.memory_space<vmem>>, vector<1x8x32xbf16>
    %269 = vector.shape_cast %268 : vector<1x8x32xbf16> to vector<8x32xbf16>
    %cst_104 = arith.constant dense<0.000000e+00> : vector<8x32xf32>
    %270 = tpu.matmul %267, %269, %cst_104 {dimension_numbers = #tpu.dot_dimension_numbers<[1], [0], [0], [1], [0, 0, 1, 1], [], []>} : vector<8x8xbf16>, vector<8x32xbf16>, vector<8x32xf32> -> vector<8x32xf32>
    %271 = arith.addf %243, %270 : vector<8x32xf32>
    %272 = vector.extract_strided_slice %214 {offsets = [0, 16], sizes = [8, 8], strides = [1, 1]} : vector<8x96xf32> to vector<8x8xf32>
    %273 = arith.truncf %272 : vector<8x8xf32> to vector<8x8xbf16>
    %274 = vector.extract_strided_slice %214 {offsets = [0, 48], sizes = [8, 8], strides = [1, 1]} : vector<8x96xf32> to vector<8x8xf32>
    %275 = arith.truncf %274 : vector<8x8xf32> to vector<8x8xbf16>
    %276 = vector.extract_strided_slice %214 {offsets = [0, 80], sizes = [8, 8], strides = [1, 1]} : vector<8x96xf32> to vector<8x8xf32>
    %277 = arith.truncf %276 : vector<8x8xf32> to vector<8x8xbf16>
    "tpu.trace_start"() <{level = 10 : i32, message = "qd,kd->qk"}> : () -> ()
    %cst_105 = arith.constant dense<0.000000e+00> : vector<8x8xf32>
    %278 = tpu.matmul %273, %275, %cst_105 {dimension_numbers = #tpu.dot_dimension_numbers<[1], [1], [0], [0], [0, 0, 1, 0], [], []>} : vector<8x8xbf16>, vector<8x8xbf16>, vector<8x8xf32> -> vector<8x8xf32>
    "tpu.trace_stop"() : () -> ()
    %cst_106 = arith.constant 0.353553385 : f32
    %279 = vector.broadcast %cst_106 : f32 to vector<8x8xf32>
    %280 = arith.mulf %278, %279 : vector<8x8xf32>
    %281 = arith.addf %280, %180 : vector<8x8xf32>
    %cst_107 = arith.constant dense<0xFF800000> : vector<8xf32>
    %282 = vector.multi_reduction <maximumf>, %281, %cst_107 [1] : vector<8x8xf32> to vector<8xf32>
    %283 = vector.shape_cast %282 : vector<8xf32> to vector<8x1xf32>
    %284 = vector.broadcast %283 : vector<8x1xf32> to vector<8x8xf32>
    %285 = arith.subf %281, %284 : vector<8x8xf32>
    %286 = math.exp %285 : vector<8x8xf32>
    %cst_108 = arith.constant dense<0.000000e+00> : vector<8xf32>
    %287 = vector.multi_reduction <add>, %286, %cst_108 [1] : vector<8x8xf32> to vector<8xf32>
    %288 = vector.shape_cast %287 : vector<8xf32> to vector<8x1xf32>
    %289 = tpu.reciprocal %288 {approx = true} : vector<8x1xf32> -> vector<8x1xf32>
    %290 = vector.broadcast %289 : vector<8x1xf32> to vector<8x8xf32>
    %291 = arith.mulf %286, %290 : vector<8x8xf32>
    %292 = arith.mulf %291, %176 : vector<8x8xf32>
    %293 = arith.truncf %292 : vector<8x8xf32> to vector<8x8xbf16>
    %cst_109 = arith.constant dense<0.000000e+00> : vector<8x8xf32>
    %294 = tpu.matmul %293, %277, %cst_109 {dimension_numbers = #tpu.dot_dimension_numbers<[1], [0], [0], [1], [0, 0, 1, 1], [], []>} : vector<8x8xbf16>, vector<8x8xbf16>, vector<8x8xf32> -> vector<8x8xf32>
    %295 = arith.truncf %294 : vector<8x8xf32> to vector<8x8xbf16>
    %c0_110 = arith.constant 0 : index
    %c16_111 = arith.constant 16 : index
    %c0_112 = arith.constant 0 : index
    %296 = vector.load %arg9[%c0_110, %c16_111, %c0_112] : memref<1x32x32xbf16, #tpu.memory_space<vmem>>, vector<1x8x32xbf16>
    %297 = vector.shape_cast %296 : vector<1x8x32xbf16> to vector<8x32xbf16>
    %cst_113 = arith.constant dense<0.000000e+00> : vector<8x32xf32>
    %298 = tpu.matmul %295, %297, %cst_113 {dimension_numbers = #tpu.dot_dimension_numbers<[1], [0], [0], [1], [0, 0, 1, 1], [], []>} : vector<8x8xbf16>, vector<8x32xbf16>, vector<8x32xf32> -> vector<8x32xf32>
    %299 = arith.addf %271, %298 : vector<8x32xf32>
    %300 = vector.extract_strided_slice %214 {offsets = [0, 24], sizes = [8, 8], strides = [1, 1]} : vector<8x96xf32> to vector<8x8xf32>
    %301 = arith.truncf %300 : vector<8x8xf32> to vector<8x8xbf16>
    %302 = vector.extract_strided_slice %214 {offsets = [0, 56], sizes = [8, 8], strides = [1, 1]} : vector<8x96xf32> to vector<8x8xf32>
    %303 = arith.truncf %302 : vector<8x8xf32> to vector<8x8xbf16>
    %304 = vector.extract_strided_slice %214 {offsets = [0, 88], sizes = [8, 8], strides = [1, 1]} : vector<8x96xf32> to vector<8x8xf32>
    %305 = arith.truncf %304 : vector<8x8xf32> to vector<8x8xbf16>
    "tpu.trace_start"() <{level = 10 : i32, message = "qd,kd->qk"}> : () -> ()
    %cst_114 = arith.constant dense<0.000000e+00> : vector<8x8xf32>
    %306 = tpu.matmul %301, %303, %cst_114 {dimension_numbers = #tpu.dot_dimension_numbers<[1], [1], [0], [0], [0, 0, 1, 0], [], []>} : vector<8x8xbf16>, vector<8x8xbf16>, vector<8x8xf32> -> vector<8x8xf32>
    "tpu.trace_stop"() : () -> ()
    %cst_115 = arith.constant 0.353553385 : f32
    %307 = vector.broadcast %cst_115 : f32 to vector<8x8xf32>
    %308 = arith.mulf %306, %307 : vector<8x8xf32>
    %309 = arith.addf %308, %180 : vector<8x8xf32>
    %cst_116 = arith.constant dense<0xFF800000> : vector<8xf32>
    %310 = vector.multi_reduction <maximumf>, %309, %cst_116 [1] : vector<8x8xf32> to vector<8xf32>
    %311 = vector.shape_cast %310 : vector<8xf32> to vector<8x1xf32>
    %312 = vector.broadcast %311 : vector<8x1xf32> to vector<8x8xf32>
    %313 = arith.subf %309, %312 : vector<8x8xf32>
    %314 = math.exp %313 : vector<8x8xf32>
    %cst_117 = arith.constant dense<0.000000e+00> : vector<8xf32>
    %315 = vector.multi_reduction <add>, %314, %cst_117 [1] : vector<8x8xf32> to vector<8xf32>
    %316 = vector.shape_cast %315 : vector<8xf32> to vector<8x1xf32>
    %317 = tpu.reciprocal %316 {approx = true} : vector<8x1xf32> -> vector<8x1xf32>
    %318 = vector.broadcast %317 : vector<8x1xf32> to vector<8x8xf32>
    %319 = arith.mulf %314, %318 : vector<8x8xf32>
    %320 = arith.mulf %319, %176 : vector<8x8xf32>
    %321 = arith.truncf %320 : vector<8x8xf32> to vector<8x8xbf16>
    %cst_118 = arith.constant dense<0.000000e+00> : vector<8x8xf32>
    %322 = tpu.matmul %321, %305, %cst_118 {dimension_numbers = #tpu.dot_dimension_numbers<[1], [0], [0], [1], [0, 0, 1, 1], [], []>} : vector<8x8xbf16>, vector<8x8xbf16>, vector<8x8xf32> -> vector<8x8xf32>
    %323 = arith.truncf %322 : vector<8x8xf32> to vector<8x8xbf16>
    %c0_119 = arith.constant 0 : index
    %c24_120 = arith.constant 24 : index
    %c0_121 = arith.constant 0 : index
    %324 = vector.load %arg9[%c0_119, %c24_120, %c0_121] : memref<1x32x32xbf16, #tpu.memory_space<vmem>>, vector<1x8x32xbf16>
    %325 = vector.shape_cast %324 : vector<1x8x32xbf16> to vector<8x32xbf16>
    %cst_122 = arith.constant dense<0.000000e+00> : vector<8x32xf32>
    %326 = tpu.matmul %323, %325, %cst_122 {dimension_numbers = #tpu.dot_dimension_numbers<[1], [0], [0], [1], [0, 0, 1, 1], [], []>} : vector<8x8xbf16>, vector<8x32xbf16>, vector<8x32xf32> -> vector<8x32xf32>
    %327 = arith.addf %299, %326 : vector<8x32xf32>
    %328 = arith.addf %174, %327 : vector<8x32xf32>
    %c0_123 = arith.constant 0 : index
    %c0_124 = arith.constant 0 : index
    %c0_125 = arith.constant 0 : index
    %329 = vector.load %arg10[%c0_123, %c0_124, %c0_125] : memref<1x1x32xf32, #tpu.memory_space<vmem>>, vector<1x1x32xf32>
    %330 = vector.shape_cast %329 : vector<1x1x32xf32> to vector<1x32xf32>
    %331 = vector.broadcast %330 : vector<1x32xf32> to vector<8x32xf32>
    %332 = arith.addf %328, %331 : vector<8x32xf32>
    %c0_126 = arith.constant 0 : index
    %333 = arith.index_cast %171 : i32 to index
    %c0_127 = arith.constant 0 : index
    %334 = vector.load %arg19[%c0_126, %333, %c0_127] : memref<1x16x32xf32, #tpu.memory_space<vmem>>, vector<1x8x32xf32>
    %335 = vector.shape_cast %334 : vector<1x8x32xf32> to vector<8x32xf32>
    %336 = vector.shape_cast %332 : vector<8x32xf32> to vector<1x8x32xf32>
    tpu.vector_store %arg19[%c0_126, %333, %c0_127], %336 {strides = array<i32>} : memref<1x16x32xf32, #tpu.memory_space<vmem>>, vector<1x8x32xf32>,
    %c2_i32 = arith.constant 2 : i32
    %c0_128 = arith.constant 0 : index
    %c0_129 = arith.constant 0 : index
    %c0_130 = arith.constant 0 : index
    %337 = vector.load %arg19[%c0_128, %c0_129, %c0_130] : memref<1x16x32xf32, #tpu.memory_space<vmem>>, vector<1x16x32xf32>
    %338 = vector.shape_cast %337 : vector<1x16x32xf32> to vector<16x32xf32>
    %c0_131 = arith.constant 0 : index
    %c0_132 = arith.constant 0 : index
    %c0_133 = arith.constant 0 : index
    %339 = vector.load %arg11[%c0_131, %c0_132, %c0_133] : memref<1x1x32xf32, #tpu.memory_space<vmem>>, vector<1x1x32xf32>
    %340 = vector.shape_cast %339 : vector<1x1x32xf32> to vector<1x32xf32>
    %c0_134 = arith.constant 0 : index
    %c0_135 = arith.constant 0 : index
    %c0_136 = arith.constant 0 : index
    %341 = vector.load %arg12[%c0_134, %c0_135, %c0_136] : memref<1x1x32xf32, #tpu.memory_space<vmem>>, vector<1x1x32xf32>
    %342 = vector.shape_cast %341 : vector<1x1x32xf32> to vector<1x32xf32>
    %cst_137 = arith.constant dense<0.000000e+00> : vector<16xf32>
    %343 = vector.multi_reduction <add>, %338, %cst_137 [1] : vector<16x32xf32> to vector<16xf32>
    %344 = vector.shape_cast %343 : vector<16xf32> to vector<16x1xf32>
    %cst_138 = arith.constant 3.200000e+01 : f32
    %345 = vector.broadcast %cst_138 : f32 to vector<16x1xf32>
    %346 = arith.divf %344, %345 : vector<16x1xf32>
    %347 = vector.broadcast %346 : vector<16x1xf32> to vector<16x32xf32>
    %348 = arith.subf %338, %347 : vector<16x32xf32>
    %349 = arith.mulf %348, %348 : vector<16x32xf32>
    %cst_139 = arith.constant dense<0.000000e+00> : vector<16xf32>
    %350 = vector.multi_reduction <add>, %349, %cst_139 [1] : vector<16x32xf32> to vector<16xf32>
    %351 = vector.shape_cast %350 : vector<16xf32> to vector<16x1xf32>
    %cst_140 = arith.constant 3.200000e+01 : f32
    %352 = vector.broadcast %cst_140 : f32 to vector<16x1xf32>
    %353 = arith.divf %351, %352 : vector<16x1xf32>
    %354 = vector.broadcast %346 : vector<16x1xf32> to vector<16x32xf32>
    %355 = arith.subf %338, %354 : vector<16x32xf32>
    %cst_141 = arith.constant 9.99999996E-13 : f32
    %356 = vector.broadcast %cst_141 : f32 to vector<16x1xf32>
    %357 = arith.addf %353, %356 : vector<16x1xf32>
    %358 = math.rsqrt %357 : vector<16x1xf32>
    %359 = vector.broadcast %358 : vector<16x1xf32> to vector<16x32xf32>
    %360 = arith.mulf %355, %359 : vector<16x32xf32>
    %361 = vector.broadcast %340 : vector<1x32xf32> to vector<16x32xf32>
    %362 = arith.mulf %360, %361 : vector<16x32xf32>
    %363 = vector.broadcast %342 : vector<1x32xf32> to vector<16x32xf32>
    %364 = arith.addf %362, %363 : vector<16x32xf32>
    %365 = arith.truncf %364 : vector<16x32xf32> to vector<16x32xbf16>
    %c0_142 = arith.constant 0 : index
    %c0_143 = arith.constant 0 : index
    %c0_144 = arith.constant 0 : index
    %366 = vector.load %arg13[%c0_142, %c0_143, %c0_144] : memref<1x32x64xbf16, #tpu.memory_space<vmem>>, vector<1x32x64xbf16>
    %367 = vector.shape_cast %366 : vector<1x32x64xbf16> to vector<32x64xbf16>
    %cst_145 = arith.constant dense<0.000000e+00> : vector<16x64xf32>
    %368 = tpu.matmul %365, %367, %cst_145 {dimension_numbers = #tpu.dot_dimension_numbers<[1], [0], [0], [1], [0, 0, 1, 1], [], []>} : vector<16x32xbf16>, vector<32x64xbf16>, vector<16x64xf32> -> vector<16x64xf32>
    %c0_146 = arith.constant 0 : index
    %c0_147 = arith.constant 0 : index
    %c0_148 = arith.constant 0 : index
    %369 = vector.load %arg14[%c0_146, %c0_147, %c0_148] : memref<1x1x64xf32, #tpu.memory_space<vmem>>, vector<1x1x64xf32>
    %370 = vector.shape_cast %369 : vector<1x1x64xf32> to vector<1x64xf32>
    %371 = vector.broadcast %370 : vector<1x64xf32> to vector<16x64xf32>
    %372 = arith.addf %368, %371 : vector<16x64xf32>
    %cst_149 = arith.constant 0.000000e+00 : f32
    %373 = vector.broadcast %cst_149 : f32 to vector<16x64xf32>
    %374 = arith.maximumf %372, %373 : vector<16x64xf32>
    %375 = arith.truncf %374 : vector<16x64xf32> to vector<16x64xbf16>
    %c0_150 = arith.constant 0 : index
    %c0_151 = arith.constant 0 : index
    %c0_152 = arith.constant 0 : index
    %376 = vector.load %arg15[%c0_150, %c0_151, %c0_152] : memref<1x64x32xbf16, #tpu.memory_space<vmem>>, vector<1x64x32xbf16>
    %377 = vector.shape_cast %376 : vector<1x64x32xbf16> to vector<64x32xbf16>
    %cst_153 = arith.constant dense<0.000000e+00> : vector<16x32xf32>
    %378 = tpu.matmul %375, %377, %cst_153 {dimension_numbers = #tpu.dot_dimension_numbers<[1], [0], [0], [1], [0, 0, 1, 1], [], []>} : vector<16x64xbf16>, vector<64x32xbf16>, vector<16x32xf32> -> vector<16x32xf32>
    %c0_154 = arith.constant 0 : index
    %c0_155 = arith.constant 0 : index
    %c0_156 = arith.constant 0 : index
    %379 = vector.load %arg16[%c0_154, %c0_155, %c0_156] : memref<1x1x32xf32, #tpu.memory_space<vmem>>, vector<1x1x32xf32>
    %380 = vector.shape_cast %379 : vector<1x1x32xf32> to vector<1x32xf32>
    %381 = vector.broadcast %380 : vector<1x32xf32> to vector<16x32xf32>
    %382 = arith.addf %378, %381 : vector<16x32xf32>
    %383 = arith.addf %338, %382 : vector<16x32xf32>
    %c0_157 = arith.constant 0 : index
    %c0_158 = arith.constant 0 : index
    %c0_159 = arith.constant 0 : index
    %384 = vector.load %arg19[%c0_157, %c0_158, %c0_159] : memref<1x16x32xf32, #tpu.memory_space<vmem>>, vector<1x16x32xf32>
    %385 = vector.shape_cast %384 : vector<1x16x32xf32> to vector<16x32xf32>
    %386 = vector.shape_cast %383 : vector<16x32xf32> to vector<1x16x32xf32>
    tpu.vector_store %arg19[%c0_157, %c0_158, %c0_159], %386 {strides = array<i32>} : memref<1x16x32xf32, #tpu.memory_space<vmem>>, vector<1x16x32xf32>,
    %c3_i32 = arith.constant 3 : i32
    %387 = arith.cmpi eq, %arg1, %c3_i32 : i32
    %388 = arith.extui %387 : i1 to i32
    %c0_i32_160 = arith.constant 0 : i32
    %389 = arith.cmpi ne, %388, %c0_i32_160 : i32
    scf.if %389 {
      %c0_161 = arith.constant 0 : index
      %c0_162 = arith.constant 0 : index
      %c0_163 = arith.constant 0 : index
      %390 = vector.load %arg19[%c0_161, %c0_162, %c0_163] : memref<1x16x32xf32, #tpu.memory_space<vmem>>, vector<1x16x32xf32>
      %391 = vector.shape_cast %390 : vector<1x16x32xf32> to vector<16x32xf32>
      %c0_164 = arith.constant 0 : index
      %c0_165 = arith.constant 0 : index
      %392 = vector.load %arg17[%c0_164, %c0_165] : memref<1x32xf32, #tpu.memory_space<vmem>>, vector<1x32xf32>
      %c0_166 = arith.constant 0 : index
      %c0_167 = arith.constant 0 : index
      %393 = vector.load %arg18[%c0_166, %c0_167] : memref<1x32xf32, #tpu.memory_space<vmem>>, vector<1x32xf32>
      %cst_168 = arith.constant dense<0.000000e+00> : vector<16xf32>
      %394 = vector.multi_reduction <add>, %391, %cst_168 [1] : vector<16x32xf32> to vector<16xf32>
      %395 = vector.shape_cast %394 : vector<16xf32> to vector<16x1xf32>
      %cst_169 = arith.constant 3.200000e+01 : f32
      %396 = vector.broadcast %cst_169 : f32 to vector<16x1xf32>
      %397 = arith.divf %395, %396 : vector<16x1xf32>
      %398 = vector.broadcast %397 : vector<16x1xf32> to vector<16x32xf32>
      %399 = arith.subf %391, %398 : vector<16x32xf32>
      %400 = arith.mulf %399, %399 : vector<16x32xf32>
      %cst_170 = arith.constant dense<0.000000e+00> : vector<16xf32>
      %401 = vector.multi_reduction <add>, %400, %cst_170 [1] : vector<16x32xf32> to vector<16xf32>
      %402 = vector.shape_cast %401 : vector<16xf32> to vector<16x1xf32>
      %cst_171 = arith.constant 3.200000e+01 : f32
      %403 = vector.broadcast %cst_171 : f32 to vector<16x1xf32>
      %404 = arith.divf %402, %403 : vector<16x1xf32>
      %405 = vector.broadcast %397 : vector<16x1xf32> to vector<16x32xf32>
      %406 = arith.subf %391, %405 : vector<16x32xf32>
      %cst_172 = arith.constant 9.99999996E-13 : f32
      %407 = vector.broadcast %cst_172 : f32 to vector<16x1xf32>
      %408 = arith.addf %404, %407 : vector<16x1xf32>
      %409 = math.rsqrt %408 : vector<16x1xf32>
      %410 = vector.broadcast %409 : vector<16x1xf32> to vector<16x32xf32>
      %411 = arith.mulf %406, %410 : vector<16x32xf32>
      %412 = vector.broadcast %392 : vector<1x32xf32> to vector<16x32xf32>
      %413 = arith.mulf %411, %412 : vector<16x32xf32>
      %414 = vector.broadcast %393 : vector<1x32xf32> to vector<16x32xf32>
      %415 = arith.addf %413, %414 : vector<16x32xf32>
      %c0_173 = arith.constant 0 : index
      %c0_174 = arith.constant 0 : index
      %c0_175 = arith.constant 0 : index
      %416 = vector.load %arg19[%c0_173, %c0_174, %c0_175] : memref<1x16x32xf32, #tpu.memory_space<vmem>>, vector<1x16x32xf32>
      %417 = vector.shape_cast %416 : vector<1x16x32xf32> to vector<16x32xf32>
      %418 = vector.shape_cast %415 : vector<16x32xf32> to vector<1x16x32xf32>
      tpu.vector_store %arg19[%c0_173, %c0_174, %c0_175], %418 {strides = array<i32>} : memref<1x16x32xf32, #tpu.memory_space<vmem>>, vector<1x16x32xf32>,
    } else {
    }
    return
  }
  func.func @transform_0(%arg0: i32, %arg1: i32, %arg2: memref<2x4xi32, #tpu.memory_space<smem>>) -> (i32, i32) {
    %c0_i32 = arith.constant 0 : i32
    %c0_i32_0 = arith.constant 0 : i32
    %c0_i32_1 = arith.constant 0 : i32
    return %c0_i32, %c0_i32_0 : i32, i32
  }
  func.func @transform_1(%arg0: i32, %arg1: i32, %arg2: memref<2x4xi32, #tpu.memory_space<smem>>) -> (i32, i32) {
    %c0_i32 = arith.constant 0 : i32
    %c0_i32_0 = arith.constant 0 : i32
    %c0_i32_1 = arith.constant 0 : i32
    return %c0_i32, %c0_i32_0 : i32, i32
  }
  func.func @transform_2(%arg0: i32, %arg1: i32, %arg2: memref<2x4xi32, #tpu.memory_space<smem>>) -> (i32, i32, i32) {
    %0 = arith.index_cast %arg0 : i32 to index
    %1 = arith.index_cast %arg1 : i32 to index
    %2 = memref.load %arg2[%0, %1] : memref<2x4xi32, #tpu.memory_space<smem>>
    %c0_i32 = arith.constant 0 : i32
    %c0_i32_0 = arith.constant 0 : i32
    %c0_i32_1 = arith.constant 0 : i32
    return %2, %c0_i32, %c0_i32_0 : i32, i32, i32
  }
  func.func @transform_3(%arg0: i32, %arg1: i32, %arg2: memref<2x4xi32, #tpu.memory_space<smem>>) -> (i32, i32, i32) {
    %0 = arith.index_cast %arg0 : i32 to index
    %1 = arith.index_cast %arg1 : i32 to index
    %2 = memref.load %arg2[%0, %1] : memref<2x4xi32, #tpu.memory_space<smem>>
    %c0_i32 = arith.constant 0 : i32
    %c0_i32_0 = arith.constant 0 : i32
    %c0_i32_1 = arith.constant 0 : i32
    return %2, %c0_i32, %c0_i32_0 : i32, i32, i32
  }
  func.func @transform_4(%arg0: i32, %arg1: i32, %arg2: memref<2x4xi32, #tpu.memory_space<smem>>) -> (i32, i32, i32) {
    %0 = arith.index_cast %arg0 : i32 to index
    %1 = arith.index_cast %arg1 : i32 to index
    %2 = memref.load %arg2[%0, %1] : memref<2x4xi32, #tpu.memory_space<smem>>
    %c0_i32 = arith.constant 0 : i32
    %c0_i32_0 = arith.constant 0 : i32
    %c0_i32_1 = arith.constant 0 : i32
    return %2, %c0_i32, %c0_i32_0 : i32, i32, i32
  }
  func.func @transform_5(%arg0: i32, %arg1: i32, %arg2: memref<2x4xi32, #tpu.memory_space<smem>>) -> (i32, i32, i32) {
    %0 = arith.index_cast %arg0 : i32 to index
    %1 = arith.index_cast %arg1 : i32 to index
    %2 = memref.load %arg2[%0, %1] : memref<2x4xi32, #tpu.memory_space<smem>>
    %c0_i32 = arith.constant 0 : i32
    %c0_i32_0 = arith.constant 0 : i32
    %c0_i32_1 = arith.constant 0 : i32
    return %2, %c0_i32, %c0_i32_0 : i32, i32, i32
  }
  func.func @transform_6(%arg0: i32, %arg1: i32, %arg2: memref<2x4xi32, #tpu.memory_space<smem>>) -> (i32, i32, i32) {
    %0 = arith.index_cast %arg0 : i32 to index
    %1 = arith.index_cast %arg1 : i32 to index
    %2 = memref.load %arg2[%0, %1] : memref<2x4xi32, #tpu.memory_space<smem>>
    %c0_i32 = arith.constant 0 : i32
    %c0_i32_0 = arith.constant 0 : i32
    %c0_i32_1 = arith.constant 0 : i32
    return %2, %c0_i32, %c0_i32_0 : i32, i32, i32
  }
  func.func @transform_7(%arg0: i32, %arg1: i32, %arg2: memref<2x4xi32, #tpu.memory_space<smem>>) -> (i32, i32, i32) {
    %0 = arith.index_cast %arg0 : i32 to index
    %1 = arith.index_cast %arg1 : i32 to index
    %2 = memref.load %arg2[%0, %1] : memref<2x4xi32, #tpu.memory_space<smem>>
    %c0_i32 = arith.constant 0 : i32
    %c0_i32_0 = arith.constant 0 : i32
    %c0_i32_1 = arith.constant 0 : i32
    return %2, %c0_i32, %c0_i32_0 : i32, i32, i32
  }
  func.func @transform_8(%arg0: i32, %arg1: i32, %arg2: memref<2x4xi32, #tpu.memory_space<smem>>) -> (i32, i32, i32) {
    %0 = arith.index_cast %arg0 : i32 to index
    %1 = arith.index_cast %arg1 : i32 to index
    %2 = memref.load %arg2[%0, %1] : memref<2x4xi32, #tpu.memory_space<smem>>
    %c0_i32 = arith.constant 0 : i32
    %c0_i32_0 = arith.constant 0 : i32
    %c0_i32_1 = arith.constant 0 : i32
    return %2, %c0_i32, %c0_i32_0 : i32, i32, i32
  }
  func.func @transform_9(%arg0: i32, %arg1: i32, %arg2: memref<2x4xi32, #tpu.memory_space<smem>>) -> (i32, i32, i32) {
    %0 = arith.index_cast %arg0 : i32 to index
    %1 = arith.index_cast %arg1 : i32 to index
    %2 = memref.load %arg2[%0, %1] : memref<2x4xi32, #tpu.memory_space<smem>>
    %c0_i32 = arith.constant 0 : i32
    %c0_i32_0 = arith.constant 0 : i32
    %c0_i32_1 = arith.constant 0 : i32
    return %2, %c0_i32, %c0_i32_0 : i32, i32, i32
  }
  func.func @transform_10(%arg0: i32, %arg1: i32, %arg2: memref<2x4xi32, #tpu.memory_space<smem>>) -> (i32, i32, i32) {
    %0 = arith.index_cast %arg0 : i32 to index
    %1 = arith.index_cast %arg1 : i32 to index
    %2 = memref.load %arg2[%0, %1] : memref<2x4xi32, #tpu.memory_space<smem>>
    %c0_i32 = arith.constant 0 : i32
    %c0_i32_0 = arith.constant 0 : i32
    %c0_i32_1 = arith.constant 0 : i32
    return %2, %c0_i32, %c0_i32_0 : i32, i32, i32
  }
  func.func @transform_11(%arg0: i32, %arg1: i32, %arg2: memref<2x4xi32, #tpu.memory_space<smem>>) -> (i32, i32, i32) {
    %0 = arith.index_cast %arg0 : i32 to index
    %1 = arith.index_cast %arg1 : i32 to index
    %2 = memref.load %arg2[%0, %1] : memref<2x4xi32, #tpu.memory_space<smem>>
    %c0_i32 = arith.constant 0 : i32
    %c0_i32_0 = arith.constant 0 : i32
    %c0_i32_1 = arith.constant 0 : i32
    return %2, %c0_i32, %c0_i32_0 : i32, i32, i32
  }
  func.func @transform_12(%arg0: i32, %arg1: i32, %arg2: memref<2x4xi32, #tpu.memory_space<smem>>) -> (i32, i32, i32) {
    %0 = arith.index_cast %arg0 : i32 to index
    %1 = arith.index_cast %arg1 : i32 to index
    %2 = memref.load %arg2[%0, %1] : memref<2x4xi32, #tpu.memory_space<smem>>
    %c0_i32 = arith.constant 0 : i32
    %c0_i32_0 = arith.constant 0 : i32
    %c0_i32_1 = arith.constant 0 : i32
    return %2, %c0_i32, %c0_i32_0 : i32, i32, i32
  }
  func.func @transform_13(%arg0: i32, %arg1: i32, %arg2: memref<2x4xi32, #tpu.memory_space<smem>>) -> (i32, i32, i32) {
    %0 = arith.index_cast %arg0 : i32 to index
    %1 = arith.index_cast %arg1 : i32 to index
    %2 = memref.load %arg2[%0, %1] : memref<2x4xi32, #tpu.memory_space<smem>>
    %c0_i32 = arith.constant 0 : i32
    %c0_i32_0 = arith.constant 0 : i32
    %c0_i32_1 = arith.constant 0 : i32
    return %2, %c0_i32, %c0_i32_0 : i32, i32, i32
  }
  func.func @transform_14(%arg0: i32, %arg1: i32, %arg2: memref<2x4xi32, #tpu.memory_space<smem>>) -> (i32, i32) {
    %c0_i32 = arith.constant 0 : i32
    %c0_i32_0 = arith.constant 0 : i32
    %c0_i32_1 = arith.constant 0 : i32
    return %c0_i32, %c0_i32_0 : i32, i32
  }
  func.func @transform_15(%arg0: i32, %arg1: i32, %arg2: memref<2x4xi32, #tpu.memory_space<smem>>) -> (i32, i32) {
    %c0_i32 = arith.constant 0 : i32
    %c0_i32_0 = arith.constant 0 : i32
    %c0_i32_1 = arith.constant 0 : i32
    return %c0_i32, %c0_i32_0 : i32, i32
  }
  func.func @transform_16(%arg0: i32, %arg1: i32, %arg2: memref<2x4xi32, #tpu.memory_space<smem>>) -> (i32, i32, i32) {
    %c0_i32 = arith.constant 0 : i32
    %c0_i32_0 = arith.constant 0 : i32
    %c0_i32_1 = arith.constant 0 : i32
    return %arg0, %c0_i32, %c0_i32_0 : i32, i32, i32
  }
}

</mosaic_0001>

<llo_original>
// kernel: encoder_mix_forward.4
$region0: #{encoder_mix_forward.4}
  #allocation0 [shape = 'u32[]', space=smem, size = 0x4, offset = 0x4, fixed_abs, tag = 'smem constant byte address 0x4 - core index']
  #allocation1 [shape = 'u32[144,128]{1,0:T(1,128)}', space=vmem, size = 0x12000, scoped, tag = 'internal scratch']
  %s0 = inlined_call_operand.vmem [shape: f32[104,9], index: 0, kind: input, shape index: {}]
  %s1 = inlined_call_operand.vmem [shape: f32[9,32], index: 1, kind: input, shape index: {}]
  %s2 = inlined_call_operand.vmem [shape: f32[1,32], index: 2, kind: input, shape index: {}]
  %s3 = inlined_call_operand.vmem [shape: bf16[104,32], index: 3, kind: output, shape index: {}]
  %s4 = sld [smem:[#allocation0]]
  $region22: #{encoder_mix_forward.4} parent=0
    _
  %s6 = ssub.s32 1, %s4
  %s7 = scalar_select 0, %s6, %s4
  // Predicated region
  $region2: #{encoder_mix_forward.4} parent=0 // pred_check
    _
  $region3: #{encoder_mix_forward.4} parent=0 // pred_check_branch
    %9 = sbr.rel (0) target = $region5
  $region4: #{encoder_mix_forward.4} parent=0 // pred_region
    _
  $region5: #{encoder_mix_forward.4} parent=0 // pred_fallthru
    _
  // Predicated region
  $region6: #{encoder_mix_forward.4} parent=0 // pred_check
    _
  $region7: #{encoder_mix_forward.4} parent=0 // pred_check_branch
    %11 = sbr.rel (0) target = $region9
  $region8: #{encoder_mix_forward.4} parent=0 // pred_region
    _
  $region9: #{encoder_mix_forward.4} parent=0 // pred_fallthru
    _
  // Predicated region
  $region10: #{encoder_mix_forward.4} parent=0 // pred_check
    _
  $region11: #{encoder_mix_forward.4} parent=0 // pred_check_branch
    %13 = sbr.rel (0) target = $region13
  $region12: #{encoder_mix_forward.4} parent=0 // pred_region
    _
  $region13: #{encoder_mix_forward.4} parent=0 // pred_fallthru
    _
  %v15 = vld [vmem:[%s0] sm:$0xff]
  %v16 = vld [vmem:[%s0 + $0x8] sm:$0xff]
  %v17 = vld [vmem:[%s0 + $0x10] sm:$0xff]
  %v18 = vld [vmem:[%s0 + $0x18] sm:$0xff]
  %v19 = vld [vmem:[%s0 + $0x20] sm:$0xff]
  %v20 = vld [vmem:[%s0 + $0x28] sm:$0xff]
  %v21 = vld [vmem:[%s0 + $0x30] sm:$0xff]
  %v22 = vld [vmem:[%s0 + $0x38] sm:$0xff]
  %v23 = vld [vmem:[%s0 + $0x40] sm:$0xff]
  %v24 = vld [vmem:[%s0 + $0x48] sm:$0xff]
  %v25 = vld [vmem:[%s0 + $0x50] sm:$0xff]
  %v26 = vld [vmem:[%s0 + $0x58] sm:$0xff]
  %v27 = vld [vmem:[%s0 + $0x60] sm:$0xff]
  %v28 = vpack.c.bf16 %v16, %v15
  %v29 = vpack.c.bf16 %v18, %v17
  %v30 = vpack.c.bf16 %v20, %v19
  %v31 = vpack.c.bf16 %v22, %v21
  %v32 = vpack.c.bf16 %v24, %v23
  %v33 = vpack.c.bf16 %v26, %v25
  %v34 = vpack.c.bf16 %v27, %v27
  %v35 = vld [vmem:[%s1] sm:$0xff]
  %v36 = vld [vmem:[%s1 + $0x8] sm:$0x1]
  %v37 = vpack.c.bf16 %v36, %v35
  %v38 = vld [vmem:[%s2] sm:$0x1]
  %v40 = vlaneseq
  %v41 = vshrl.u32 %v40, 7
  %v42 = vsub.s32 0, %v41
  %v43 = vrot.slane %v38, %v42
  %vm45 = vcmask 72704
  %v47 = vsel %vm45, %v28, 0
  %v50 = vsel %vm45, %v29, 0
  %v53 = vsel %vm45, %v30, 0
  %v56 = vsel %vm45, %v31, 0
  %v59 = vsel %vm45, %v32, 0
  %v62 = vsel %vm45, %v33, 0
  %v65 = vsel %vm45, %v34, 0
  %vm67 = vcmask 1043456
  %vm68 = vcmask 1044480
  %v69 = vsel %vm67, 4294967295, 65535
  %v70 = vsel %vm68, %v69, 0
  %v72 = vand.u32 %v37, %v70
  %74 = vmatprep.subr.bf16.mxu0 0
  %75 = vmatpush1.bf16.msra.mxu0 %v72
  %76 = vmatprep.subr.bf16.mxu0 0
  %77 = vmatpush1.bf16.msra.mxu0 0
  %78 = vmatprep.subr.bf16.mxu0 0
  %79 = vmatpush1.bf16.msra.mxu0 0
  %80 = vmatprep.subr.bf16.mxu0 0
  %81 = vmatpush1.bf16.msra.mxu0 0
  %82 = vmatprep.subr.bf16.mxu0 0
  %83 = vmatpush1.bf16.msra.mxu0 0
  %84 = vmatprep.subr.bf16.mxu0 0
  %85 = vmatpush1.bf16.msra.mxu0 0
  %86 = vmatprep.subr.bf16.mxu0 0
  %87 = vmatpush1.bf16.msra.mxu0 0
  %88 = vmatprep.subr.bf16.mxu0 0
  %89 = vmatpush1.bf16.msra.mxu0 0
  %90 = vmatprep.subr.bf16.mxu0 0
  %91 = vmatpush1.bf16.msra.mxu0 0
  %92 = vmatprep.subr.bf16.mxu0 0
  %93 = vmatpush1.bf16.msra.mxu0 0
  %94 = vmatprep.subr.bf16.mxu0 0
  %95 = vmatpush1.bf16.msra.mxu0 0
  %96 = vmatprep.subr.bf16.mxu0 0
  %97 = vmatpush1.bf16.msra.mxu0 0
  %98 = vmatprep.subr.bf16.mxu0 0
  %99 = vmatpush1.bf16.msra.mxu0 0
  %100 = vmatprep.subr.bf16.mxu0 0
  %101 = vmatpush1.bf16.msra.mxu0 0
  %102 = vmatprep.subr.bf16.mxu0 0
  %103 = vmatpush1.bf16.msra.mxu0 0
  %104 = vmatprep.subr.bf16.mxu0 0
  %105 = vmatpush1.bf16.msra.mxu0 0
  %106 = vmatprep.mubr.bf16.mxu0 0
  %107 = vmatmul.mubr.bf16.gmra.mrb[0].mxu0 %v47
  %v108 = vpop.f32.mrb[0].mxu0
  %v109 = vadd.f32 %v43, %v108
  %v110 = vpop.f32.mrb[0].mxu0
  %v111 = vpop.f32.mrb[0].mxu0
  %v112 = vadd.f32 %v43, %v111
  %v113 = vpop.f32.mrb[0].mxu0
  %114 = vmatprep.mubr.bf16.mxu0 0
  %115 = vmatmul.mubr.bf16.gmra.mrb[0].mxu0 %v50
  %v116 = vpop.f32.mrb[0].mxu0
  %v117 = vadd.f32 %v43, %v116
  %v118 = vpop.f32.mrb[0].mxu0
  %v119 = vpop.f32.mrb[0].mxu0
  %v120 = vadd.f32 %v43, %v119
  %v121 = vpop.f32.mrb[0].mxu0
  %122 = vmatprep.mubr.bf16.mxu0 0
  %123 = vmatmul.mubr.bf16.gmra.mrb[0].mxu0 %v53
  %v124 = vpop.f32.mrb[0].mxu0
  %v125 = vadd.f32 %v43, %v124
  %v126 = vpop.f32.mrb[0].mxu0
  %v127 = vpop.f32.mrb[0].mxu0
  %v128 = vadd.f32 %v43, %v127
  %v129 = vpop.f32.mrb[0].mxu0
  %130 = vmatprep.mubr.bf16.mxu0 0
  %131 = vmatmul.mubr.bf16.gmra.mrb[0].mxu0 %v56
  %v132 = vpop.f32.mrb[0].mxu0
  %v133 = vadd.f32 %v43, %v132
  %v134 = vpop.f32.mrb[0].mxu0
  %v135 = vpop.f32.mrb[0].mxu0
  %v136 = vadd.f32 %v43, %v135
  %v137 = vpop.f32.mrb[0].mxu0
  %138 = vmatprep.mubr.bf16.mxu0 0
  %139 = vmatmul.mubr.bf16.gmra.mrb[0].mxu0 %v59
  %v140 = vpop.f32.mrb[0].mxu0
  %v141 = vadd.f32 %v43, %v140
  %v142 = vpop.f32.mrb[0].mxu0
  %v143 = vpop.f32.mrb[0].mxu0
  %v144 = vadd.f32 %v43, %v143
  %v145 = vpop.f32.mrb[0].mxu0
  %146 = vmatprep.mubr.bf16.mxu0 0
  %147 = vmatmul.mubr.bf16.gmra.mrb[0].mxu0 %v62
  %v148 = vpop.f32.mrb[0].mxu0
  %v149 = vadd.f32 %v43, %v148
  %v150 = vpop.f32.mrb[0].mxu0
  %v151 = vpop.f32.mrb[0].mxu0
  %v152 = vadd.f32 %v43, %v151
  %v153 = vpop.f32.mrb[0].mxu0
  %154 = vmatprep.mubr.bf16.mxu0 0
  %155 = vmatmul.mubr.bf16.gmra.mrb[0].mxu0 %v65
  %v156 = vpop.f32.mrb[0].mxu0
  %v157 = vadd.f32 %v43, %v156
  %v158 = vpop.f32.mrb[0].mxu0
  %v159 = vpop.f32.mrb[0].mxu0
  %v160 = vpop.f32.mrb[0].mxu0
  %161 = vdwg.mxu0
  %v162 = vmax.f32 %v109, 0.0
  %v163 = vmax.f32 %v112, 0.0
  %v164 = vmax.f32 %v117, 0.0
  %v165 = vmax.f32 %v120, 0.0
  %v166 = vmax.f32 %v125, 0.0
  %v167 = vmax.f32 %v128, 0.0
  %v168 = vmax.f32 %v133, 0.0
  %v169 = vmax.f32 %v136, 0.0
  %v170 = vmax.f32 %v141, 0.0
  %v171 = vmax.f32 %v144, 0.0
  %v172 = vmax.f32 %v149, 0.0
  %v173 = vmax.f32 %v152, 0.0
  %v174 = vmax.f32 %v157, 0.0
  %v175 = vpack.c.bf16 %v163, %v162
  %v176 = vpack.c.bf16 %v165, %v164
  %v177 = vpack.c.bf16 %v167, %v166
  %v178 = vpack.c.bf16 %v169, %v168
  %v179 = vpack.c.bf16 %v171, %v170
  %v180 = vpack.c.bf16 %v173, %v172
  %v181 = vpack.c.bf16 %v174, %v174
  %v189 = vunpack.c.l.b16 %v175
  %v190 = vunpack.c.h.b16 %v175
  %v191 = vunpack.c.l.b16 %v176
  %v192 = vunpack.c.h.b16 %v176
  %v193 = vunpack.c.l.b16 %v177
  %v194 = vunpack.c.h.b16 %v177
  %v195 = vunpack.c.l.b16 %v178
  %v196 = vunpack.c.h.b16 %v178
  %v197 = vunpack.c.l.b16 %v179
  %v198 = vunpack.c.h.b16 %v179
  %v199 = vunpack.c.l.b16 %v180
  %v200 = vunpack.c.h.b16 %v180
  %v201 = vunpack.c.l.b16 %v181
  %v202 = vpack.c.b16 %v189, %v189
  %v203 = vpack.c.b16 %v190, %v190
  %v204 = vpack.c.b16 %v191, %v191
  %v205 = vpack.c.b16 %v192, %v192
  %v206 = vpack.c.b16 %v193, %v193
  %v207 = vpack.c.b16 %v194, %v194
  %v208 = vpack.c.b16 %v195, %v195
  %v209 = vpack.c.b16 %v196, %v196
  %v210 = vpack.c.b16 %v197, %v197
  %v211 = vpack.c.b16 %v198, %v198
  %v212 = vpack.c.b16 %v199, %v199
  %v213 = vpack.c.b16 %v200, %v200
  %v214 = vpack.c.b16 %v201, %v201
  %vm228 = vcmask 257024
  %229 = vst.msk [vmem:[%s3] sm:$0xf] %vm228, %v202
  %230 = vst.msk [vmem:[%s3 + $0x4] sm:$0xf] %vm228, %v203
  %231 = vst.msk [vmem:[%s3 + $0x8] sm:$0xf] %vm228, %v204
  %232 = vst.msk [vmem:[%s3 + $0xc] sm:$0xf] %vm228, %v205
  %233 = vst.msk [vmem:[%s3 + $0x10] sm:$0xf] %vm228, %v206
  %234 = vst.msk [vmem:[%s3 + $0x14] sm:$0xf] %vm228, %v207
  %235 = vst.msk [vmem:[%s3 + $0x18] sm:$0xf] %vm228, %v208
  %236 = vst.msk [vmem:[%s3 + $0x1c] sm:$0xf] %vm228, %v209
  %237 = vst.msk [vmem:[%s3 + $0x20] sm:$0xf] %vm228, %v210
  %238 = vst.msk [vmem:[%s3 + $0x24] sm:$0xf] %vm228, %v211
  %239 = vst.msk [vmem:[%s3 + $0x28] sm:$0xf] %vm228, %v212
  %240 = vst.msk [vmem:[%s3 + $0x2c] sm:$0xf] %vm228, %v213
  %241 = vst.msk [vmem:[%s3 + $0x30] sm:$0xf] %vm228, %v214
  // Predicated region
  $region14: #{encoder_mix_forward.4} parent=0 // pred_check
    _
  $region15: #{encoder_mix_forward.4} parent=0 // pred_check_branch
    %243 = sbr.rel (0) target = $region17
  $region16: #{encoder_mix_forward.4} parent=0 // pred_region
    _
  $region17: #{encoder_mix_forward.4} parent=0 // pred_fallthru
    _
  // Predicated region
  $region18: #{encoder_mix_forward.4} parent=0 // pred_check
    _
  $region19: #{encoder_mix_forward.4} parent=0 // pred_check_branch
    %245 = sbr.rel (0) target = $region21
  $region20: #{encoder_mix_forward.4} parent=0 // pred_region
    _
  $region21: #{encoder_mix_forward.4} parent=0 // pred_fallthru
    _

// kernel: encoder_mix_forward.5
$region0: #{encoder_mix_forward.5}
  #allocation0 [shape = 'u32[]', space=smem, size = 0x4, offset = 0x4, fixed_abs, tag = 'smem constant byte address 0x4 - core index']
  #allocation1 [shape = 'u32[144,128]{1,0:T(1,128)}', space=vmem, size = 0x12000, scoped, tag = 'internal scratch']
  %s0 = inlined_call_operand.vmem [shape: bf16[24,288], index: 0, kind: input, shape index: {}]
  %s1 = inlined_call_operand.vmem [shape: f32[288,32], index: 1, kind: input, shape index: {}]
  %s2 = inlined_call_operand.vmem [shape: f32[1,32], index: 2, kind: input, shape index: {}]
  %s3 = inlined_call_operand.vmem [shape: bf16[24,32], index: 3, kind: output, shape index: {}]
  %s4 = sld [smem:[#allocation0]]
  $region22: #{encoder_mix_forward.5} parent=0
    _
  %s6 = ssub.s32 1, %s4
  %s7 = scalar_select 0, %s6, %s4
  // Predicated region
  $region2: #{encoder_mix_forward.5} parent=0 // pred_check
    _
  $region3: #{encoder_mix_forward.5} parent=0 // pred_check_branch
    %9 = sbr.rel (0) target = $region5
  $region4: #{encoder_mix_forward.5} parent=0 // pred_region
    _
  $region5: #{encoder_mix_forward.5} parent=0 // pred_fallthru
    _
  // Predicated region
  $region6: #{encoder_mix_forward.5} parent=0 // pred_check
    _
  $region7: #{encoder_mix_forward.5} parent=0 // pred_check_branch
    %11 = sbr.rel (0) target = $region9
  $region8: #{encoder_mix_forward.5} parent=0 // pred_region
    _
  $region9: #{encoder_mix_forward.5} parent=0 // pred_fallthru
    _
  // Predicated region
  $region10: #{encoder_mix_forward.5} parent=0 // pred_check
    _
  $region11: #{encoder_mix_forward.5} parent=0 // pred_check_branch
    %13 = sbr.rel (0) target = $region13
  $region12: #{encoder_mix_forward.5} parent=0 // pred_region
    _
  $region13: #{encoder_mix_forward.5} parent=0 // pred_fallthru
    _
  %v15 = vld [vmem:[%s0] sm:$0xff]
  %v16 = vld [vmem:[%s0 + $0x8] sm:$0xf]
  %v17 = vld [vmem:[%s0 + $0xc] sm:$0xff]
  %v18 = vld [vmem:[%s0 + $0x14] sm:$0xf]
  %v19 = vld [vmem:[%s0 + $0x18] sm:$0xff]
  %v20 = vld [vmem:[%s0 + $0x20] sm:$0xf]
  %v21 = vld [vmem:[%s1] sm:$0xff]
  %v22 = vld [vmem:[%s1 + $0x8] sm:$0xff]
  %v23 = vld [vmem:[%s1 + $0x10] sm:$0xff]
  %v24 = vld [vmem:[%s1 + $0x18] sm:$0xff]
  %v25 = vld [vmem:[%s1 + $0x20] sm:$0xff]
  %v26 = vld [vmem:[%s1 + $0x28] sm:$0xff]
  %v27 = vld [vmem:[%s1 + $0x30] sm:$0xff]
  %v28 = vld [vmem:[%s1 + $0x38] sm:$0xff]
  %v29 = vld [vmem:[%s1 + $0x40] sm:$0xff]
  %v30 = vld [vmem:[%s1 + $0x48] sm:$0xff]
  %v31 = vld [vmem:[%s1 + $0x50] sm:$0xff]
  %v32 = vld [vmem:[%s1 + $0x58] sm:$0xff]
  %v33 = vld [vmem:[%s1 + $0x60] sm:$0xff]
  %v34 = vld [vmem:[%s1 + $0x68] sm:$0xff]
  %v35 = vld [vmem:[%s1 + $0x70] sm:$0xff]
  %v36 = vld [vmem:[%s1 + $0x78] sm:$0xff]
  %v37 = vld [vmem:[%s1 + $0x80] sm:$0xff]
  %v38 = vld [vmem:[%s1 + $0x88] sm:$0xff]
  %v39 = vld [vmem:[%s1 + $0x90] sm:$0xff]
  %v40 = vld [vmem:[%s1 + $0x98] sm:$0xff]
  %v41 = vld [vmem:[%s1 + $0xa0] sm:$0xff]
  %v42 = vld [vmem:[%s1 + $0xa8] sm:$0xff]
  %v43 = vld [vmem:[%s1 + $0xb0] sm:$0xff]
  %v44 = vld [vmem:[%s1 + $0xb8] sm:$0xff]
  %v45 = vld [vmem:[%s1 + $0xc0] sm:$0xff]
  %v46 = vld [vmem:[%s1 + $0xc8] sm:$0xff]
  %v47 = vld [vmem:[%s1 + $0xd0] sm:$0xff]
  %v48 = vld [vmem:[%s1 + $0xd8] sm:$0xff]
  %v49 = vld [vmem:[%s1 + $0xe0] sm:$0xff]
  %v50 = vld [vmem:[%s1 + $0xe8] sm:$0xff]
  %v51 = vld [vmem:[%s1 + $0xf0] sm:$0xff]
  %v52 = vld [vmem:[%s1 + $0xf8] sm:$0xff]
  %v53 = vld [vmem:[%s1 + $0x100] sm:$0xff]
  %v54 = vld [vmem:[%s1 + $0x108] sm:$0xff]
  %v55 = vld [vmem:[%s1 + $0x110] sm:$0xff]
  %v56 = vld [vmem:[%s1 + $0x118] sm:$0xff]
  %v57 = vpack.c.bf16 %v22, %v21
  %v58 = vpack.c.bf16 %v24, %v23
  %v59 = vpack.c.bf16 %v26, %v25
  %v60 = vpack.c.bf16 %v28, %v27
  %v61 = vpack.c.bf16 %v30, %v29
  %v62 = vpack.c.bf16 %v32, %v31
  %v63 = vpack.c.bf16 %v34, %v33
  %v64 = vpack.c.bf16 %v36, %v35
  %v65 = vpack.c.bf16 %v38, %v37
  %v66 = vpack.c.bf16 %v40, %v39
  %v67 = vpack.c.bf16 %v42, %v41
  %v68 = vpack.c.bf16 %v44, %v43
  %v69 = vpack.c.bf16 %v46, %v45
  %v70 = vpack.c.bf16 %v48, %v47
  %v71 = vpack.c.bf16 %v50, %v49
  %v72 = vpack.c.bf16 %v52, %v51
  %v73 = vpack.c.bf16 %v54, %v53
  %v74 = vpack.c.bf16 %v56, %v55
  %v75 = vld [vmem:[%s2] sm:$0x1]
  %v77 = vlaneseq
  %v78 = vshrl.u32 %v77, 7
  %v79 = vsub.s32 0, %v78
  %v80 = vrot.slane %v75, %v79
  %v88 = vunpack.c.l.b16 %v15
  %v89 = vunpack.c.h.b16 %v15
  %v90 = vunpack.c.l.b16 %v16
  %v91 = vunpack.c.l.b16 %v17
  %v92 = vunpack.c.h.b16 %v17
  %v93 = vunpack.c.l.b16 %v18
  %v94 = vunpack.c.l.b16 %v19
  %v95 = vunpack.c.h.b16 %v19
  %v96 = vunpack.c.l.b16 %v20
  %v97 = vpack.c.b16 %v91, %v88
  %v98 = vpack.c.b16 %v92, %v89
  %v99 = vpack.c.b16 %v93, %v90
  %v100 = vpack.c.b16 %v94, %v94
  %v101 = vpack.c.b16 %v95, %v95
  %v102 = vpack.c.b16 %v96, %v96
  %vm107 = vcmask 261120
  %v109 = vsel %vm107, %v99, 0
  %v112 = vsel %vm107, %v102, 0
  %114 = vmatprep.subr.bf16.mxu0 0
  %115 = vmatpush1.bf16.msra.mxu0 %v57
  %116 = vmatprep.subr.bf16.mxu0 0
  %117 = vmatpush1.bf16.msra.mxu0 %v58
  %118 = vmatprep.subr.bf16.mxu0 0
  %119 = vmatpush1.bf16.msra.mxu0 %v59
  %120 = vmatprep.subr.bf16.mxu0 0
  %121 = vmatpush1.bf16.msra.mxu0 %v60
  %122 = vmatprep.subr.bf16.mxu0 0
  %123 = vmatpush1.bf16.msra.mxu0 %v61
  %124 = vmatprep.subr.bf16.mxu0 0
  %125 = vmatpush1.bf16.msra.mxu0 %v62
  %126 = vmatprep.subr.bf16.mxu0 0
  %127 = vmatpush1.bf16.msra.mxu0 %v63
  %128 = vmatprep.subr.bf16.mxu0 0
  %129 = vmatpush1.bf16.msra.mxu0 %v64
  %130 = vmatprep.subr.bf16.mxu0 0
  %131 = vmatpush1.bf16.msra.mxu0 %v65
  %132 = vmatprep.subr.bf16.mxu0 0
  %133 = vmatpush1.bf16.msra.mxu0 %v66
  %134 = vmatprep.subr.bf16.mxu0 0
  %135 = vmatpush1.bf16.msra.mxu0 %v67
  %136 = vmatprep.subr.bf16.mxu0 0
  %137 = vmatpush1.bf16.msra.mxu0 %v68
  %138 = vmatprep.subr.bf16.mxu0 0
  %139 = vmatpush1.bf16.msra.mxu0 %v69
  %140 = vmatprep.subr.bf16.mxu0 0
  %141 = vmatpush1.bf16.msra.mxu0 %v70
  %142 = vmatprep.subr.bf16.mxu0 0
  %143 = vmatpush1.bf16.msra.mxu0 %v71
  %144 = vmatprep.subr.bf16.mxu0 0
  %145 = vmatpush1.bf16.msra.mxu0 %v72
  %146 = vmatprep.mubr.bf16.mxu0 %v98
  %147 = vmatmul.mubr.bf16.gmra.mrb[0].mxu0 %v97
  %v148 = vpop.f32.mrb[0].mxu0
  %v149 = vadd.f32 %v80, %v148
  %v150 = vpop.f32.mrb[0].mxu0
  %v151 = vpop.f32.mrb[0].mxu0
  %v152 = vadd.f32 %v80, %v151
  %v153 = vpop.f32.mrb[0].mxu0
  %154 = vmatprep.mubr.bf16.mxu0 %v101
  %155 = vmatmul.mubr.bf16.gmra.mrb[0].mxu0 %v100
  %v156 = vpop.f32.mrb[0].mxu0
  %v157 = vadd.f32 %v80, %v156
  %v158 = vpop.f32.mrb[0].mxu0
  %v159 = vpop.f32.mrb[0].mxu0
  %v160 = vpop.f32.mrb[0].mxu0
  %161 = vdwg.mxu0
  %162 = vmatprep.subr.bf16.mxu0 0
  %163 = vmatpush1.bf16.msra.mxu0 %v73
  %164 = vmatprep.subr.bf16.mxu0 0
  %165 = vmatpush1.bf16.msra.mxu0 %v74
  %166 = vmatprep.subr.bf16.mxu0 0
  %167 = vmatpush1.bf16.msra.mxu0 0
  %168 = vmatprep.subr.bf16.mxu0 0
  %169 = vmatpush1.bf16.msra.mxu0 0
  %170 = vmatprep.subr.bf16.mxu0 0
  %171 = vmatpush1.bf16.msra.mxu0 0
  %172 = vmatprep.subr.bf16.mxu0 0
  %173 = vmatpush1.bf16.msra.mxu0 0
  %174 = vmatprep.subr.bf16.mxu0 0
  %175 = vmatpush1.bf16.msra.mxu0 0
  %176 = vmatprep.subr.bf16.mxu0 0
  %177 = vmatpush1.bf16.msra.mxu0 0
  %178 = vmatprep.subr.bf16.mxu0 0
  %179 = vmatpush1.bf16.msra.mxu0 0
  %180 = vmatprep.subr.bf16.mxu0 0
  %181 = vmatpush1.bf16.msra.mxu0 0
  %182 = vmatprep.subr.bf16.mxu0 0
  %183 = vmatpush1.bf16.msra.mxu0 0
  %184 = vmatprep.subr.bf16.mxu0 0
  %185 = vmatpush1.bf16.msra.mxu0 0
  %186 = vmatprep.subr.bf16.mxu0 0
  %187 = vmatpush1.bf16.msra.mxu0 0
  %188 = vmatprep.subr.bf16.mxu0 0
  %189 = vmatpush1.bf16.msra.mxu0 0
  %190 = vmatprep.subr.bf16.mxu0 0
  %191 = vmatpush1.bf16.msra.mxu0 0
  %192 = vmatprep.subr.bf16.mxu0 0
  %193 = vmatpush1.bf16.msra.mxu0 0
  %194 = vmatprep.mubr.bf16.mxu0 0
  %195 = vmatmul.mubr.bf16.gmra.mrb[0].mxu0 %v109
  %v196 = vpop.f32.mrb[0].mxu0
  %v197 = vadd.f32 %v149, %v196
  %v198 = vpop.f32.mrb[0].mxu0
  %v199 = vpop.f32.mrb[0].mxu0
  %v200 = vadd.f32 %v152, %v199
  %v201 = vpop.f32.mrb[0].mxu0
  %202 = vmatprep.mubr.bf16.mxu0 0
  %203 = vmatmul.mubr.bf16.gmra.mrb[0].mxu0 %v112
  %v204 = vpop.f32.mrb[0].mxu0
  %v205 = vadd.f32 %v157, %v204
  %v206 = vpop.f32.mrb[0].mxu0
  %v207 = vpop.f32.mrb[0].mxu0
  %v208 = vpop.f32.mrb[0].mxu0
  %209 = vdwg.mxu0
  %v210 = vmax.f32 %v197, 0.0
  %v211 = vmax.f32 %v200, 0.0
  %v212 = vmax.f32 %v205, 0.0
  %v213 = vpack.c.bf16 %v211, %v210
  %v214 = vpack.c.bf16 %v212, %v212
  %v217 = vunpack.c.l.b16 %v213
  %v218 = vunpack.c.h.b16 %v213
  %v219 = vunpack.c.l.b16 %v214
  %v220 = vpack.c.b16 %v217, %v217
  %v221 = vpack.c.b16 %v218, %v218
  %v222 = vpack.c.b16 %v219, %v219
  %vm226 = vcmask 257024
  %227 = vst.msk [vmem:[%s3] sm:$0xf] %vm226, %v220
  %228 = vst.msk [vmem:[%s3 + $0x4] sm:$0xf] %vm226, %v221
  %229 = vst.msk [vmem:[%s3 + $0x8] sm:$0xf] %vm226, %v222
  // Predicated region
  $region14: #{encoder_mix_forward.5} parent=0 // pred_check
    _
  $region15: #{encoder_mix_forward.5} parent=0 // pred_check_branch
    %231 = sbr.rel (0) target = $region17
  $region16: #{encoder_mix_forward.5} parent=0 // pred_region
    _
  $region17: #{encoder_mix_forward.5} parent=0 // pred_fallthru
    _
  // Predicated region
  $region18: #{encoder_mix_forward.5} parent=0 // pred_check
    _
  $region19: #{encoder_mix_forward.5} parent=0 // pred_check_branch
    %233 = sbr.rel (0) target = $region21
  $region20: #{encoder_mix_forward.5} parent=0 // pred_region
    _
  $region21: #{encoder_mix_forward.5} parent=0 // pred_fallthru
    _

// kernel: encoder_mix_forward.6
$region0: #{encoder_mix_forward.6}
  #allocation0 [shape = 'u32[]', space=smem, size = 0x4, offset = 0x4, fixed_abs, tag = 'smem constant byte address 0x4 - core index']
  #allocation1 [shape = 'u32[144,128]{1,0:T(1,128)}', space=vmem, size = 0x12000, scoped, tag = 'internal scratch']
  %s0 = inlined_call_operand.vmem [shape: bf16[2,8,96], index: 0, kind: input, shape index: {}]
  %s1 = inlined_call_operand.vmem [shape: f32[96,32], index: 1, kind: input, shape index: {}]
  %s2 = inlined_call_operand.vmem [shape: f32[1,32], index: 2, kind: input, shape index: {}]
  %s3 = inlined_call_operand.vmem [shape: f32[8,32], index: 3, kind: input, shape index: {}]
  %s4 = inlined_call_operand.vmem [shape: f32[2,8,32], index: 4, kind: output, shape index: {}]
  %s5 = sld [smem:[#allocation0]]
  $region49: #{encoder_mix_forward.6} parent=0
    _
  %s7 = ssub.s32 1, %s5
  %s8 = scalar_select 0, %s7, %s5
  loop: start=0, step=1, limit=4
  $region2: #{encoder_mix_forward.6} parent=0 // loop_pre_header
    _
  $region3: #{encoder_mix_forward.6} parent=0 // loop_header
    %s10 = sphi 0, %s14
    %p11 = scmp.ge.s32.totalorder %s10, 4
    %s20 = sphi 0, %s22
    %s23 = sphi 0, %s20
    %s24 = sphi 0, %s23
    %s40 = sphi 0, %s24
    %s44 = sphi 0, %s44
    %s46 = sphi 0, %s44
    %s47 = sphi 0, %s46
    %s61 = sphi 0, %s47
    %s65 = sphi 0, %s65
    %s67 = sphi 0, %s65
    %s68 = sphi 0, %s67
    %s82 = sphi 0, %s68
    %s86 = sphi 0, %s86
    %s88 = sphi 0, %s86
    %s89 = sphi 0, %s88
    %s103 = sphi 0, %s89
    %s109 = sphi 0, %s111
    %s112 = sphi 0, %s109
    %s113 = sphi 0, %s112
    %s129 = sphi 0, %s113
  $region4: #{encoder_mix_forward.6} parent=0 // loop_header_branch
    %13 = sbr.rel (%p11) target = $region8
  $region5: #{encoder_mix_forward.6} parent=0 // loop_body
    %s15 = ssub.s32 %s10, 1
    %s16 = ssub.s32 %s10, 2
    %s17 = sadd.s32 %s10, 1
    %s18 = ssub.s32 %s10, %s17
    %p19 = scmp.eq.s32.totalorder %s18, 0
    %s21 = sadd.s32 %s20, 1
    %s22 = scalar_select %p19, %s20, %s21
    %p25 = pneg %p19
    %p26 = scmp.eq.s32.totalorder %s10, 1
    %p27 = por %p25, %p26
    %p28 = scmp.ne.s32.totalorder %s20, %s23
    %p29 = scmp.eq.s32.totalorder %s10, 0
    %p30 = por %p28, %p29
    %p31 = scmp.ne.s32.totalorder %s20, %s23
    %p32 = scmp.eq.s32.totalorder %s15, 1
    %p33 = por %p31, %p32
    %p34 = scmp.ne.s32.totalorder %s23, %s24
    %p35 = scmp.eq.s32.totalorder %s15, 0
    %p36 = por %p34, %p35
    %p37 = scmp.ne.s32.totalorder %s23, %s24
    %p38 = scmp.eq.s32.totalorder %s16, 1
    %p39 = por %p37, %p38
    %p41 = scmp.ne.s32.totalorder %s24, %s40
    %p42 = scmp.eq.s32.totalorder %s16, 0
    %p43 = por %p41, %p42
    %s45 = sadd.s32 %s44, 1
    %p48 = scmp.eq.s32.totalorder %s10, 1
    %p49 = scmp.ne.s32.totalorder %s44, %s46
    %p50 = scmp.eq.s32.totalorder %s10, 0
    %p51 = por %p49, %p50
    %p52 = scmp.ne.s32.totalorder %s44, %s46
    %p53 = scmp.eq.s32.totalorder %s15, 1
    %p54 = por %p52, %p53
    %p55 = scmp.ne.s32.totalorder %s46, %s47
    %p56 = scmp.eq.s32.totalorder %s15, 0
    %p57 = por %p55, %p56
    %p58 = scmp.ne.s32.totalorder %s46, %s47
    %p59 = scmp.eq.s32.totalorder %s16, 1
    %p60 = por %p58, %p59
    %p62 = scmp.ne.s32.totalorder %s47, %s61
    %p63 = scmp.eq.s32.totalorder %s16, 0
    %p64 = por %p62, %p63
    %s66 = sadd.s32 %s65, 1
    %p69 = scmp.eq.s32.totalorder %s10, 1
    %p70 = scmp.ne.s32.totalorder %s65, %s67
    %p71 = scmp.eq.s32.totalorder %s10, 0
    %p72 = por %p70, %p71
    %p73 = scmp.ne.s32.totalorder %s65, %s67
    %p74 = scmp.eq.s32.totalorder %s15, 1
    %p75 = por %p73, %p74
    %p76 = scmp.ne.s32.totalorder %s67, %s68
    %p77 = scmp.eq.s32.totalorder %s15, 0
    %p78 = por %p76, %p77
    %p79 = scmp.ne.s32.totalorder %s67, %s68
    %p80 = scmp.eq.s32.totalorder %s16, 1
    %p81 = por %p79, %p80
    %p83 = scmp.ne.s32.totalorder %s68, %s82
    %p84 = scmp.eq.s32.totalorder %s16, 0
    %p85 = por %p83, %p84
    %s87 = sadd.s32 %s86, 1
    %p90 = scmp.eq.s32.totalorder %s10, 1
    %p91 = scmp.ne.s32.totalorder %s86, %s88
    %p92 = scmp.eq.s32.totalorder %s10, 0
    %p93 = por %p91, %p92
    %p94 = scmp.ne.s32.totalorder %s86, %s88
    %p95 = scmp.eq.s32.totalorder %s15, 1
    %p96 = por %p94, %p95
    %p97 = scmp.ne.s32.totalorder %s88, %s89
    %p98 = scmp.eq.s32.totalorder %s15, 0
    %p99 = por %p97, %p98
    %p100 = scmp.ne.s32.totalorder %s88, %s89
    %p101 = scmp.eq.s32.totalorder %s16, 1
    %p102 = por %p100, %p101
    %p104 = scmp.ne.s32.totalorder %s89, %s103
    %p105 = scmp.eq.s32.totalorder %s16, 0
    %p106 = por %p104, %p105
    %s107 = ssub.s32 %s10, %s17
    %p108 = scmp.eq.s32.totalorder %s107, 0
    %s110 = sadd.s32 %s109, 1
    %s111 = scalar_select %p108, %s109, %s110
    %p114 = pneg %p108
    %p115 = scmp.eq.s32.totalorder %s10, 1
    %p116 = por %p114, %p115
    %p117 = scmp.ne.s32.totalorder %s109, %s112
    %p118 = scmp.eq.s32.totalorder %s10, 0
    %p119 = por %p117, %p118
    %p120 = scmp.ne.s32.totalorder %s109, %s112
    %p121 = scmp.eq.s32.totalorder %s15, 1
    %p122 = por %p120, %p121
    %p123 = scmp.ne.s32.totalorder %s112, %s113
    %p124 = scmp.eq.s32.totalorder %s15, 0
    %p125 = por %p123, %p124
    %p126 = scmp.ne.s32.totalorder %s112, %s113
    %p127 = scmp.eq.s32.totalorder %s16, 1
    %p128 = por %p126, %p127
    %p130 = scmp.ne.s32.totalorder %s113, %s129
    %p131 = scmp.eq.s32.totalorder %s16, 0
    %p132 = por %p130, %p131
    %p133 = scmp.le.s32.totalorder 1, %s10
    %p134 = scmp.lt.s32.totalorder %s10, 3
    %p135 = pnand %p133, %p134
    %p136 = pneg %p135
    // Predicated region
    $region9: #{encoder_mix_forward.6} parent=5 // pred_check
      _
    $region10: #{encoder_mix_forward.6} parent=5 // pred_check_branch
      %138 = sbr.rel (%p135) target = $region12
    $region11: #{encoder_mix_forward.6} parent=5 // pred_region
      %s139 = ssub.s32 %s10, 1
      // Predicated region
      $region13: #{encoder_mix_forward.6} parent=11 // pred_check
        %p140 = pneg %p57
      $region14: #{encoder_mix_forward.6} parent=11 // pred_check_branch
        %142 = sbr.rel (%p140) target = $region16
      $region15: #{encoder_mix_forward.6} parent=11 // pred_region
        _
      $region16: #{encoder_mix_forward.6} parent=11 // pred_fallthru
        _
      // Predicated region
      $region17: #{encoder_mix_forward.6} parent=11 // pred_check
        %p143 = pneg %p78
      $region18: #{encoder_mix_forward.6} parent=11 // pred_check_branch
        %145 = sbr.rel (%p143) target = $region20
      $region19: #{encoder_mix_forward.6} parent=11 // pred_region
        _
      $region20: #{encoder_mix_forward.6} parent=11 // pred_fallthru
        _
      // Predicated region
      $region21: #{encoder_mix_forward.6} parent=11 // pred_check
        %p146 = pneg %p99
      $region22: #{encoder_mix_forward.6} parent=11 // pred_check_branch
        %148 = sbr.rel (%p146) target = $region24
      $region23: #{encoder_mix_forward.6} parent=11 // pred_region
        _
      $region24: #{encoder_mix_forward.6} parent=11 // pred_fallthru
        _
    $region12: #{encoder_mix_forward.6} parent=5 // pred_fallthru
      _
    %p149 = scmp.lt.s32.totalorder %s10, 2
    // Predicated region
    $region25: #{encoder_mix_forward.6} parent=5 // pred_check
      %p150 = pneg %p149
    $region26: #{encoder_mix_forward.6} parent=5 // pred_check_branch
      %152 = sbr.rel (%p150) target = $region28
    $region27: #{encoder_mix_forward.6} parent=5 // pred_region
      // Predicated region
      $region29: #{encoder_mix_forward.6} parent=27 // pred_check
        %p153 = pneg %p30
      $region30: #{encoder_mix_forward.6} parent=27 // pred_check_branch
        %155 = sbr.rel (%p153) target = $region32
      $region31: #{encoder_mix_forward.6} parent=27 // pred_region
        %p156 = scmp.lt.s32.totalorder %s10, 1
        %s157 = scalar_select %p156, %s10, 1
        %s158 = smul.addr %s157, 4
        %s159 = scalar_lea.vmem %s0, %s158
      $region32: #{encoder_mix_forward.6} parent=27 // pred_fallthru
        _
    $region28: #{encoder_mix_forward.6} parent=5 // pred_fallthru
      _
    %p160 = scmp.le.s32.totalorder 1, %s10
    %p161 = scmp.lt.s32.totalorder %s10, 3
    %p162 = pnand %p160, %p161
    %p163 = pneg %p162
    // Predicated region
    $region33: #{encoder_mix_forward.6} parent=5 // pred_check
      _
    $region34: #{encoder_mix_forward.6} parent=5 // pred_check_branch
      %165 = sbr.rel (%p162) target = $region36
    $region35: #{encoder_mix_forward.6} parent=5 // pred_region
      %s166 = ssub.s32 %s10, 1
      %p167 = scmp.lt.s32.totalorder %s15, 1
      %s168 = scalar_select %p167, %s15, 1
      %s169 = smul.addr %s168, 4
      %s170 = scalar_lea.vmem %s0, %s169
      %p171 = pneg %p36
      %p172 = pneg %p33
      %p173 = pneg %p57
      %p174 = pneg %p54
      %p175 = pneg %p78
      %p176 = pneg %p75
      %p177 = pneg %p99
      %p178 = pneg %p96
      %p179 = pneg %p125
      %p180 = pneg %p122
      %p181 = scmp.lt.s32.totalorder %s15, 1
      %s182 = scalar_select %p181, %s15, 1
      %s183 = smul.addr %s182, 8
      %s184 = scalar_lea.vmem %s4, %s183
      %p185 = scmp.lt.s32.totalorder %s15, 1
      %s186 = scalar_select %p185, %s15, 1
      %s187 = smul.addr %s186, 4
      %s188 = scalar_lea.vmem %s0, %s187
      %p189 = scmp.lt.s32.totalorder %s15, 1
      %s190 = scalar_select %p189, %s15, 1
      %s191 = smul.addr %s190, 8
      %s192 = scalar_lea.vmem %s4, %s191
      %v194 = vld [vmem:[%s188] sm:$0xf]
      %v195 = vld [vmem:[%s1] sm:$0xff]
      %v196 = vld [vmem:[%s1 + $0x8] sm:$0xff]
      %v197 = vld [vmem:[%s1 + $0x10] sm:$0xff]
      %v198 = vld [vmem:[%s1 + $0x18] sm:$0xff]
      %v199 = vld [vmem:[%s1 + $0x20] sm:$0xff]
      %v200 = vld [vmem:[%s1 + $0x28] sm:$0xff]
      %v201 = vld [vmem:[%s1 + $0x30] sm:$0xff]
      %v202 = vld [vmem:[%s1 + $0x38] sm:$0xff]
      %v203 = vld [vmem:[%s1 + $0x40] sm:$0xff]
      %v204 = vld [vmem:[%s1 + $0x48] sm:$0xff]
      %v205 = vld [vmem:[%s1 + $0x50] sm:$0xff]
      %v206 = vld [vmem:[%s1 + $0x58] sm:$0xff]
      %v207 = vpack.c.bf16 %v196, %v195
      %v208 = vpack.c.bf16 %v198, %v197
      %v209 = vpack.c.bf16 %v200, %v199
      %v210 = vpack.c.bf16 %v202, %v201
      %v211 = vpack.c.bf16 %v204, %v203
      %v212 = vpack.c.bf16 %v206, %v205
      %v213 = vld [vmem:[%s2] sm:$0x1]
      %v215 = vlaneseq
      %v216 = vshrl.u32 %v215, 7
      %v217 = vsub.s32 0, %v216
      %v218 = vrot.slane %v213, %v217
      %vm220 = vcmask 785408
      %v222 = vsel %vm220, %v194, 0
      %224 = vmatprep.subr.bf16.mxu0 0
      %225 = vmatpush1.bf16.msra.mxu0 %v207
      %226 = vmatprep.subr.bf16.mxu0 0
      %227 = vmatpush1.bf16.msra.mxu0 %v208
      %228 = vmatprep.subr.bf16.mxu0 0
      %229 = vmatpush1.bf16.msra.mxu0 %v209
      %230 = vmatprep.subr.bf16.mxu0 0
      %231 = vmatpush1.bf16.msra.mxu0 %v210
      %232 = vmatprep.subr.bf16.mxu0 0
      %233 = vmatpush1.bf16.msra.mxu0 %v211
      %234 = vmatprep.subr.bf16.mxu0 0
      %235 = vmatpush1.bf16.msra.mxu0 %v212
      %236 = vmatprep.subr.bf16.mxu0 0
      %237 = vmatpush1.bf16.msra.mxu0 0
      %238 = vmatprep.subr.bf16.mxu0 0
      %239 = vmatpush1.bf16.msra.mxu0 0
      %240 = vmatprep.subr.bf16.mxu0 0
      %241 = vmatpush1.bf16.msra.mxu0 0
      %242 = vmatprep.subr.bf16.mxu0 0
      %243 = vmatpush1.bf16.msra.mxu0 0
      %244 = vmatprep.subr.bf16.mxu0 0
      %245 = vmatpush1.bf16.msra.mxu0 0
      %246 = vmatprep.subr.bf16.mxu0 0
      %247 = vmatpush1.bf16.msra.mxu0 0
      %248 = vmatprep.subr.bf16.mxu0 0
      %249 = vmatpush1.bf16.msra.mxu0 0
      %250 = vmatprep.subr.bf16.mxu0 0
      %251 = vmatpush1.bf16.msra.mxu0 0
      %252 = vmatprep.subr.bf16.mxu0 0
      %253 = vmatpush1.bf16.msra.mxu0 0
      %254 = vmatprep.subr.bf16.mxu0 0
      %255 = vmatpush1.bf16.msra.mxu0 0
      %256 = vmatprep.mubr.bf16.mxu0 0
      %257 = vmatmul.mubr.bf16.gmra.mrb[0].mxu0 %v222
      %v258 = vpop.f32.mrb[0].mxu0
      %v259 = vadd.f32 %v218, %v258
      %v260 = vpop.f32.mrb[0].mxu0
      %v261 = vpop.f32.mrb[0].mxu0
      %v262 = vpop.f32.mrb[0].mxu0
      %263 = vdwg.mxu0
      %v264 = vmul.f32 %v259, 5.656854
      %v265 = vld [vmem:[%s3] sm:$0xff]
      %v266 = vadd.f32 %v264, %v265
      %vm267 = vcmask 261120
      %268 = vst.msk [vmem:[%s192] sm:$0xff] %vm267, %v266
      %p269 = scmp.lt.s32.totalorder %s15, 1
      %s270 = scalar_select %p269, %s15, 1
      %s271 = smul.addr %s270, 8
      %s272 = scalar_lea.vmem %s4, %s271
      // Predicated region
      $region37: #{encoder_mix_forward.6} parent=35 // pred_check
        %p273 = pneg %p122
      $region38: #{encoder_mix_forward.6} parent=35 // pred_check_branch
        %275 = sbr.rel (%p273) target = $region40
      $region39: #{encoder_mix_forward.6} parent=35 // pred_region
        _
      $region40: #{encoder_mix_forward.6} parent=35 // pred_fallthru
        _
    $region36: #{encoder_mix_forward.6} parent=5 // pred_fallthru
      _
    %p276 = scmp.le.s32.totalorder 2, %s10
    // Predicated region
    $region41: #{encoder_mix_forward.6} parent=5 // pred_check
      %p277 = pneg %p276
    $region42: #{encoder_mix_forward.6} parent=5 // pred_check_branch
      %279 = sbr.rel (%p277) target = $region44
    $region43: #{encoder_mix_forward.6} parent=5 // pred_region
      %s280 = ssub.s32 %s10, 2
      // Predicated region
      $region45: #{encoder_mix_forward.6} parent=43 // pred_check
        %p281 = pneg %p128
      $region46: #{encoder_mix_forward.6} parent=43 // pred_check_branch
        %283 = sbr.rel (%p281) target = $region48
      $region47: #{encoder_mix_forward.6} parent=43 // pred_region
        %p284 = scmp.lt.s32.totalorder %s16, 1
        %s285 = scalar_select %p284, %s16, 1
        %s286 = smul.addr %s285, 8
        %s287 = scalar_lea.vmem %s4, %s286
      $region48: #{encoder_mix_forward.6} parent=43 // pred_fallthru
        _
    $region44: #{encoder_mix_forward.6} parent=5 // pred_fallthru
      _
  $region6: #{encoder_mix_forward.6} parent=0 // loop_footer
    %s14 = sadd.s32 1, %s10
  $region7: #{encoder_mix_forward.6} parent=0 // loop_footer_branch
    %9 = sbr.rel target = $region3
  $region8: #{encoder_mix_forward.6} parent=0 // loop_exit
    _

// kernel: encoder_mix_forward.7
$region0: #{encoder_mix_forward.7}
  #allocation0 [shape = 'u32[]', space=smem, size = 0x4, offset = 0x4, fixed_abs, tag = 'smem constant byte address 0x4 - core index']
  #allocation1 [shape = 'u32[144,128]{1,0:T(1,128)}', space=vmem, size = 0x12000, scoped, tag = 'internal scratch']
  #allocation2 [shape = 's32[1]{0}', space=sflag, size = 0x4, scoped, tag = 'scoped memory for encoder_mix_forward.7']
  #allocation3 [shape = 'u8[1024]{0}', space=smem, size = 0x400, scoped, tag = 'prefetched SMEM operand 0']
  %s0 = inlined_call_operand.vmem [shape: s32[2,4], index: 0, kind: input, shape index: {}]
  %s1 = inlined_call_operand.vmem [shape: f32[16,32], index: 1, kind: input, shape index: {}]
  %s2 = inlined_call_operand.vmem [shape: f32[16,8], index: 2, kind: input, shape index: {}]
  %s3 = inlined_call_operand.vmem [shape: f32[6,1,32], index: 3, kind: input, shape index: {}]
  %s4 = inlined_call_operand.vmem [shape: f32[6,1,32], index: 4, kind: input, shape index: {}]
  %s5 = inlined_call_operand.vmem [shape: bf16[6,32,96], index: 5, kind: input, shape index: {}]
  %s6 = inlined_call_operand.vmem [shape: f32[6,1,96], index: 6, kind: input, shape index: {}]
  %s7 = inlined_call_operand.vmem [shape: bf16[6,32,32], index: 7, kind: input, shape index: {}]
  %s8 = inlined_call_operand.vmem [shape: f32[6,1,32], index: 8, kind: input, shape index: {}]
  %s9 = inlined_call_operand.vmem [shape: f32[6,1,32], index: 9, kind: input, shape index: {}]
  %s10 = inlined_call_operand.vmem [shape: f32[6,1,32], index: 10, kind: input, shape index: {}]
  %s11 = inlined_call_operand.vmem [shape: bf16[6,32,64], index: 11, kind: input, shape index: {}]
  %s12 = inlined_call_operand.vmem [shape: f32[6,1,64], index: 12, kind: input, shape index: {}]
  %s13 = inlined_call_operand.vmem [shape: bf16[6,64,32], index: 13, kind: input, shape index: {}]
  %s14 = inlined_call_operand.vmem [shape: f32[6,1,32], index: 14, kind: input, shape index: {}]
  %s15 = inlined_call_operand.vmem [shape: f32[1,32], index: 15, kind: input, shape index: {}]
  %s16 = inlined_call_operand.vmem [shape: f32[1,32], index: 16, kind: input, shape index: {}]
  %s17 = inlined_call_operand.vmem [shape: f32[2,16,32], index: 17, kind: output, shape index: {}]
  %s18 = sld [smem:[#allocation0]]
  $region105: #{encoder_mix_forward.7} parent=0
    _
  %s20 = ssub.s32 1, %s18
  %s21 = scalar_select 0, %s20, %s18
  %s22 = sshll.u32 %s0, 4
  %s23 = int_to_ptr.vmem [resolvable:$true] %s22
  %25 = dma.vmem_to_smem %s23, 32, [#allocation3], [#allocation2]
  %26 = dma.done [#allocation2], 32
  %27 = sfence
  loop: start=0, step=1, limit=10
  $region2: #{encoder_mix_forward.7} parent=0 // loop_pre_header
    _
  $region3: #{encoder_mix_forward.7} parent=0 // loop_header
    %s29 = sphi 0, %s33
    %p30 = scmp.ge.s32.totalorder %s29, 10
    %s36 = sphi 0, %s48
    %s37 = sphi 0, %s44
    %s38 = sphi 0, %s36
    %s39 = sphi 0, %s37
    %s40 = sphi 0, %s38
    %s41 = sphi 0, %s39
    %s49 = sphi 0, %s49
    %s51 = sphi 0, %s49
    %s52 = sphi 0, %s51
    %s66 = sphi 0, %s52
    %s70 = sphi 0, %s70
    %s72 = sphi 0, %s70
    %s73 = sphi 0, %s72
    %s87 = sphi 0, %s73
    %s109 = sphi 0, %s111
    %s112 = sphi 0, %s109
    %s113 = sphi 0, %s112
    %s129 = sphi 0, %s113
    %s151 = sphi 0, %s153
    %s154 = sphi 0, %s151
    %s155 = sphi 0, %s154
    %s171 = sphi 0, %s155
    %s193 = sphi 0, %s195
    %s196 = sphi 0, %s193
    %s197 = sphi 0, %s196
    %s213 = sphi 0, %s197
    %s235 = sphi 0, %s237
    %s238 = sphi 0, %s235
    %s239 = sphi 0, %s238
    %s255 = sphi 0, %s239
    %s277 = sphi 0, %s279
    %s280 = sphi 0, %s277
    %s281 = sphi 0, %s280
    %s297 = sphi 0, %s281
    %s319 = sphi 0, %s321
    %s322 = sphi 0, %s319
    %s323 = sphi 0, %s322
    %s339 = sphi 0, %s323
    %s361 = sphi 0, %s363
    %s364 = sphi 0, %s361
    %s365 = sphi 0, %s364
    %s381 = sphi 0, %s365
    %s403 = sphi 0, %s405
    %s406 = sphi 0, %s403
    %s407 = sphi 0, %s406
    %s423 = sphi 0, %s407
    %s445 = sphi 0, %s447
    %s448 = sphi 0, %s445
    %s449 = sphi 0, %s448
    %s465 = sphi 0, %s449
    %s487 = sphi 0, %s489
    %s490 = sphi 0, %s487
    %s491 = sphi 0, %s490
    %s507 = sphi 0, %s491
    %s529 = sphi 0, %s531
    %s532 = sphi 0, %s529
    %s533 = sphi 0, %s532
    %s549 = sphi 0, %s533
    %s571 = sphi 0, %s573
    %s574 = sphi 0, %s571
    %s575 = sphi 0, %s574
    %s591 = sphi 0, %s575
    %s595 = sphi 0, %s595
    %s597 = sphi 0, %s595
    %s598 = sphi 0, %s597
    %s612 = sphi 0, %s598
    %s616 = sphi 0, %s616
    %s618 = sphi 0, %s616
    %s619 = sphi 0, %s618
    %s633 = sphi 0, %s619
    %s639 = sphi 0, %s641
    %s642 = sphi 0, %s639
    %s643 = sphi 0, %s642
    %s659 = sphi 0, %s643
  $region4: #{encoder_mix_forward.7} parent=0 // loop_header_branch
    %32 = sbr.rel (%p30) target = $region8
  $region5: #{encoder_mix_forward.7} parent=0 // loop_body
    %s34 = ssub.s32 %s29, 1
    %s35 = ssub.s32 %s29, 2
    %s42 = sadd.s32 1, %s37
    %p43 = scmp.ge.s32.totalorder %s42, 4
    %s44 = scalar_select %p43, 0, %s42
    %s45 = sadd.s32 1, %s36
    %s46 = scalar_select %p43, %s45, %s36
    %p47 = scmp.ge.s32.totalorder %s46, 2
    %s48 = scalar_select %p47, 0, %s46
    %s50 = sadd.s32 %s49, 1
    %p53 = scmp.eq.s32.totalorder %s29, 7
    %p54 = scmp.ne.s32.totalorder %s49, %s51
    %p55 = scmp.eq.s32.totalorder %s29, 0
    %p56 = por %p54, %p55
    %p57 = scmp.ne.s32.totalorder %s49, %s51
    %p58 = scmp.eq.s32.totalorder %s34, 7
    %p59 = por %p57, %p58
    %p60 = scmp.ne.s32.totalorder %s51, %s52
    %p61 = scmp.eq.s32.totalorder %s34, 0
    %p62 = por %p60, %p61
    %p63 = scmp.ne.s32.totalorder %s51, %s52
    %p64 = scmp.eq.s32.totalorder %s35, 7
    %p65 = por %p63, %p64
    %p67 = scmp.ne.s32.totalorder %s52, %s66
    %p68 = scmp.eq.s32.totalorder %s35, 0
    %p69 = por %p67, %p68
    %s71 = sadd.s32 %s70, 1
    %p74 = scmp.eq.s32.totalorder %s29, 7
    %p75 = scmp.ne.s32.totalorder %s70, %s72
    %p76 = scmp.eq.s32.totalorder %s29, 0
    %p77 = por %p75, %p76
    %p78 = scmp.ne.s32.totalorder %s70, %s72
    %p79 = scmp.eq.s32.totalorder %s34, 7
    %p80 = por %p78, %p79
    %p81 = scmp.ne.s32.totalorder %s72, %s73
    %p82 = scmp.eq.s32.totalorder %s34, 0
    %p83 = por %p81, %p82
    %p84 = scmp.ne.s32.totalorder %s72, %s73
    %p85 = scmp.eq.s32.totalorder %s35, 7
    %p86 = por %p84, %p85
    %p88 = scmp.ne.s32.totalorder %s73, %s87
    %p89 = scmp.eq.s32.totalorder %s35, 0
    %p90 = por %p88, %p89
    %s91 = sshra.s32 %s37, 7
    %s92 = sand.u32 %s37, 127
    %s93 = sadd.s32 %s91, %s36
    %s94 = smul.u32 %s93, 128
    %s95 = sshra.s32 %s37, 7
    %s96 = sand.u32 %s37, 127
    %s97 = sadd.s32 %s94, %s96
    %s98 = sld [smem:[#allocation3 + %s97]]
    %s99 = sshra.s32 %s44, 7
    %s100 = sand.u32 %s44, 127
    %s101 = sadd.s32 %s99, %s48
    %s102 = smul.u32 %s101, 128
    %s103 = sshra.s32 %s44, 7
    %s104 = sand.u32 %s44, 127
    %s105 = sadd.s32 %s102, %s104
    %s106 = sld [smem:[#allocation3 + %s105]]
    %s107 = ssub.s32 %s98, %s106
    %p108 = scmp.eq.s32.totalorder %s107, 0
    %s110 = sadd.s32 %s109, 1
    %s111 = scalar_select %p108, %s109, %s110
    %p114 = pneg %p108
    %p115 = scmp.eq.s32.totalorder %s29, 7
    %p116 = por %p114, %p115
    %p117 = scmp.ne.s32.totalorder %s109, %s112
    %p118 = scmp.eq.s32.totalorder %s29, 0
    %p119 = por %p117, %p118
    %p120 = scmp.ne.s32.totalorder %s109, %s112
    %p121 = scmp.eq.s32.totalorder %s34, 7
    %p122 = por %p120, %p121
    %p123 = scmp.ne.s32.totalorder %s112, %s113
    %p124 = scmp.eq.s32.totalorder %s34, 0
    %p125 = por %p123, %p124
    %p126 = scmp.ne.s32.totalorder %s112, %s113
    %p127 = scmp.eq.s32.totalorder %s35, 7
    %p128 = por %p126, %p127
    %p130 = scmp.ne.s32.totalorder %s113, %s129
    %p131 = scmp.eq.s32.totalorder %s35, 0
    %p132 = por %p130, %p131
    %s133 = sshra.s32 %s37, 7
    %s134 = sand.u32 %s37, 127
    %s135 = sadd.s32 %s133, %s36
    %s136 = smul.u32 %s135, 128
    %s137 = sshra.s32 %s37, 7
    %s138 = sand.u32 %s37, 127
    %s139 = sadd.s32 %s136, %s138
    %s140 = sld [smem:[#allocation3 + %s139]]
    %s141 = sshra.s32 %s44, 7
    %s142 = sand.u32 %s44, 127
    %s143 = sadd.s32 %s141, %s48
    %s144 = smul.u32 %s143, 128
    %s145 = sshra.s32 %s44, 7
    %s146 = sand.u32 %s44, 127
    %s147 = sadd.s32 %s144, %s146
    %s148 = sld [smem:[#allocation3 + %s147]]
    %s149 = ssub.s32 %s140, %s148
    %p150 = scmp.eq.s32.totalorder %s149, 0
    %s152 = sadd.s32 %s151, 1
    %s153 = scalar_select %p150, %s151, %s152
    %p156 = pneg %p150
    %p157 = scmp.eq.s32.totalorder %s29, 7
    %p158 = por %p156, %p157
    %p159 = scmp.ne.s32.totalorder %s151, %s154
    %p160 = scmp.eq.s32.totalorder %s29, 0
    %p161 = por %p159, %p160
    %p162 = scmp.ne.s32.totalorder %s151, %s154
    %p163 = scmp.eq.s32.totalorder %s34, 7
    %p164 = por %p162, %p163
    %p165 = scmp.ne.s32.totalorder %s154, %s155
    %p166 = scmp.eq.s32.totalorder %s34, 0
    %p167 = por %p165, %p166
    %p168 = scmp.ne.s32.totalorder %s154, %s155
    %p169 = scmp.eq.s32.totalorder %s35, 7
    %p170 = por %p168, %p169
    %p172 = scmp.ne.s32.totalorder %s155, %s171
    %p173 = scmp.eq.s32.totalorder %s35, 0
    %p174 = por %p172, %p173
    %s175 = sshra.s32 %s37, 7
    %s176 = sand.u32 %s37, 127
    %s177 = sadd.s32 %s175, %s36
    %s178 = smul.u32 %s177, 128
    %s179 = sshra.s32 %s37, 7
    %s180 = sand.u32 %s37, 127
    %s181 = sadd.s32 %s178, %s180
    %s182 = sld [smem:[#allocation3 + %s181]]
    %s183 = sshra.s32 %s44, 7
    %s184 = sand.u32 %s44, 127
    %s185 = sadd.s32 %s183, %s48
    %s186 = smul.u32 %s185, 128
    %s187 = sshra.s32 %s44, 7
    %s188 = sand.u32 %s44, 127
    %s189 = sadd.s32 %s186, %s188
    %s190 = sld [smem:[#allocation3 + %s189]]
    %s191 = ssub.s32 %s182, %s190
    %p192 = scmp.eq.s32.totalorder %s191, 0
    %s194 = sadd.s32 %s193, 1
    %s195 = scalar_select %p192, %s193, %s194
    %p198 = pneg %p192
    %p199 = scmp.eq.s32.totalorder %s29, 7
    %p200 = por %p198, %p199
    %p201 = scmp.ne.s32.totalorder %s193, %s196
    %p202 = scmp.eq.s32.totalorder %s29, 0
    %p203 = por %p201, %p202
    %p204 = scmp.ne.s32.totalorder %s193, %s196
    %p205 = scmp.eq.s32.totalorder %s34, 7
    %p206 = por %p204, %p205
    %p207 = scmp.ne.s32.totalorder %s196, %s197
    %p208 = scmp.eq.s32.totalorder %s34, 0
    %p209 = por %p207, %p208
    %p210 = scmp.ne.s32.totalorder %s196, %s197
    %p211 = scmp.eq.s32.totalorder %s35, 7
    %p212 = por %p210, %p211
    %p214 = scmp.ne.s32.totalorder %s197, %s213
    %p215 = scmp.eq.s32.totalorder %s35, 0
    %p216 = por %p214, %p215
    %s217 = sshra.s32 %s37, 7
    %s218 = sand.u32 %s37, 127
    %s219 = sadd.s32 %s217, %s36
    %s220 = smul.u32 %s219, 128
    %s221 = sshra.s32 %s37, 7
    %s222 = sand.u32 %s37, 127
    %s223 = sadd.s32 %s220, %s222
    %s224 = sld [smem:[#allocation3 + %s223]]
    %s225 = sshra.s32 %s44, 7
    %s226 = sand.u32 %s44, 127
    %s227 = sadd.s32 %s225, %s48
    %s228 = smul.u32 %s227, 128
    %s229 = sshra.s32 %s44, 7
    %s230 = sand.u32 %s44, 127
    %s231 = sadd.s32 %s228, %s230
    %s232 = sld [smem:[#allocation3 + %s231]]
    %s233 = ssub.s32 %s224, %s232
    %p234 = scmp.eq.s32.totalorder %s233, 0
    %s236 = sadd.s32 %s235, 1
    %s237 = scalar_select %p234, %s235, %s236
    %p240 = pneg %p234
    %p241 = scmp.eq.s32.totalorder %s29, 7
    %p242 = por %p240, %p241
    %p243 = scmp.ne.s32.totalorder %s235, %s238
    %p244 = scmp.eq.s32.totalorder %s29, 0
    %p245 = por %p243, %p244
    %p246 = scmp.ne.s32.totalorder %s235, %s238
    %p247 = scmp.eq.s32.totalorder %s34, 7
    %p248 = por %p246, %p247
    %p249 = scmp.ne.s32.totalorder %s238, %s239
    %p250 = scmp.eq.s32.totalorder %s34, 0
    %p251 = por %p249, %p250
    %p252 = scmp.ne.s32.totalorder %s238, %s239
    %p253 = scmp.eq.s32.totalorder %s35, 7
    %p254 = por %p252, %p253
    %p256 = scmp.ne.s32.totalorder %s239, %s255
    %p257 = scmp.eq.s32.totalorder %s35, 0
    %p258 = por %p256, %p257
    %s259 = sshra.s32 %s37, 7
    %s260 = sand.u32 %s37, 127
    %s261 = sadd.s32 %s259, %s36
    %s262 = smul.u32 %s261, 128
    %s263 = sshra.s32 %s37, 7
    %s264 = sand.u32 %s37, 127
    %s265 = sadd.s32 %s262, %s264
    %s266 = sld [smem:[#allocation3 + %s265]]
    %s267 = sshra.s32 %s44, 7
    %s268 = sand.u32 %s44, 127
    %s269 = sadd.s32 %s267, %s48
    %s270 = smul.u32 %s269, 128
    %s271 = sshra.s32 %s44, 7
    %s272 = sand.u32 %s44, 127
    %s273 = sadd.s32 %s270, %s272
    %s274 = sld [smem:[#allocation3 + %s273]]
    %s275 = ssub.s32 %s266, %s274
    %p276 = scmp.eq.s32.totalorder %s275, 0
    %s278 = sadd.s32 %s277, 1
    %s279 = scalar_select %p276, %s277, %s278
    %p282 = pneg %p276
    %p283 = scmp.eq.s32.totalorder %s29, 7
    %p284 = por %p282, %p283
    %p285 = scmp.ne.s32.totalorder %s277, %s280
    %p286 = scmp.eq.s32.totalorder %s29, 0
    %p287 = por %p285, %p286
    %p288 = scmp.ne.s32.totalorder %s277, %s280
    %p289 = scmp.eq.s32.totalorder %s34, 7
    %p290 = por %p288, %p289
    %p291 = scmp.ne.s32.totalorder %s280, %s281
    %p292 = scmp.eq.s32.totalorder %s34, 0
    %p293 = por %p291, %p292
    %p294 = scmp.ne.s32.totalorder %s280, %s281
    %p295 = scmp.eq.s32.totalorder %s35, 7
    %p296 = por %p294, %p295
    %p298 = scmp.ne.s32.totalorder %s281, %s297
    %p299 = scmp.eq.s32.totalorder %s35, 0
    %p300 = por %p298, %p299
    %s301 = sshra.s32 %s37, 7
    %s302 = sand.u32 %s37, 127
    %s303 = sadd.s32 %s301, %s36
    %s304 = smul.u32 %s303, 128
    %s305 = sshra.s32 %s37, 7
    %s306 = sand.u32 %s37, 127
    %s307 = sadd.s32 %s304, %s306
    %s308 = sld [smem:[#allocation3 + %s307]]
    %s309 = sshra.s32 %s44, 7
    %s310 = sand.u32 %s44, 127
    %s311 = sadd.s32 %s309, %s48
    %s312 = smul.u32 %s311, 128
    %s313 = sshra.s32 %s44, 7
    %s314 = sand.u32 %s44, 127
    %s315 = sadd.s32 %s312, %s314
    %s316 = sld [smem:[#allocation3 + %s315]]
    %s317 = ssub.s32 %s308, %s316
    %p318 = scmp.eq.s32.totalorder %s317, 0
    %s320 = sadd.s32 %s319, 1
    %s321 = scalar_select %p318, %s319, %s320
    %p324 = pneg %p318
    %p325 = scmp.eq.s32.totalorder %s29, 7
    %p326 = por %p324, %p325
    %p327 = scmp.ne.s32.totalorder %s319, %s322
    %p328 = scmp.eq.s32.totalorder %s29, 0
    %p329 = por %p327, %p328
    %p330 = scmp.ne.s32.totalorder %s319, %s322
    %p331 = scmp.eq.s32.totalorder %s34, 7
    %p332 = por %p330, %p331
    %p333 = scmp.ne.s32.totalorder %s322, %s323
    %p334 = scmp.eq.s32.totalorder %s34, 0
    %p335 = por %p333, %p334
    %p336 = scmp.ne.s32.totalorder %s322, %s323
    %p337 = scmp.eq.s32.totalorder %s35, 7
    %p338 = por %p336, %p337
    %p340 = scmp.ne.s32.totalorder %s323, %s339
    %p341 = scmp.eq.s32.totalorder %s35, 0
    %p342 = por %p340, %p341
    %s343 = sshra.s32 %s37, 7
    %s344 = sand.u32 %s37, 127
    %s345 = sadd.s32 %s343, %s36
    %s346 = smul.u32 %s345, 128
    %s347 = sshra.s32 %s37, 7
    %s348 = sand.u32 %s37, 127
    %s349 = sadd.s32 %s346, %s348
    %s350 = sld [smem:[#allocation3 + %s349]]
    %s351 = sshra.s32 %s44, 7
    %s352 = sand.u32 %s44, 127
    %s353 = sadd.s32 %s351, %s48
    %s354 = smul.u32 %s353, 128
    %s355 = sshra.s32 %s44, 7
    %s356 = sand.u32 %s44, 127
    %s357 = sadd.s32 %s354, %s356
    %s358 = sld [smem:[#allocation3 + %s357]]
    %s359 = ssub.s32 %s350, %s358
    %p360 = scmp.eq.s32.totalorder %s359, 0
    %s362 = sadd.s32 %s361, 1
    %s363 = scalar_select %p360, %s361, %s362
    %p366 = pneg %p360
    %p367 = scmp.eq.s32.totalorder %s29, 7
    %p368 = por %p366, %p367
    %p369 = scmp.ne.s32.totalorder %s361, %s364
    %p370 = scmp.eq.s32.totalorder %s29, 0
    %p371 = por %p369, %p370
    %p372 = scmp.ne.s32.totalorder %s361, %s364
    %p373 = scmp.eq.s32.totalorder %s34, 7
    %p374 = por %p372, %p373
    %p375 = scmp.ne.s32.totalorder %s364, %s365
    %p376 = scmp.eq.s32.totalorder %s34, 0
    %p377 = por %p375, %p376
    %p378 = scmp.ne.s32.totalorder %s364, %s365
    %p379 = scmp.eq.s32.totalorder %s35, 7
    %p380 = por %p378, %p379
    %p382 = scmp.ne.s32.totalorder %s365, %s381
    %p383 = scmp.eq.s32.totalorder %s35, 0
    %p384 = por %p382, %p383
    %s385 = sshra.s32 %s37, 7
    %s386 = sand.u32 %s37, 127
    %s387 = sadd.s32 %s385, %s36
    %s388 = smul.u32 %s387, 128
    %s389 = sshra.s32 %s37, 7
    %s390 = sand.u32 %s37, 127
    %s391 = sadd.s32 %s388, %s390
    %s392 = sld [smem:[#allocation3 + %s391]]
    %s393 = sshra.s32 %s44, 7
    %s394 = sand.u32 %s44, 127
    %s395 = sadd.s32 %s393, %s48
    %s396 = smul.u32 %s395, 128
    %s397 = sshra.s32 %s44, 7
    %s398 = sand.u32 %s44, 127
    %s399 = sadd.s32 %s396, %s398
    %s400 = sld [smem:[#allocation3 + %s399]]
    %s401 = ssub.s32 %s392, %s400
    %p402 = scmp.eq.s32.totalorder %s401, 0
    %s404 = sadd.s32 %s403, 1
    %s405 = scalar_select %p402, %s403, %s404
    %p408 = pneg %p402
    %p409 = scmp.eq.s32.totalorder %s29, 7
    %p410 = por %p408, %p409
    %p411 = scmp.ne.s32.totalorder %s403, %s406
    %p412 = scmp.eq.s32.totalorder %s29, 0
    %p413 = por %p411, %p412
    %p414 = scmp.ne.s32.totalorder %s403, %s406
    %p415 = scmp.eq.s32.totalorder %s34, 7
    %p416 = por %p414, %p415
    %p417 = scmp.ne.s32.totalorder %s406, %s407
    %p418 = scmp.eq.s32.totalorder %s34, 0
    %p419 = por %p417, %p418
    %p420 = scmp.ne.s32.totalorder %s406, %s407
    %p421 = scmp.eq.s32.totalorder %s35, 7
    %p422 = por %p420, %p421
    %p424 = scmp.ne.s32.totalorder %s407, %s423
    %p425 = scmp.eq.s32.totalorder %s35, 0
    %p426 = por %p424, %p425
    %s427 = sshra.s32 %s37, 7
    %s428 = sand.u32 %s37, 127
    %s429 = sadd.s32 %s427, %s36
    %s430 = smul.u32 %s429, 128
    %s431 = sshra.s32 %s37, 7
    %s432 = sand.u32 %s37, 127
    %s433 = sadd.s32 %s430, %s432
    %s434 = sld [smem:[#allocation3 + %s433]]
    %s435 = sshra.s32 %s44, 7
    %s436 = sand.u32 %s44, 127
    %s437 = sadd.s32 %s435, %s48
    %s438 = smul.u32 %s437, 128
    %s439 = sshra.s32 %s44, 7
    %s440 = sand.u32 %s44, 127
    %s441 = sadd.s32 %s438, %s440
    %s442 = sld [smem:[#allocation3 + %s441]]
    %s443 = ssub.s32 %s434, %s442
    %p444 = scmp.eq.s32.totalorder %s443, 0
    %s446 = sadd.s32 %s445, 1
    %s447 = scalar_select %p444, %s445, %s446
    %p450 = pneg %p444
    %p451 = scmp.eq.s32.totalorder %s29, 7
    %p452 = por %p450, %p451
    %p453 = scmp.ne.s32.totalorder %s445, %s448
    %p454 = scmp.eq.s32.totalorder %s29, 0
    %p455 = por %p453, %p454
    %p456 = scmp.ne.s32.totalorder %s445, %s448
    %p457 = scmp.eq.s32.totalorder %s34, 7
    %p458 = por %p456, %p457
    %p459 = scmp.ne.s32.totalorder %s448, %s449
    %p460 = scmp.eq.s32.totalorder %s34, 0
    %p461 = por %p459, %p460
    %p462 = scmp.ne.s32.totalorder %s448, %s449
    %p463 = scmp.eq.s32.totalorder %s35, 7
    %p464 = por %p462, %p463
    %p466 = scmp.ne.s32.totalorder %s449, %s465
    %p467 = scmp.eq.s32.totalorder %s35, 0
    %p468 = por %p466, %p467
    %s469 = sshra.s32 %s37, 7
    %s470 = sand.u32 %s37, 127
    %s471 = sadd.s32 %s469, %s36
    %s472 = smul.u32 %s471, 128
    %s473 = sshra.s32 %s37, 7
    %s474 = sand.u32 %s37, 127
    %s475 = sadd.s32 %s472, %s474
    %s476 = sld [smem:[#allocation3 + %s475]]
    %s477 = sshra.s32 %s44, 7
    %s478 = sand.u32 %s44, 127
    %s479 = sadd.s32 %s477, %s48
    %s480 = smul.u32 %s479, 128
    %s481 = sshra.s32 %s44, 7
    %s482 = sand.u32 %s44, 127
    %s483 = sadd.s32 %s480, %s482
    %s484 = sld [smem:[#allocation3 + %s483]]
    %s485 = ssub.s32 %s476, %s484
    %p486 = scmp.eq.s32.totalorder %s485, 0
    %s488 = sadd.s32 %s487, 1
    %s489 = scalar_select %p486, %s487, %s488
    %p492 = pneg %p486
    %p493 = scmp.eq.s32.totalorder %s29, 7
    %p494 = por %p492, %p493
    %p495 = scmp.ne.s32.totalorder %s487, %s490
    %p496 = scmp.eq.s32.totalorder %s29, 0
    %p497 = por %p495, %p496
    %p498 = scmp.ne.s32.totalorder %s487, %s490
    %p499 = scmp.eq.s32.totalorder %s34, 7
    %p500 = por %p498, %p499
    %p501 = scmp.ne.s32.totalorder %s490, %s491
    %p502 = scmp.eq.s32.totalorder %s34, 0
    %p503 = por %p501, %p502
    %p504 = scmp.ne.s32.totalorder %s490, %s491
    %p505 = scmp.eq.s32.totalorder %s35, 7
    %p506 = por %p504, %p505
    %p508 = scmp.ne.s32.totalorder %s491, %s507
    %p509 = scmp.eq.s32.totalorder %s35, 0
    %p510 = por %p508, %p509
    %s511 = sshra.s32 %s37, 7
    %s512 = sand.u32 %s37, 127
    %s513 = sadd.s32 %s511, %s36
    %s514 = smul.u32 %s513, 128
    %s515 = sshra.s32 %s37, 7
    %s516 = sand.u32 %s37, 127
    %s517 = sadd.s32 %s514, %s516
    %s518 = sld [smem:[#allocation3 + %s517]]
    %s519 = sshra.s32 %s44, 7
    %s520 = sand.u32 %s44, 127
    %s521 = sadd.s32 %s519, %s48
    %s522 = smul.u32 %s521, 128
    %s523 = sshra.s32 %s44, 7
    %s524 = sand.u32 %s44, 127
    %s525 = sadd.s32 %s522, %s524
    %s526 = sld [smem:[#allocation3 + %s525]]
    %s527 = ssub.s32 %s518, %s526
    %p528 = scmp.eq.s32.totalorder %s527, 0
    %s530 = sadd.s32 %s529, 1
    %s531 = scalar_select %p528, %s529, %s530
    %p534 = pneg %p528
    %p535 = scmp.eq.s32.totalorder %s29, 7
    %p536 = por %p534, %p535
    %p537 = scmp.ne.s32.totalorder %s529, %s532
    %p538 = scmp.eq.s32.totalorder %s29, 0
    %p539 = por %p537, %p538
    %p540 = scmp.ne.s32.totalorder %s529, %s532
    %p541 = scmp.eq.s32.totalorder %s34, 7
    %p542 = por %p540, %p541
    %p543 = scmp.ne.s32.totalorder %s532, %s533
    %p544 = scmp.eq.s32.totalorder %s34, 0
    %p545 = por %p543, %p544
    %p546 = scmp.ne.s32.totalorder %s532, %s533
    %p547 = scmp.eq.s32.totalorder %s35, 7
    %p548 = por %p546, %p547
    %p550 = scmp.ne.s32.totalorder %s533, %s549
    %p551 = scmp.eq.s32.totalorder %s35, 0
    %p552 = por %p550, %p551
    %s553 = sshra.s32 %s37, 7
    %s554 = sand.u32 %s37, 127
    %s555 = sadd.s32 %s553, %s36
    %s556 = smul.u32 %s555, 128
    %s557 = sshra.s32 %s37, 7
    %s558 = sand.u32 %s37, 127
    %s559 = sadd.s32 %s556, %s558
    %s560 = sld [smem:[#allocation3 + %s559]]
    %s561 = sshra.s32 %s44, 7
    %s562 = sand.u32 %s44, 127
    %s563 = sadd.s32 %s561, %s48
    %s564 = smul.u32 %s563, 128
    %s565 = sshra.s32 %s44, 7
    %s566 = sand.u32 %s44, 127
    %s567 = sadd.s32 %s564, %s566
    %s568 = sld [smem:[#allocation3 + %s567]]
    %s569 = ssub.s32 %s560, %s568
    %p570 = scmp.eq.s32.totalorder %s569, 0
    %s572 = sadd.s32 %s571, 1
    %s573 = scalar_select %p570, %s571, %s572
    %p576 = pneg %p570
    %p577 = scmp.eq.s32.totalorder %s29, 7
    %p578 = por %p576, %p577
    %p579 = scmp.ne.s32.totalorder %s571, %s574
    %p580 = scmp.eq.s32.totalorder %s29, 0
    %p581 = por %p579, %p580
    %p582 = scmp.ne.s32.totalorder %s571, %s574
    %p583 = scmp.eq.s32.totalorder %s34, 7
    %p584 = por %p582, %p583
    %p585 = scmp.ne.s32.totalorder %s574, %s575
    %p586 = scmp.eq.s32.totalorder %s34, 0
    %p587 = por %p585, %p586
    %p588 = scmp.ne.s32.totalorder %s574, %s575
    %p589 = scmp.eq.s32.totalorder %s35, 7
    %p590 = por %p588, %p589
    %p592 = scmp.ne.s32.totalorder %s575, %s591
    %p593 = scmp.eq.s32.totalorder %s35, 0
    %p594 = por %p592, %p593
    %s596 = sadd.s32 %s595, 1
    %p599 = scmp.eq.s32.totalorder %s29, 7
    %p600 = scmp.ne.s32.totalorder %s595, %s597
    %p601 = scmp.eq.s32.totalorder %s29, 0
    %p602 = por %p600, %p601
    %p603 = scmp.ne.s32.totalorder %s595, %s597
    %p604 = scmp.eq.s32.totalorder %s34, 7
    %p605 = por %p603, %p604
    %p606 = scmp.ne.s32.totalorder %s597, %s598
    %p607 = scmp.eq.s32.totalorder %s34, 0
    %p608 = por %p606, %p607
    %p609 = scmp.ne.s32.totalorder %s597, %s598
    %p610 = scmp.eq.s32.totalorder %s35, 7
    %p611 = por %p609, %p610
    %p613 = scmp.ne.s32.totalorder %s598, %s612
    %p614 = scmp.eq.s32.totalorder %s35, 0
    %p615 = por %p613, %p614
    %s617 = sadd.s32 %s616, 1
    %p620 = scmp.eq.s32.totalorder %s29, 7
    %p621 = scmp.ne.s32.totalorder %s616, %s618
    %p622 = scmp.eq.s32.totalorder %s29, 0
    %p623 = por %p621, %p622
    %p624 = scmp.ne.s32.totalorder %s616, %s618
    %p625 = scmp.eq.s32.totalorder %s34, 7
    %p626 = por %p624, %p625
    %p627 = scmp.ne.s32.totalorder %s618, %s619
    %p628 = scmp.eq.s32.totalorder %s34, 0
    %p629 = por %p627, %p628
    %p630 = scmp.ne.s32.totalorder %s618, %s619
    %p631 = scmp.eq.s32.totalorder %s35, 7
    %p632 = por %p630, %p631
    %p634 = scmp.ne.s32.totalorder %s619, %s633
    %p635 = scmp.eq.s32.totalorder %s35, 0
    %p636 = por %p634, %p635
    %s637 = ssub.s32 %s36, %s48
    %p638 = scmp.eq.s32.totalorder %s637, 0
    %s640 = sadd.s32 %s639, 1
    %s641 = scalar_select %p638, %s639, %s640
    %p644 = pneg %p638
    %p645 = scmp.eq.s32.totalorder %s29, 7
    %p646 = por %p644, %p645
    %p647 = scmp.ne.s32.totalorder %s639, %s642
    %p648 = scmp.eq.s32.totalorder %s29, 0
    %p649 = por %p647, %p648
    %p650 = scmp.ne.s32.totalorder %s639, %s642
    %p651 = scmp.eq.s32.totalorder %s34, 7
    %p652 = por %p650, %p651
    %p653 = scmp.ne.s32.totalorder %s642, %s643
    %p654 = scmp.eq.s32.totalorder %s34, 0
    %p655 = por %p653, %p654
    %p656 = scmp.ne.s32.totalorder %s642, %s643
    %p657 = scmp.eq.s32.totalorder %s35, 7
    %p658 = por %p656, %p657
    %p660 = scmp.ne.s32.totalorder %s643, %s659
    %p661 = scmp.eq.s32.totalorder %s35, 0
    %p662 = por %p660, %p661
    %p663 = scmp.le.s32.totalorder 1, %s29
    %p664 = scmp.lt.s32.totalorder %s29, 9
    %p665 = pnand %p663, %p664
    %p666 = pneg %p665
    // Predicated region
    $region9: #{encoder_mix_forward.7} parent=5 // pred_check
      _
    $region10: #{encoder_mix_forward.7} parent=5 // pred_check_branch
      %668 = sbr.rel (%p665) target = $region12
    $region11: #{encoder_mix_forward.7} parent=5 // pred_region
      %s669 = ssub.s32 %s29, 1
      // Predicated region
      $region13: #{encoder_mix_forward.7} parent=11 // pred_check
        %p670 = pneg %p62
      $region14: #{encoder_mix_forward.7} parent=11 // pred_check_branch
        %672 = sbr.rel (%p670) target = $region16
      $region15: #{encoder_mix_forward.7} parent=11 // pred_region
        _
      $region16: #{encoder_mix_forward.7} parent=11 // pred_fallthru
        _
      // Predicated region
      $region17: #{encoder_mix_forward.7} parent=11 // pred_check
        %p673 = pneg %p83
      $region18: #{encoder_mix_forward.7} parent=11 // pred_check_branch
        %675 = sbr.rel (%p673) target = $region20
      $region19: #{encoder_mix_forward.7} parent=11 // pred_region
        _
      $region20: #{encoder_mix_forward.7} parent=11 // pred_fallthru
        _
      // Predicated region
      $region21: #{encoder_mix_forward.7} parent=11 // pred_check
        %p676 = pneg %p608
      $region22: #{encoder_mix_forward.7} parent=11 // pred_check_branch
        %678 = sbr.rel (%p676) target = $region24
      $region23: #{encoder_mix_forward.7} parent=11 // pred_region
        _
      $region24: #{encoder_mix_forward.7} parent=11 // pred_fallthru
        _
      // Predicated region
      $region25: #{encoder_mix_forward.7} parent=11 // pred_check
        %p679 = pneg %p629
      $region26: #{encoder_mix_forward.7} parent=11 // pred_check_branch
        %681 = sbr.rel (%p679) target = $region28
      $region27: #{encoder_mix_forward.7} parent=11 // pred_region
        _
      $region28: #{encoder_mix_forward.7} parent=11 // pred_fallthru
        _
    $region12: #{encoder_mix_forward.7} parent=5 // pred_fallthru
      _
    %p682 = scmp.lt.s32.totalorder %s29, 8
    // Predicated region
    $region29: #{encoder_mix_forward.7} parent=5 // pred_check
      %p683 = pneg %p682
    $region30: #{encoder_mix_forward.7} parent=5 // pred_check_branch
      %685 = sbr.rel (%p683) target = $region32
    $region31: #{encoder_mix_forward.7} parent=5 // pred_region
      // Predicated region
      $region33: #{encoder_mix_forward.7} parent=31 // pred_check
        %p686 = pneg %p119
      $region34: #{encoder_mix_forward.7} parent=31 // pred_check_branch
        %688 = sbr.rel (%p686) target = $region36
      $region35: #{encoder_mix_forward.7} parent=31 // pred_region
        %s689 = sshra.s32 %s37, 7
        %s690 = sand.u32 %s37, 127
        %s691 = sadd.s32 %s689, %s36
        %s692 = smul.u32 %s691, 128
        %s693 = sshra.s32 %s37, 7
        %s694 = sand.u32 %s37, 127
        %s695 = sadd.s32 %s692, %s694
        %s696 = sld [smem:[#allocation3 + %s695]]
        %p697 = scmp.lt.s32.totalorder %s696, 5
        %s698 = scalar_select %p697, %s696, 5
        %s699 = scalar_lea.vmem %s3, %s698
        %s700 = sshra.s32 %s37, 7
        %s701 = sand.u32 %s37, 127
        %s702 = sadd.s32 %s700, %s36
        %s703 = smul.u32 %s702, 128
        %s704 = sshra.s32 %s37, 7
        %s705 = sand.u32 %s37, 127
        %s706 = sadd.s32 %s703, %s705
        %s707 = sld [smem:[#allocation3 + %s706]]
      $region36: #{encoder_mix_forward.7} parent=31 // pred_fallthru
        _
      // Predicated region
      $region37: #{encoder_mix_forward.7} parent=31 // pred_check
        %p708 = pneg %p161
      $region38: #{encoder_mix_forward.7} parent=31 // pred_check_branch
        %710 = sbr.rel (%p708) target = $region40
      $region39: #{encoder_mix_forward.7} parent=31 // pred_region
        %s711 = sshra.s32 %s37, 7
        %s712 = sand.u32 %s37, 127
        %s713 = sadd.s32 %s711, %s36
        %s714 = smul.u32 %s713, 128
        %s715 = sshra.s32 %s37, 7
        %s716 = sand.u32 %s37, 127
        %s717 = sadd.s32 %s714, %s716
        %s718 = sld [smem:[#allocation3 + %s717]]
        %p719 = scmp.lt.s32.totalorder %s718, 5
        %s720 = scalar_select %p719, %s718, 5
        %s721 = scalar_lea.vmem %s4, %s720
        %s722 = sshra.s32 %s37, 7
        %s723 = sand.u32 %s37, 127
        %s724 = sadd.s32 %s722, %s36
        %s725 = smul.u32 %s724, 128
        %s726 = sshra.s32 %s37, 7
        %s727 = sand.u32 %s37, 127
        %s728 = sadd.s32 %s725, %s727
        %s729 = sld [smem:[#allocation3 + %s728]]
      $region40: #{encoder_mix_forward.7} parent=31 // pred_fallthru
        _
      // Predicated region
      $region41: #{encoder_mix_forward.7} parent=31 // pred_check
        %p730 = pneg %p203
      $region42: #{encoder_mix_forward.7} parent=31 // pred_check_branch
        %732 = sbr.rel (%p730) target = $region44
      $region43: #{encoder_mix_forward.7} parent=31 // pred_region
        %s733 = sshra.s32 %s37, 7
        %s734 = sand.u32 %s37, 127
        %s735 = sadd.s32 %s733, %s36
        %s736 = smul.u32 %s735, 128
        %s737 = sshra.s32 %s37, 7
        %s738 = sand.u32 %s37, 127
        %s739 = sadd.s32 %s736, %s738
        %s740 = sld [smem:[#allocation3 + %s739]]
        %p741 = scmp.lt.s32.totalorder %s740, 5
        %s742 = scalar_select %p741, %s740, 5
        %s743 = smul.addr %s742, 4
        %s744 = smul.addr %s743, 4
        %s745 = scalar_lea.vmem %s5, %s744
        %s746 = sshra.s32 %s37, 7
        %s747 = sand.u32 %s37, 127
        %s748 = sadd.s32 %s746, %s36
        %s749 = smul.u32 %s748, 128
        %s750 = sshra.s32 %s37, 7
        %s751 = sand.u32 %s37, 127
        %s752 = sadd.s32 %s749, %s751
        %s753 = sld [smem:[#allocation3 + %s752]]
      $region44: #{encoder_mix_forward.7} parent=31 // pred_fallthru
        _
      // Predicated region
      $region45: #{encoder_mix_forward.7} parent=31 // pred_check
        %p754 = pneg %p245
      $region46: #{encoder_mix_forward.7} parent=31 // pred_check_branch
        %756 = sbr.rel (%p754) target = $region48
      $region47: #{encoder_mix_forward.7} parent=31 // pred_region
        %s757 = sshra.s32 %s37, 7
        %s758 = sand.u32 %s37, 127
        %s759 = sadd.s32 %s757, %s36
        %s760 = smul.u32 %s759, 128
        %s761 = sshra.s32 %s37, 7
        %s762 = sand.u32 %s37, 127
        %s763 = sadd.s32 %s760, %s762
        %s764 = sld [smem:[#allocation3 + %s763]]
        %p765 = scmp.lt.s32.totalorder %s764, 5
        %s766 = scalar_select %p765, %s764, 5
        %s767 = scalar_lea.vmem %s6, %s766
        %s768 = sshra.s32 %s37, 7
        %s769 = sand.u32 %s37, 127
        %s770 = sadd.s32 %s768, %s36
        %s771 = smul.u32 %s770, 128
        %s772 = sshra.s32 %s37, 7
        %s773 = sand.u32 %s37, 127
        %s774 = sadd.s32 %s771, %s773
        %s775 = sld [smem:[#allocation3 + %s774]]
      $region48: #{encoder_mix_forward.7} parent=31 // pred_fallthru
        _
      // Predicated region
      $region49: #{encoder_mix_forward.7} parent=31 // pred_check
        %p776 = pneg %p287
      $region50: #{encoder_mix_forward.7} parent=31 // pred_check_branch
        %778 = sbr.rel (%p776) target = $region52
      $region51: #{encoder_mix_forward.7} parent=31 // pred_region
        %s779 = sshra.s32 %s37, 7
        %s780 = sand.u32 %s37, 127
        %s781 = sadd.s32 %s779, %s36
        %s782 = smul.u32 %s781, 128
        %s783 = sshra.s32 %s37, 7
        %s784 = sand.u32 %s37, 127
        %s785 = sadd.s32 %s782, %s784
        %s786 = sld [smem:[#allocation3 + %s785]]
        %p787 = scmp.lt.s32.totalorder %s786, 5
        %s788 = scalar_select %p787, %s786, 5
        %s789 = smul.addr %s788, 4
        %s790 = smul.addr %s789, 4
        %s791 = scalar_lea.vmem %s7, %s790
        %s792 = sshra.s32 %s37, 7
        %s793 = sand.u32 %s37, 127
        %s794 = sadd.s32 %s792, %s36
        %s795 = smul.u32 %s794, 128
        %s796 = sshra.s32 %s37, 7
        %s797 = sand.u32 %s37, 127
        %s798 = sadd.s32 %s795, %s797
        %s799 = sld [smem:[#allocation3 + %s798]]
      $region52: #{encoder_mix_forward.7} parent=31 // pred_fallthru
        _
      // Predicated region
      $region53: #{encoder_mix_forward.7} parent=31 // pred_check
        %p800 = pneg %p329
      $region54: #{encoder_mix_forward.7} parent=31 // pred_check_branch
        %802 = sbr.rel (%p800) target = $region56
      $region55: #{encoder_mix_forward.7} parent=31 // pred_region
        %s803 = sshra.s32 %s37, 7
        %s804 = sand.u32 %s37, 127
        %s805 = sadd.s32 %s803, %s36
        %s806 = smul.u32 %s805, 128
        %s807 = sshra.s32 %s37, 7
        %s808 = sand.u32 %s37, 127
        %s809 = sadd.s32 %s806, %s808
        %s810 = sld [smem:[#allocation3 + %s809]]
        %p811 = scmp.lt.s32.totalorder %s810, 5
        %s812 = scalar_select %p811, %s810, 5
        %s813 = scalar_lea.vmem %s8, %s812
        %s814 = sshra.s32 %s37, 7
        %s815 = sand.u32 %s37, 127
        %s816 = sadd.s32 %s814, %s36
        %s817 = smul.u32 %s816, 128
        %s818 = sshra.s32 %s37, 7
        %s819 = sand.u32 %s37, 127
        %s820 = sadd.s32 %s817, %s819
        %s821 = sld [smem:[#allocation3 + %s820]]
      $region56: #{encoder_mix_forward.7} parent=31 // pred_fallthru
        _
      // Predicated region
      $region57: #{encoder_mix_forward.7} parent=31 // pred_check
        %p822 = pneg %p371
      $region58: #{encoder_mix_forward.7} parent=31 // pred_check_branch
        %824 = sbr.rel (%p822) target = $region60
      $region59: #{encoder_mix_forward.7} parent=31 // pred_region
        %s825 = sshra.s32 %s37, 7
        %s826 = sand.u32 %s37, 127
        %s827 = sadd.s32 %s825, %s36
        %s828 = smul.u32 %s827, 128
        %s829 = sshra.s32 %s37, 7
        %s830 = sand.u32 %s37, 127
        %s831 = sadd.s32 %s828, %s830
        %s832 = sld [smem:[#allocation3 + %s831]]
        %p833 = scmp.lt.s32.totalorder %s832, 5
        %s834 = scalar_select %p833, %s832, 5
        %s835 = scalar_lea.vmem %s9, %s834
        %s836 = sshra.s32 %s37, 7
        %s837 = sand.u32 %s37, 127
        %s838 = sadd.s32 %s836, %s36
        %s839 = smul.u32 %s838, 128
        %s840 = sshra.s32 %s37, 7
        %s841 = sand.u32 %s37, 127
        %s842 = sadd.s32 %s839, %s841
        %s843 = sld [smem:[#allocation3 + %s842]]
      $region60: #{encoder_mix_forward.7} parent=31 // pred_fallthru
        _
      // Predicated region
      $region61: #{encoder_mix_forward.7} parent=31 // pred_check
        %p844 = pneg %p413
      $region62: #{encoder_mix_forward.7} parent=31 // pred_check_branch
        %846 = sbr.rel (%p844) target = $region64
      $region63: #{encoder_mix_forward.7} parent=31 // pred_region
        %s847 = sshra.s32 %s37, 7
        %s848 = sand.u32 %s37, 127
        %s849 = sadd.s32 %s847, %s36
        %s850 = smul.u32 %s849, 128
        %s851 = sshra.s32 %s37, 7
        %s852 = sand.u32 %s37, 127
        %s853 = sadd.s32 %s850, %s852
        %s854 = sld [smem:[#allocation3 + %s853]]
        %p855 = scmp.lt.s32.totalorder %s854, 5
        %s856 = scalar_select %p855, %s854, 5
        %s857 = scalar_lea.vmem %s10, %s856
        %s858 = sshra.s32 %s37, 7
        %s859 = sand.u32 %s37, 127
        %s860 = sadd.s32 %s858, %s36
        %s861 = smul.u32 %s860, 128
        %s862 = sshra.s32 %s37, 7
        %s863 = sand.u32 %s37, 127
        %s864 = sadd.s32 %s861, %s863
        %s865 = sld [smem:[#allocation3 + %s864]]
      $region64: #{encoder_mix_forward.7} parent=31 // pred_fallthru
        _
      // Predicated region
      $region65: #{encoder_mix_forward.7} parent=31 // pred_check
        %p866 = pneg %p455
      $region66: #{encoder_mix_forward.7} parent=31 // pred_check_branch
        %868 = sbr.rel (%p866) target = $region68
      $region67: #{encoder_mix_forward.7} parent=31 // pred_region
        %s869 = sshra.s32 %s37, 7
        %s870 = sand.u32 %s37, 127
        %s871 = sadd.s32 %s869, %s36
        %s872 = smul.u32 %s871, 128
        %s873 = sshra.s32 %s37, 7
        %s874 = sand.u32 %s37, 127
        %s875 = sadd.s32 %s872, %s874
        %s876 = sld [smem:[#allocation3 + %s875]]
        %p877 = scmp.lt.s32.totalorder %s876, 5
        %s878 = scalar_select %p877, %s876, 5
        %s879 = smul.addr %s878, 4
        %s880 = smul.addr %s879, 4
        %s881 = scalar_lea.vmem %s11, %s880
        %s882 = sshra.s32 %s37, 7
        %s883 = sand.u32 %s37, 127
        %s884 = sadd.s32 %s882, %s36
        %s885 = smul.u32 %s884, 128
        %s886 = sshra.s32 %s37, 7
        %s887 = sand.u32 %s37, 127
        %s888 = sadd.s32 %s885, %s887
        %s889 = sld [smem:[#allocation3 + %s888]]
      $region68: #{encoder_mix_forward.7} parent=31 // pred_fallthru
        _
      // Predicated region
      $region69: #{encoder_mix_forward.7} parent=31 // pred_check
        %p890 = pneg %p497
      $region70: #{encoder_mix_forward.7} parent=31 // pred_check_branch
        %892 = sbr.rel (%p890) target = $region72
      $region71: #{encoder_mix_forward.7} parent=31 // pred_region
        %s893 = sshra.s32 %s37, 7
        %s894 = sand.u32 %s37, 127
        %s895 = sadd.s32 %s893, %s36
        %s896 = smul.u32 %s895, 128
        %s897 = sshra.s32 %s37, 7
        %s898 = sand.u32 %s37, 127
        %s899 = sadd.s32 %s896, %s898
        %s900 = sld [smem:[#allocation3 + %s899]]
        %p901 = scmp.lt.s32.totalorder %s900, 5
        %s902 = scalar_select %p901, %s900, 5
        %s903 = scalar_lea.vmem %s12, %s902
        %s904 = sshra.s32 %s37, 7
        %s905 = sand.u32 %s37, 127
        %s906 = sadd.s32 %s904, %s36
        %s907 = smul.u32 %s906, 128
        %s908 = sshra.s32 %s37, 7
        %s909 = sand.u32 %s37, 127
        %s910 = sadd.s32 %s907, %s909
        %s911 = sld [smem:[#allocation3 + %s910]]
      $region72: #{encoder_mix_forward.7} parent=31 // pred_fallthru
        _
      // Predicated region
      $region73: #{encoder_mix_forward.7} parent=31 // pred_check
        %p912 = pneg %p539
      $region74: #{encoder_mix_forward.7} parent=31 // pred_check_branch
        %914 = sbr.rel (%p912) target = $region76
      $region75: #{encoder_mix_forward.7} parent=31 // pred_region
        %s915 = sshra.s32 %s37, 7
        %s916 = sand.u32 %s37, 127
        %s917 = sadd.s32 %s915, %s36
        %s918 = smul.u32 %s917, 128
        %s919 = sshra.s32 %s37, 7
        %s920 = sand.u32 %s37, 127
        %s921 = sadd.s32 %s918, %s920
        %s922 = sld [smem:[#allocation3 + %s921]]
        %p923 = scmp.lt.s32.totalorder %s922, 5
        %s924 = scalar_select %p923, %s922, 5
        %s925 = smul.addr %s924, 8
        %s926 = smul.addr %s925, 4
        %s927 = scalar_lea.vmem %s13, %s926
        %s928 = sshra.s32 %s37, 7
        %s929 = sand.u32 %s37, 127
        %s930 = sadd.s32 %s928, %s36
        %s931 = smul.u32 %s930, 128
        %s932 = sshra.s32 %s37, 7
        %s933 = sand.u32 %s37, 127
        %s934 = sadd.s32 %s931, %s933
        %s935 = sld [smem:[#allocation3 + %s934]]
      $region76: #{encoder_mix_forward.7} parent=31 // pred_fallthru
        _
      // Predicated region
      $region77: #{encoder_mix_forward.7} parent=31 // pred_check
        %p936 = pneg %p581
      $region78: #{encoder_mix_forward.7} parent=31 // pred_check_branch
        %938 = sbr.rel (%p936) target = $region80
      $region79: #{encoder_mix_forward.7} parent=31 // pred_region
        %s939 = sshra.s32 %s37, 7
        %s940 = sand.u32 %s37, 127
        %s941 = sadd.s32 %s939, %s36
        %s942 = smul.u32 %s941, 128
        %s943 = sshra.s32 %s37, 7
        %s944 = sand.u32 %s37, 127
        %s945 = sadd.s32 %s942, %s944
        %s946 = sld [smem:[#allocation3 + %s945]]
        %p947 = scmp.lt.s32.totalorder %s946, 5
        %s948 = scalar_select %p947, %s946, 5
        %s949 = scalar_lea.vmem %s14, %s948
        %s950 = sshra.s32 %s37, 7
        %s951 = sand.u32 %s37, 127
        %s952 = sadd.s32 %s950, %s36
        %s953 = smul.u32 %s952, 128
        %s954 = sshra.s32 %s37, 7
        %s955 = sand.u32 %s37, 127
        %s956 = sadd.s32 %s953, %s955
        %s957 = sld [smem:[#allocation3 + %s956]]
      $region80: #{encoder_mix_forward.7} parent=31 // pred_fallthru
        _
    $region32: #{encoder_mix_forward.7} parent=5 // pred_fallthru
      _
    %p958 = scmp.le.s32.totalorder 1, %s29
    %p959 = scmp.lt.s32.totalorder %s29, 9
    %p960 = pnand %p958, %p959
    %p961 = pneg %p960
    // Predicated region
    $region81: #{encoder_mix_forward.7} parent=5 // pred_check
      _
    $region82: #{encoder_mix_forward.7} parent=5 // pred_check_branch
      %963 = sbr.rel (%p960) target = $region84
    $region83: #{encoder_mix_forward.7} parent=5 // pred_region
      %s964 = ssub.s32 %s29, 1
      %p965 = pneg %p62
      %p966 = pneg %p59
      %p967 = pneg %p83
      %p968 = pneg %p80
      %s969 = sshra.s32 %s39, 7
      %s970 = sand.u32 %s39, 127
      %s971 = sadd.s32 %s969, %s38
      %s972 = smul.u32 %s971, 128
      %s973 = sshra.s32 %s39, 7
      %s974 = sand.u32 %s39, 127
      %s975 = sadd.s32 %s972, %s974
      %s976 = sld [smem:[#allocation3 + %s975]]
      %p977 = scmp.lt.s32.totalorder %s976, 5
      %s978 = scalar_select %p977, %s976, 5
      %s979 = scalar_lea.vmem %s3, %s978
      %p980 = pneg %p125
      %p981 = pneg %p122
      %s982 = sshra.s32 %s39, 7
      %s983 = sand.u32 %s39, 127
      %s984 = sadd.s32 %s982, %s38
      %s985 = smul.u32 %s984, 128
      %s986 = sshra.s32 %s39, 7
      %s987 = sand.u32 %s39, 127
      %s988 = sadd.s32 %s985, %s987
      %s989 = sld [smem:[#allocation3 + %s988]]
      %p990 = scmp.lt.s32.totalorder %s989, 5
      %s991 = scalar_select %p990, %s989, 5
      %s992 = scalar_lea.vmem %s4, %s991
      %p993 = pneg %p167
      %p994 = pneg %p164
      %s995 = sshra.s32 %s39, 7
      %s996 = sand.u32 %s39, 127
      %s997 = sadd.s32 %s995, %s38
      %s998 = smul.u32 %s997, 128
      %s999 = sshra.s32 %s39, 7
      %s1000 = sand.u32 %s39, 127
      %s1001 = sadd.s32 %s998, %s1000
      %s1002 = sld [smem:[#allocation3 + %s1001]]
      %p1003 = scmp.lt.s32.totalorder %s1002, 5
      %s1004 = scalar_select %p1003, %s1002, 5
      %s1005 = smul.addr %s1004, 4
      %s1006 = smul.addr %s1005, 4
      %s1007 = scalar_lea.vmem %s5, %s1006
      %p1008 = pneg %p209
      %p1009 = pneg %p206
      %s1010 = sshra.s32 %s39, 7
      %s1011 = sand.u32 %s39, 127
      %s1012 = sadd.s32 %s1010, %s38
      %s1013 = smul.u32 %s1012, 128
      %s1014 = sshra.s32 %s39, 7
      %s1015 = sand.u32 %s39, 127
      %s1016 = sadd.s32 %s1013, %s1015
      %s1017 = sld [smem:[#allocation3 + %s1016]]
      %p1018 = scmp.lt.s32.totalorder %s1017, 5
      %s1019 = scalar_select %p1018, %s1017, 5
      %s1020 = scalar_lea.vmem %s6, %s1019
      %p1021 = pneg %p251
      %p1022 = pneg %p248
      %s1023 = sshra.s32 %s39, 7
      %s1024 = sand.u32 %s39, 127
      %s1025 = sadd.s32 %s1023, %s38
      %s1026 = smul.u32 %s1025, 128
      %s1027 = sshra.s32 %s39, 7
      %s1028 = sand.u32 %s39, 127
      %s1029 = sadd.s32 %s1026, %s1028
      %s1030 = sld [smem:[#allocation3 + %s1029]]
      %p1031 = scmp.lt.s32.totalorder %s1030, 5
      %s1032 = scalar_select %p1031, %s1030, 5
      %s1033 = smul.addr %s1032, 4
      %s1034 = smul.addr %s1033, 4
      %s1035 = scalar_lea.vmem %s7, %s1034
      %p1036 = pneg %p293
      %p1037 = pneg %p290
      %s1038 = sshra.s32 %s39, 7
      %s1039 = sand.u32 %s39, 127
      %s1040 = sadd.s32 %s1038, %s38
      %s1041 = smul.u32 %s1040, 128
      %s1042 = sshra.s32 %s39, 7
      %s1043 = sand.u32 %s39, 127
      %s1044 = sadd.s32 %s1041, %s1043
      %s1045 = sld [smem:[#allocation3 + %s1044]]
      %p1046 = scmp.lt.s32.totalorder %s1045, 5
      %s1047 = scalar_select %p1046, %s1045, 5
      %s1048 = scalar_lea.vmem %s8, %s1047
      %p1049 = pneg %p335
      %p1050 = pneg %p332
      %s1051 = sshra.s32 %s39, 7
      %s1052 = sand.u32 %s39, 127
      %s1053 = sadd.s32 %s1051, %s38
      %s1054 = smul.u32 %s1053, 128
      %s1055 = sshra.s32 %s39, 7
      %s1056 = sand.u32 %s39, 127
      %s1057 = sadd.s32 %s1054, %s1056
      %s1058 = sld [smem:[#allocation3 + %s1057]]
      %p1059 = scmp.lt.s32.totalorder %s1058, 5
      %s1060 = scalar_select %p1059, %s1058, 5
      %s1061 = scalar_lea.vmem %s9, %s1060
      %p1062 = pneg %p377
      %p1063 = pneg %p374
      %s1064 = sshra.s32 %s39, 7
      %s1065 = sand.u32 %s39, 127
      %s1066 = sadd.s32 %s1064, %s38
      %s1067 = smul.u32 %s1066, 128
      %s1068 = sshra.s32 %s39, 7
      %s1069 = sand.u32 %s39, 127
      %s1070 = sadd.s32 %s1067, %s1069
      %s1071 = sld [smem:[#allocation3 + %s1070]]
      %p1072 = scmp.lt.s32.totalorder %s1071, 5
      %s1073 = scalar_select %p1072, %s1071, 5
      %s1074 = scalar_lea.vmem %s10, %s1073
      %p1075 = pneg %p419
      %p1076 = pneg %p416
      %s1077 = sshra.s32 %s39, 7
      %s1078 = sand.u32 %s39, 127
      %s1079 = sadd.s32 %s1077, %s38
      %s1080 = smul.u32 %s1079, 128
      %s1081 = sshra.s32 %s39, 7
      %s1082 = sand.u32 %s39, 127
      %s1083 = sadd.s32 %s1080, %s1082
      %s1084 = sld [smem:[#allocation3 + %s1083]]
      %p1085 = scmp.lt.s32.totalorder %s1084, 5
      %s1086 = scalar_select %p1085, %s1084, 5
      %s1087 = smul.addr %s1086, 4
      %s1088 = smul.addr %s1087, 4
      %s1089 = scalar_lea.vmem %s11, %s1088
      %p1090 = pneg %p461
      %p1091 = pneg %p458
      %s1092 = sshra.s32 %s39, 7
      %s1093 = sand.u32 %s39, 127
      %s1094 = sadd.s32 %s1092, %s38
      %s1095 = smul.u32 %s1094, 128
      %s1096 = sshra.s32 %s39, 7
      %s1097 = sand.u32 %s39, 127
      %s1098 = sadd.s32 %s1095, %s1097
      %s1099 = sld [smem:[#allocation3 + %s1098]]
      %p1100 = scmp.lt.s32.totalorder %s1099, 5
      %s1101 = scalar_select %p1100, %s1099, 5
      %s1102 = scalar_lea.vmem %s12, %s1101
      %p1103 = pneg %p503
      %p1104 = pneg %p500
      %s1105 = sshra.s32 %s39, 7
      %s1106 = sand.u32 %s39, 127
      %s1107 = sadd.s32 %s1105, %s38
      %s1108 = smul.u32 %s1107, 128
      %s1109 = sshra.s32 %s39, 7
      %s1110 = sand.u32 %s39, 127
      %s1111 = sadd.s32 %s1108, %s1110
      %s1112 = sld [smem:[#allocation3 + %s1111]]
      %p1113 = scmp.lt.s32.totalorder %s1112, 5
      %s1114 = scalar_select %p1113, %s1112, 5
      %s1115 = smul.addr %s1114, 8
      %s1116 = smul.addr %s1115, 4
      %s1117 = scalar_lea.vmem %s13, %s1116
      %p1118 = pneg %p545
      %p1119 = pneg %p542
      %s1120 = sshra.s32 %s39, 7
      %s1121 = sand.u32 %s39, 127
      %s1122 = sadd.s32 %s1120, %s38
      %s1123 = smul.u32 %s1122, 128
      %s1124 = sshra.s32 %s39, 7
      %s1125 = sand.u32 %s39, 127
      %s1126 = sadd.s32 %s1123, %s1125
      %s1127 = sld [smem:[#allocation3 + %s1126]]
      %p1128 = scmp.lt.s32.totalorder %s1127, 5
      %s1129 = scalar_select %p1128, %s1127, 5
      %s1130 = scalar_lea.vmem %s14, %s1129
      %p1131 = pneg %p587
      %p1132 = pneg %p584
      %p1133 = pneg %p608
      %p1134 = pneg %p605
      %p1135 = pneg %p629
      %p1136 = pneg %p626
      %p1137 = pneg %p655
      %p1138 = pneg %p652
      %p1139 = scmp.lt.s32.totalorder %s38, 1
      %s1140 = scalar_select %p1139, %s38, 1
      %s1141 = smul.addr %s1140, 2
      %s1142 = smul.addr %s1141, 8
      %s1143 = scalar_lea.vmem %s17, %s1142
      %s1144 = sshra.s32 %s39, 7
      %s1145 = sand.u32 %s39, 127
      %s1146 = sadd.s32 %s1144, %s38
      %s1147 = smul.u32 %s1146, 128
      %s1148 = sshra.s32 %s39, 7
      %s1149 = sand.u32 %s39, 127
      %s1150 = sadd.s32 %s1147, %s1149
      %s1151 = sld [smem:[#allocation3 + %s1150]]
      %p1152 = scmp.lt.s32.totalorder %s1151, 5
      %s1153 = scalar_select %p1152, %s1151, 5
      %s1154 = scalar_lea.vmem %s3, %s1153
      %s1155 = sshra.s32 %s39, 7
      %s1156 = sand.u32 %s39, 127
      %s1157 = sadd.s32 %s1155, %s38
      %s1158 = smul.u32 %s1157, 128
      %s1159 = sshra.s32 %s39, 7
      %s1160 = sand.u32 %s39, 127
      %s1161 = sadd.s32 %s1158, %s1160
      %s1162 = sld [smem:[#allocation3 + %s1161]]
      %s1163 = sshra.s32 %s39, 7
      %s1164 = sand.u32 %s39, 127
      %s1165 = sadd.s32 %s1163, %s38
      %s1166 = smul.u32 %s1165, 128
      %s1167 = sshra.s32 %s39, 7
      %s1168 = sand.u32 %s39, 127
      %s1169 = sadd.s32 %s1166, %s1168
      %s1170 = sld [smem:[#allocation3 + %s1169]]
      %p1171 = scmp.lt.s32.totalorder %s1170, 5
      %s1172 = scalar_select %p1171, %s1170, 5
      %s1173 = scalar_lea.vmem %s4, %s1172
      %s1174 = sshra.s32 %s39, 7
      %s1175 = sand.u32 %s39, 127
      %s1176 = sadd.s32 %s1174, %s38
      %s1177 = smul.u32 %s1176, 128
      %s1178 = sshra.s32 %s39, 7
      %s1179 = sand.u32 %s39, 127
      %s1180 = sadd.s32 %s1177, %s1179
      %s1181 = sld [smem:[#allocation3 + %s1180]]
      %s1182 = sshra.s32 %s39, 7
      %s1183 = sand.u32 %s39, 127
      %s1184 = sadd.s32 %s1182, %s38
      %s1185 = smul.u32 %s1184, 128
      %s1186 = sshra.s32 %s39, 7
      %s1187 = sand.u32 %s39, 127
      %s1188 = sadd.s32 %s1185, %s1187
      %s1189 = sld [smem:[#allocation3 + %s1188]]
      %p1190 = scmp.lt.s32.totalorder %s1189, 5
      %s1191 = scalar_select %p1190, %s1189, 5
      %s1192 = smul.addr %s1191, 4
      %s1193 = smul.addr %s1192, 4
      %s1194 = scalar_lea.vmem %s5, %s1193
      %s1195 = sshra.s32 %s39, 7
      %s1196 = sand.u32 %s39, 127
      %s1197 = sadd.s32 %s1195, %s38
      %s1198 = smul.u32 %s1197, 128
      %s1199 = sshra.s32 %s39, 7
      %s1200 = sand.u32 %s39, 127
      %s1201 = sadd.s32 %s1198, %s1200
      %s1202 = sld [smem:[#allocation3 + %s1201]]
      %s1203 = sshra.s32 %s39, 7
      %s1204 = sand.u32 %s39, 127
      %s1205 = sadd.s32 %s1203, %s38
      %s1206 = smul.u32 %s1205, 128
      %s1207 = sshra.s32 %s39, 7
      %s1208 = sand.u32 %s39, 127
      %s1209 = sadd.s32 %s1206, %s1208
      %s1210 = sld [smem:[#allocation3 + %s1209]]
      %p1211 = scmp.lt.s32.totalorder %s1210, 5
      %s1212 = scalar_select %p1211, %s1210, 5
      %s1213 = scalar_lea.vmem %s6, %s1212
      %s1214 = sshra.s32 %s39, 7
      %s1215 = sand.u32 %s39, 127
      %s1216 = sadd.s32 %s1214, %s38
      %s1217 = smul.u32 %s1216, 128
      %s1218 = sshra.s32 %s39, 7
      %s1219 = sand.u32 %s39, 127
      %s1220 = sadd.s32 %s1217, %s1219
      %s1221 = sld [smem:[#allocation3 + %s1220]]
      %s1222 = sshra.s32 %s39, 7
      %s1223 = sand.u32 %s39, 127
      %s1224 = sadd.s32 %s1222, %s38
      %s1225 = smul.u32 %s1224, 128
      %s1226 = sshra.s32 %s39, 7
      %s1227 = sand.u32 %s39, 127
      %s1228 = sadd.s32 %s1225, %s1227
      %s1229 = sld [smem:[#allocation3 + %s1228]]
      %p1230 = scmp.lt.s32.totalorder %s1229, 5
      %s1231 = scalar_select %p1230, %s1229, 5
      %s1232 = smul.addr %s1231, 4
      %s1233 = smul.addr %s1232, 4
      %s1234 = scalar_lea.vmem %s7, %s1233
      %s1235 = sshra.s32 %s39, 7
      %s1236 = sand.u32 %s39, 127
      %s1237 = sadd.s32 %s1235, %s38
      %s1238 = smul.u32 %s1237, 128
      %s1239 = sshra.s32 %s39, 7
      %s1240 = sand.u32 %s39, 127
      %s1241 = sadd.s32 %s1238, %s1240
      %s1242 = sld [smem:[#allocation3 + %s1241]]
      %s1243 = sshra.s32 %s39, 7
      %s1244 = sand.u32 %s39, 127
      %s1245 = sadd.s32 %s1243, %s38
      %s1246 = smul.u32 %s1245, 128
      %s1247 = sshra.s32 %s39, 7
      %s1248 = sand.u32 %s39, 127
      %s1249 = sadd.s32 %s1246, %s1248
      %s1250 = sld [smem:[#allocation3 + %s1249]]
      %p1251 = scmp.lt.s32.totalorder %s1250, 5
      %s1252 = scalar_select %p1251, %s1250, 5
      %s1253 = scalar_lea.vmem %s8, %s1252
      %s1254 = sshra.s32 %s39, 7
      %s1255 = sand.u32 %s39, 127
      %s1256 = sadd.s32 %s1254, %s38
      %s1257 = smul.u32 %s1256, 128
      %s1258 = sshra.s32 %s39, 7
      %s1259 = sand.u32 %s39, 127
      %s1260 = sadd.s32 %s1257, %s1259
      %s1261 = sld [smem:[#allocation3 + %s1260]]
      %s1262 = sshra.s32 %s39, 7
      %s1263 = sand.u32 %s39, 127
      %s1264 = sadd.s32 %s1262, %s38
      %s1265 = smul.u32 %s1264, 128
      %s1266 = sshra.s32 %s39, 7
      %s1267 = sand.u32 %s39, 127
      %s1268 = sadd.s32 %s1265, %s1267
      %s1269 = sld [smem:[#allocation3 + %s1268]]
      %p1270 = scmp.lt.s32.totalorder %s1269, 5
      %s1271 = scalar_select %p1270, %s1269, 5
      %s1272 = scalar_lea.vmem %s9, %s1271
      %s1273 = sshra.s32 %s39, 7
      %s1274 = sand.u32 %s39, 127
      %s1275 = sadd.s32 %s1273, %s38
      %s1276 = smul.u32 %s1275, 128
      %s1277 = sshra.s32 %s39, 7
      %s1278 = sand.u32 %s39, 127
      %s1279 = sadd.s32 %s1276, %s1278
      %s1280 = sld [smem:[#allocation3 + %s1279]]
      %s1281 = sshra.s32 %s39, 7
      %s1282 = sand.u32 %s39, 127
      %s1283 = sadd.s32 %s1281, %s38
      %s1284 = smul.u32 %s1283, 128
      %s1285 = sshra.s32 %s39, 7
      %s1286 = sand.u32 %s39, 127
      %s1287 = sadd.s32 %s1284, %s1286
      %s1288 = sld [smem:[#allocation3 + %s1287]]
      %p1289 = scmp.lt.s32.totalorder %s1288, 5
      %s1290 = scalar_select %p1289, %s1288, 5
      %s1291 = scalar_lea.vmem %s10, %s1290
      %s1292 = sshra.s32 %s39, 7
      %s1293 = sand.u32 %s39, 127
      %s1294 = sadd.s32 %s1292, %s38
      %s1295 = smul.u32 %s1294, 128
      %s1296 = sshra.s32 %s39, 7
      %s1297 = sand.u32 %s39, 127
      %s1298 = sadd.s32 %s1295, %s1297
      %s1299 = sld [smem:[#allocation3 + %s1298]]
      %s1300 = sshra.s32 %s39, 7
      %s1301 = sand.u32 %s39, 127
      %s1302 = sadd.s32 %s1300, %s38
      %s1303 = smul.u32 %s1302, 128
      %s1304 = sshra.s32 %s39, 7
      %s1305 = sand.u32 %s39, 127
      %s1306 = sadd.s32 %s1303, %s1305
      %s1307 = sld [smem:[#allocation3 + %s1306]]
      %p1308 = scmp.lt.s32.totalorder %s1307, 5
      %s1309 = scalar_select %p1308, %s1307, 5
      %s1310 = smul.addr %s1309, 4
      %s1311 = smul.addr %s1310, 4
      %s1312 = scalar_lea.vmem %s11, %s1311
      %s1313 = sshra.s32 %s39, 7
      %s1314 = sand.u32 %s39, 127
      %s1315 = sadd.s32 %s1313, %s38
      %s1316 = smul.u32 %s1315, 128
      %s1317 = sshra.s32 %s39, 7
      %s1318 = sand.u32 %s39, 127
      %s1319 = sadd.s32 %s1316, %s1318
      %s1320 = sld [smem:[#allocation3 + %s1319]]
      %s1321 = sshra.s32 %s39, 7
      %s1322 = sand.u32 %s39, 127
      %s1323 = sadd.s32 %s1321, %s38
      %s1324 = smul.u32 %s1323, 128
      %s1325 = sshra.s32 %s39, 7
      %s1326 = sand.u32 %s39, 127
      %s1327 = sadd.s32 %s1324, %s1326
      %s1328 = sld [smem:[#allocation3 + %s1327]]
      %p1329 = scmp.lt.s32.totalorder %s1328, 5
      %s1330 = scalar_select %p1329, %s1328, 5
      %s1331 = scalar_lea.vmem %s12, %s1330
      %s1332 = sshra.s32 %s39, 7
      %s1333 = sand.u32 %s39, 127
      %s1334 = sadd.s32 %s1332, %s38
      %s1335 = smul.u32 %s1334, 128
      %s1336 = sshra.s32 %s39, 7
      %s1337 = sand.u32 %s39, 127
      %s1338 = sadd.s32 %s1335, %s1337
      %s1339 = sld [smem:[#allocation3 + %s1338]]
      %s1340 = sshra.s32 %s39, 7
      %s1341 = sand.u32 %s39, 127
      %s1342 = sadd.s32 %s1340, %s38
      %s1343 = smul.u32 %s1342, 128
      %s1344 = sshra.s32 %s39, 7
      %s1345 = sand.u32 %s39, 127
      %s1346 = sadd.s32 %s1343, %s1345
      %s1347 = sld [smem:[#allocation3 + %s1346]]
      %p1348 = scmp.lt.s32.totalorder %s1347, 5
      %s1349 = scalar_select %p1348, %s1347, 5
      %s1350 = smul.addr %s1349, 8
      %s1351 = smul.addr %s1350, 4
      %s1352 = scalar_lea.vmem %s13, %s1351
      %s1353 = sshra.s32 %s39, 7
      %s1354 = sand.u32 %s39, 127
      %s1355 = sadd.s32 %s1353, %s38
      %s1356 = smul.u32 %s1355, 128
      %s1357 = sshra.s32 %s39, 7
      %s1358 = sand.u32 %s39, 127
      %s1359 = sadd.s32 %s1356, %s1358
      %s1360 = sld [smem:[#allocation3 + %s1359]]
      %s1361 = sshra.s32 %s39, 7
      %s1362 = sand.u32 %s39, 127
      %s1363 = sadd.s32 %s1361, %s38
      %s1364 = smul.u32 %s1363, 128
      %s1365 = sshra.s32 %s39, 7
      %s1366 = sand.u32 %s39, 127
      %s1367 = sadd.s32 %s1364, %s1366
      %s1368 = sld [smem:[#allocation3 + %s1367]]
      %p1369 = scmp.lt.s32.totalorder %s1368, 5
      %s1370 = scalar_select %p1369, %s1368, 5
      %s1371 = scalar_lea.vmem %s14, %s1370
      %s1372 = sshra.s32 %s39, 7
      %s1373 = sand.u32 %s39, 127
      %s1374 = sadd.s32 %s1372, %s38
      %s1375 = smul.u32 %s1374, 128
      %s1376 = sshra.s32 %s39, 7
      %s1377 = sand.u32 %s39, 127
      %s1378 = sadd.s32 %s1375, %s1377
      %s1379 = sld [smem:[#allocation3 + %s1378]]
      %p1380 = scmp.lt.s32.totalorder %s38, 1
      %s1381 = scalar_select %p1380, %s38, 1
      %s1382 = smul.addr %s1381, 2
      %s1383 = smul.addr %s1382, 8
      %s1384 = scalar_lea.vmem %s17, %s1383
      %p1386 = scmp.eq.s32.totalorder %s39, 0
      // Predicated region
      $region85: #{encoder_mix_forward.7} parent=83 // pred_check
        %p1387 = pneg %p1386
      $region86: #{encoder_mix_forward.7} parent=83 // pred_check_branch
        %1389 = sbr.rel (%p1387) target = $region88
      $region87: #{encoder_mix_forward.7} parent=83 // pred_region
        %v1390 = vld [vmem:[%s1] sm:$0xff]
        %v1391 = vld [vmem:[%s1 + $0x8] sm:$0xff]
        %vm1392 = vcmask 261120
        %1393 = vst.msk [vmem:[%s1384] sm:$0xff] %vm1392, %v1390
        %1394 = vst.msk [vmem:[%s1384 + $0x8] sm:$0xff] %vm1392, %v1391
      $region88: #{encoder_mix_forward.7} parent=83 // pred_fallthru
        _
      %v1395 = vld [vmem:[%s1384] sm:$0xff]
      %v1396 = vld [vmem:[%s2] sm:$0xff]
      %v1397 = vsub.f32 %v1396, 1.0
      %v1398 = vmul.f32 %v1397, 1e+30
      %v1399 = vld [vmem:[%s1154] sm:$0x1]
      %v1400 = vld [vmem:[%s1173] sm:$0x1]
      %vm1401 = vcmask 261120
      %v1402 = vsel %vm1401, %v1395, 0.0
      %1403 = vadd.xlane.f32.xlu0 %v1402
      %v1404 = vpop.xlane.xlu0 %1403
      %v1405 = vrcp.pop 32.0
      %v1406 = vmul.f32 %v1404, %v1405
      %v1407 = vsub.f32 %v1395, %v1406
      %v1408 = vmul.f32 %v1407, %v1407
      %v1409 = vsel %vm1401, %v1408, 0.0
      %1410 = vadd.xlane.f32.xlu0 %v1409
      %v1411 = vpop.xlane.xlu0 %1410
      %v1412 = vmul.f32 %v1411, %v1405
      %v1413 = vadd.f32 %v1412, 1e-12
      %v1414 = vrsqrt.pop %v1413
      %v1415 = vmul.f32 %v1407, %v1414
      %v1417 = vlaneseq
      %v1418 = vshrl.u32 %v1417, 7
      %v1419 = vsub.s32 0, %v1418
      %v1420 = vrot.slane %v1399, %v1419
      %v1422 = vmul.f32 %v1415, %v1420
      %v1424 = vlaneseq
      %v1425 = vshrl.u32 %v1424, 7
      %v1426 = vsub.s32 0, %v1425
      %v1427 = vrot.slane %v1400, %v1426
      %v1429 = vadd.f32 %v1422, %v1427
      %v1430 = vpack.c.bf16 %v1429, %v1429
      %v1431 = vld [vmem:[%s1194] sm:$0xf]
      %v1432 = vld [vmem:[%s1194 + $0x4] sm:$0xf]
      %v1433 = vld [vmem:[%s1194 + $0x8] sm:$0xf]
      %v1434 = vld [vmem:[%s1194 + $0xc] sm:$0xf]
      %v1435 = vld [vmem:[%s1213] sm:$0x1]
      %v1437 = vlaneseq
      %v1438 = vshrl.u32 %v1437, 7
      %v1439 = vsub.s32 0, %v1438
      %v1440 = vrot.slane %v1435, %v1439
      %v1446 = vunpack.c.l.b16 %v1431
      %v1447 = vunpack.c.l.b16 %v1432
      %v1448 = vunpack.c.l.b16 %v1433
      %v1449 = vunpack.c.l.b16 %v1434
      %v1450 = vpack.c.b16 %v1447, %v1446
      %v1451 = vpack.c.b16 %v1449, %v1448
      %v1455 = vsel %vm1401, %v1430, 0
      %1457 = vmatprep.subr.bf16.mxu0 0
      %1458 = vmatpush1.bf16.msra.mxu0 %v1450
      %1459 = vmatprep.subr.bf16.mxu0 0
      %1460 = vmatpush1.bf16.msra.mxu0 %v1451
      %1461 = vmatprep.subr.bf16.mxu0 0
      %1462 = vmatpush1.bf16.msra.mxu0 0
      %1463 = vmatprep.subr.bf16.mxu0 0
      %1464 = vmatpush1.bf16.msra.mxu0 0
      %1465 = vmatprep.subr.bf16.mxu0 0
      %1466 = vmatpush1.bf16.msra.mxu0 0
      %1467 = vmatprep.subr.bf16.mxu0 0
      %1468 = vmatpush1.bf16.msra.mxu0 0
      %1469 = vmatprep.subr.bf16.mxu0 0
      %1470 = vmatpush1.bf16.msra.mxu0 0
      %1471 = vmatprep.subr.bf16.mxu0 0
      %1472 = vmatpush1.bf16.msra.mxu0 0
      %1473 = vmatprep.subr.bf16.mxu0 0
      %1474 = vmatpush1.bf16.msra.mxu0 0
      %1475 = vmatprep.subr.bf16.mxu0 0
      %1476 = vmatpush1.bf16.msra.mxu0 0
      %1477 = vmatprep.subr.bf16.mxu0 0
      %1478 = vmatpush1.bf16.msra.mxu0 0
      %1479 = vmatprep.subr.bf16.mxu0 0
      %1480 = vmatpush1.bf16.msra.mxu0 0
      %1481 = vmatprep.subr.bf16.mxu0 0
      %1482 = vmatpush1.bf16.msra.mxu0 0
      %1483 = vmatprep.subr.bf16.mxu0 0
      %1484 = vmatpush1.bf16.msra.mxu0 0
      %1485 = vmatprep.subr.bf16.mxu0 0
      %1486 = vmatpush1.bf16.msra.mxu0 0
      %1487 = vmatprep.subr.bf16.mxu0 0
      %1488 = vmatpush1.bf16.msra.mxu0 0
      %1489 = vmatprep.mubr.bf16.mxu0 0
      %1490 = vmatmul.mubr.bf16.gmra.mrb[0].mxu0 %v1455
      %v1491 = vpop.f32.mrb[0].mxu0
      %v1492 = vadd.f32 %v1440, %v1491
      %v1493 = vpop.f32.mrb[0].mxu0
      %v1494 = vpop.f32.mrb[0].mxu0
      %v1495 = vpop.f32.mrb[0].mxu0
      %1496 = vdwg.mxu0
      %v1497 = vpack.c.bf16 %v1492, %v1492
      %1499 = vrot.lane.b32.xlu0 %v1497, 96
      %v1500 = vpop.permute.xlu0 %1499
      %vm1501 = vcmask 64512
      %v1503 = vsel %vm1501, %v1497, 0
      %v1506 = vsel %vm1501, %v1500, 0
      %1508 = vmatprep.subr.bf16.mxu0 0
      %1509 = vmatpush1.bf16.xpose.msra.mxu0 %v1506
      %1510 = vmatprep.subr.bf16.mxu0 0
      %1511 = vmatpush1.bf16.xpose.msra.mxu0 0
      %1512 = vmatprep.subr.bf16.mxu0 0
      %1513 = vmatpush1.bf16.xpose.msra.mxu0 0
      %1514 = vmatprep.subr.bf16.mxu0 0
      %1515 = vmatpush1.bf16.xpose.msra.mxu0 0
      %1516 = vmatprep.subr.bf16.mxu0 0
      %1517 = vmatpush1.bf16.xpose.msra.mxu0 0
      %1518 = vmatprep.subr.bf16.mxu0 0
      %1519 = vmatpush1.bf16.xpose.msra.mxu0 0
      %1520 = vmatprep.subr.bf16.mxu0 0
      %1521 = vmatpush1.bf16.xpose.msra.mxu0 0
      %1522 = vmatprep.subr.bf16.mxu0 0
      %1523 = vmatpush1.bf16.xpose.msra.mxu0 0
      %1524 = vmatprep.subr.bf16.mxu0 0
      %1525 = vmatpush1.bf16.xpose.msra.mxu0 0
      %1526 = vmatprep.subr.bf16.mxu0 0
      %1527 = vmatpush1.bf16.xpose.msra.mxu0 0
      %1528 = vmatprep.subr.bf16.mxu0 0
      %1529 = vmatpush1.bf16.xpose.msra.mxu0 0
      %1530 = vmatprep.subr.bf16.mxu0 0
      %1531 = vmatpush1.bf16.xpose.msra.mxu0 0
      %1532 = vmatprep.subr.bf16.mxu0 0
      %1533 = vmatpush1.bf16.xpose.msra.mxu0 0
      %1534 = vmatprep.subr.bf16.mxu0 0
      %1535 = vmatpush1.bf16.xpose.msra.mxu0 0
      %1536 = vmatprep.subr.bf16.mxu0 0
      %1537 = vmatpush1.bf16.xpose.msra.mxu0 0
      %1538 = vmatprep.subr.bf16.mxu0 0
      %1539 = vmatpush1.bf16.xpose.msra.mxu0 0
      %1540 = vmatprep.mubr.bf16.mxu0 0
      %1541 = vmatmul.mubr.bf16.gmra.mrb[0].mxu0 %v1503
      %v1542 = vpop.f32.mrb[0].mxu0
      %v1543 = vadd.f32 0.0, %v1542
      %v1544 = vpop.f32.mrb[0].mxu0
      %v1545 = vpop.f32.mrb[0].mxu0
      %v1546 = vpop.f32.mrb[0].mxu0
      %1547 = vdwg.mxu0
      %v1548 = vmul.f32 %v1543, 0.35355338
      %v1549 = vadd.f32 %v1548, %v1398
      %v1550 = vsel %vm1501, %v1549, -inf
      %1551 = vmax.xlane.f32.xlu0 %v1550
      %v1552 = vpop.xlane.xlu0 %1551
      %v1553 = vsub.f32 %v1549, %v1552
      %v1554 = vmul.f32 %v1553, 1.442695
      %v1555 = vpow.pop %v1554
      %v1556 = vsel %vm1501, %v1555, 0.0
      %1557 = vadd.xlane.f32.xlu0 %v1556
      %v1558 = vpop.xlane.xlu0 %1557
      %v1559 = vrcp.pop %v1558
      %v1560 = vmul.f32 %v1555, %v1559
      %v1561 = vmul.f32 %v1560, %v1396
      %v1562 = vpack.c.bf16 %v1561, %v1561
      %1563 = vrot.lane.b32.xlu0 %v1497, 64
      %v1564 = vpop.permute.xlu0 %1563
      %v1566 = vsel %vm1501, %v1562, 0
      %vm1568 = vcmask 1043456
      %v1570 = vsel %vm1568, %v1564, 0
      %1572 = vmatprep.subr.bf16.mxu0 0
      %1573 = vmatpush1.bf16.msra.mxu0 %v1570
      %1574 = vmatprep.subr.bf16.mxu0 0
      %1575 = vmatpush1.bf16.msra.mxu0 0
      %1576 = vmatprep.subr.bf16.mxu0 0
      %1577 = vmatpush1.bf16.msra.mxu0 0
      %1578 = vmatprep.subr.bf16.mxu0 0
      %1579 = vmatpush1.bf16.msra.mxu0 0
      %1580 = vmatprep.subr.bf16.mxu0 0
      %1581 = vmatpush1.bf16.msra.mxu0 0
      %1582 = vmatprep.subr.bf16.mxu0 0
      %1583 = vmatpush1.bf16.msra.mxu0 0
      %1584 = vmatprep.subr.bf16.mxu0 0
      %1585 = vmatpush1.bf16.msra.mxu0 0
      %1586 = vmatprep.subr.bf16.mxu0 0
      %1587 = vmatpush1.bf16.msra.mxu0 0
      %1588 = vmatprep.subr.bf16.mxu0 0
      %1589 = vmatpush1.bf16.msra.mxu0 0
      %1590 = vmatprep.subr.bf16.mxu0 0
      %1591 = vmatpush1.bf16.msra.mxu0 0
      %1592 = vmatprep.subr.bf16.mxu0 0
      %1593 = vmatpush1.bf16.msra.mxu0 0
      %1594 = vmatprep.subr.bf16.mxu0 0
      %1595 = vmatpush1.bf16.msra.mxu0 0
      %1596 = vmatprep.subr.bf16.mxu0 0
      %1597 = vmatpush1.bf16.msra.mxu0 0
      %1598 = vmatprep.subr.bf16.mxu0 0
      %1599 = vmatpush1.bf16.msra.mxu0 0
      %1600 = vmatprep.subr.bf16.mxu0 0
      %1601 = vmatpush1.bf16.msra.mxu0 0
      %1602 = vmatprep.subr.bf16.mxu0 0
      %1603 = vmatpush1.bf16.msra.mxu0 0
      %1604 = vmatprep.mubr.bf16.mxu0 0
      %1605 = vmatmul.mubr.bf16.gmra.mrb[0].mxu0 %v1566
      %v1606 = vpop.f32.mrb[0].mxu0
      %v1607 = vadd.f32 0.0, %v1606
      %v1608 = vpop.f32.mrb[0].mxu0
      %v1609 = vpop.f32.mrb[0].mxu0
      %v1610 = vpop.f32.mrb[0].mxu0
      %1611 = vdwg.mxu0
      %v1612 = vpack.c.bf16 %v1607, %v1607
      %v1613 = vld [vmem:[%s1234] sm:$0xf]
      %1614 = vrot.lane.b32.xlu0 %v1497, 120
      %v1615 = vpop.permute.xlu0 %1614
      %1616 = vrot.lane.b32.xlu0 %v1497, 88
      %v1617 = vpop.permute.xlu0 %1616
      %v1619 = vsel %vm1501, %v1615, 0
      %v1622 = vsel %vm1501, %v1617, 0
      %1624 = vmatprep.subr.bf16.mxu0 0
      %1625 = vmatpush1.bf16.xpose.msra.mxu0 %v1622
      %1626 = vmatprep.subr.bf16.mxu0 0
      %1627 = vmatpush1.bf16.xpose.msra.mxu0 0
      %1628 = vmatprep.subr.bf16.mxu0 0
      %1629 = vmatpush1.bf16.xpose.msra.mxu0 0
      %1630 = vmatprep.subr.bf16.mxu0 0
      %1631 = vmatpush1.bf16.xpose.msra.mxu0 0
      %1632 = vmatprep.subr.bf16.mxu0 0
      %1633 = vmatpush1.bf16.xpose.msra.mxu0 0
      %1634 = vmatprep.subr.bf16.mxu0 0
      %1635 = vmatpush1.bf16.xpose.msra.mxu0 0
      %1636 = vmatprep.subr.bf16.mxu0 0
      %1637 = vmatpush1.bf16.xpose.msra.mxu0 0
      %1638 = vmatprep.subr.bf16.mxu0 0
      %1639 = vmatpush1.bf16.xpose.msra.mxu0 0
      %1640 = vmatprep.subr.bf16.mxu0 0
      %1641 = vmatpush1.bf16.xpose.msra.mxu0 0
      %1642 = vmatprep.subr.bf16.mxu0 0
      %1643 = vmatpush1.bf16.xpose.msra.mxu0 0
      %1644 = vmatprep.subr.bf16.mxu0 0
      %1645 = vmatpush1.bf16.xpose.msra.mxu0 0
      %1646 = vmatprep.subr.bf16.mxu0 0
      %1647 = vmatpush1.bf16.xpose.msra.mxu0 0
      %1648 = vmatprep.subr.bf16.mxu0 0
      %1649 = vmatpush1.bf16.xpose.msra.mxu0 0
      %1650 = vmatprep.subr.bf16.mxu0 0
      %1651 = vmatpush1.bf16.xpose.msra.mxu0 0
      %1652 = vmatprep.subr.bf16.mxu0 0
      %1653 = vmatpush1.bf16.xpose.msra.mxu0 0
      %1654 = vmatprep.subr.bf16.mxu0 0
      %1655 = vmatpush1.bf16.xpose.msra.mxu0 0
      %1656 = vmatprep.mubr.bf16.mxu0 0
      %1657 = vmatmul.mubr.bf16.gmra.mrb[0].mxu0 %v1619
      %v1658 = vpop.f32.mrb[0].mxu0
      %v1659 = vadd.f32 0.0, %v1658
      %v1660 = vpop.f32.mrb[0].mxu0
      %v1661 = vpop.f32.mrb[0].mxu0
      %v1662 = vpop.f32.mrb[0].mxu0
      %1663 = vdwg.mxu0
      %v1664 = vmul.f32 %v1659, 0.35355338
      %v1665 = vadd.f32 %v1664, %v1398
      %v1666 = vsel %vm1501, %v1665, -inf
      %1667 = vmax.xlane.f32.xlu0 %v1666
      %v1668 = vpop.xlane.xlu0 %1667
      %v1669 = vsub.f32 %v1665, %v1668
      %v1670 = vmul.f32 %v1669, 1.442695
      %v1671 = vpow.pop %v1670
      %v1672 = vsel %vm1501, %v1671, 0.0
      %1673 = vadd.xlane.f32.xlu0 %v1672
      %v1674 = vpop.xlane.xlu0 %1673
      %v1675 = vrcp.pop %v1674
      %v1676 = vmul.f32 %v1671, %v1675
      %v1677 = vmul.f32 %v1676, %v1396
      %v1678 = vpack.c.bf16 %v1677, %v1677
      %1679 = vrot.lane.b32.xlu0 %v1497, 56
      %v1680 = vpop.permute.xlu0 %1679
      %v1682 = vsel %vm1501, %v1678, 0
      %v1685 = vsel %vm1568, %v1680, 0
      %1687 = vmatprep.subr.bf16.mxu0 0
      %1688 = vmatpush1.bf16.msra.mxu0 %v1685
      %1689 = vmatprep.subr.bf16.mxu0 0
      %1690 = vmatpush1.bf16.msra.mxu0 0
      %1691 = vmatprep.subr.bf16.mxu0 0
      %1692 = vmatpush1.bf16.msra.mxu0 0
      %1693 = vmatprep.subr.bf16.mxu0 0
      %1694 = vmatpush1.bf16.msra.mxu0 0
      %1695 = vmatprep.subr.bf16.mxu0 0
      %1696 = vmatpush1.bf16.msra.mxu0 0
      %1697 = vmatprep.subr.bf16.mxu0 0
      %1698 = vmatpush1.bf16.msra.mxu0 0
      %1699 = vmatprep.subr.bf16.mxu0 0
      %1700 = vmatpush1.bf16.msra.mxu0 0
      %1701 = vmatprep.subr.bf16.mxu0 0
      %1702 = vmatpush1.bf16.msra.mxu0 0
      %1703 = vmatprep.subr.bf16.mxu0 0
      %1704 = vmatpush1.bf16.msra.mxu0 0
      %1705 = vmatprep.subr.bf16.mxu0 0
      %1706 = vmatpush1.bf16.msra.mxu0 0
      %1707 = vmatprep.subr.bf16.mxu0 0
      %1708 = vmatpush1.bf16.msra.mxu0 0
      %1709 = vmatprep.subr.bf16.mxu0 0
      %1710 = vmatpush1.bf16.msra.mxu0 0
      %1711 = vmatprep.subr.bf16.mxu0 0
      %1712 = vmatpush1.bf16.msra.mxu0 0
      %1713 = vmatprep.subr.bf16.mxu0 0
      %1714 = vmatpush1.bf16.msra.mxu0 0
      %1715 = vmatprep.subr.bf16.mxu0 0
      %1716 = vmatpush1.bf16.msra.mxu0 0
      %1717 = vmatprep.subr.bf16.mxu0 0
      %1718 = vmatpush1.bf16.msra.mxu0 0
      %1719 = vmatprep.mubr.bf16.mxu0 0
      %1720 = vmatmul.mubr.bf16.gmra.mrb[0].mxu0 %v1682
      %v1721 = vpop.f32.mrb[0].mxu0
      %v1722 = vadd.f32 0.0, %v1721
      %v1723 = vpop.f32.mrb[0].mxu0
      %v1724 = vpop.f32.mrb[0].mxu0
      %v1725 = vpop.f32.mrb[0].mxu0
      %1726 = vdwg.mxu0
      %v1727 = vpack.c.bf16 %v1722, %v1722
      %v1728 = vld [vmem:[%s1234 + $0x4] sm:$0xf]
      %v1730 = vsel %vm1501, %v1727, 0
      %v1733 = vsel %vm1568, %v1728, 0
      %1735 = vmatprep.subr.bf16.mxu0 0
      %1736 = vmatpush1.bf16.msra.mxu0 %v1733
      %1737 = vmatprep.subr.bf16.mxu0 0
      %1738 = vmatpush1.bf16.msra.mxu0 0
      %1739 = vmatprep.subr.bf16.mxu0 0
      %1740 = vmatpush1.bf16.msra.mxu0 0
      %1741 = vmatprep.subr.bf16.mxu0 0
      %1742 = vmatpush1.bf16.msra.mxu0 0
      %1743 = vmatprep.subr.bf16.mxu0 0
      %1744 = vmatpush1.bf16.msra.mxu0 0
      %1745 = vmatprep.subr.bf16.mxu0 0
      %1746 = vmatpush1.bf16.msra.mxu0 0
      %1747 = vmatprep.subr.bf16.mxu0 0
      %1748 = vmatpush1.bf16.msra.mxu0 0
      %1749 = vmatprep.subr.bf16.mxu0 0
      %1750 = vmatpush1.bf16.msra.mxu0 0
      %1751 = vmatprep.subr.bf16.mxu0 0
      %1752 = vmatpush1.bf16.msra.mxu0 0
      %1753 = vmatprep.subr.bf16.mxu0 0
      %1754 = vmatpush1.bf16.msra.mxu0 0
      %1755 = vmatprep.subr.bf16.mxu0 0
      %1756 = vmatpush1.bf16.msra.mxu0 0
      %1757 = vmatprep.subr.bf16.mxu0 0
      %1758 = vmatpush1.bf16.msra.mxu0 0
      %1759 = vmatprep.subr.bf16.mxu0 0
      %1760 = vmatpush1.bf16.msra.mxu0 0
      %1761 = vmatprep.subr.bf16.mxu0 0
      %1762 = vmatpush1.bf16.msra.mxu0 0
      %1763 = vmatprep.subr.bf16.mxu0 0
      %1764 = vmatpush1.bf16.msra.mxu0 0
      %1765 = vmatprep.subr.bf16.mxu0 0
      %1766 = vmatpush1.bf16.msra.mxu0 0
      %1767 = vmatprep.mubr.bf16.mxu0 0
      %1768 = vmatmul.mubr.bf16.gmra.mrb[0].mxu0 %v1730
      %v1769 = vpop.f32.mrb[0].mxu0
      %v1770 = vadd.f32 0.0, %v1769
      %v1771 = vpop.f32.mrb[0].mxu0
      %v1772 = vpop.f32.mrb[0].mxu0
      %v1773 = vpop.f32.mrb[0].mxu0
      %1774 = vdwg.mxu0
      %v1776 = vsel %vm1501, %v1612, 0
      %v1779 = vsel %vm1568, %v1613, 0
      %1781 = vmatprep.subr.bf16.mxu0 0
      %1782 = vmatpush1.bf16.msra.mxu0 %v1779
      %1783 = vmatprep.subr.bf16.mxu0 0
      %1784 = vmatpush1.bf16.msra.mxu0 0
      %1785 = vmatprep.subr.bf16.mxu0 0
      %1786 = vmatpush1.bf16.msra.mxu0 0
      %1787 = vmatprep.subr.bf16.mxu0 0
      %1788 = vmatpush1.bf16.msra.mxu0 0
      %1789 = vmatprep.subr.bf16.mxu0 0
      %1790 = vmatpush1.bf16.msra.mxu0 0
      %1791 = vmatprep.subr.bf16.mxu0 0
      %1792 = vmatpush1.bf16.msra.mxu0 0
      %1793 = vmatprep.subr.bf16.mxu0 0
      %1794 = vmatpush1.bf16.msra.mxu0 0
      %1795 = vmatprep.subr.bf16.mxu0 0
      %1796 = vmatpush1.bf16.msra.mxu0 0
      %1797 = vmatprep.subr.bf16.mxu0 0
      %1798 = vmatpush1.bf16.msra.mxu0 0
      %1799 = vmatprep.subr.bf16.mxu0 0
      %1800 = vmatpush1.bf16.msra.mxu0 0
      %1801 = vmatprep.subr.bf16.mxu0 0
      %1802 = vmatpush1.bf16.msra.mxu0 0
      %1803 = vmatprep.subr.bf16.mxu0 0
      %1804 = vmatpush1.bf16.msra.mxu0 0
      %1805 = vmatprep.subr.bf16.mxu0 0
      %1806 = vmatpush1.bf16.msra.mxu0 0
      %1807 = vmatprep.subr.bf16.mxu0 0
      %1808 = vmatpush1.bf16.msra.mxu0 0
      %1809 = vmatprep.subr.bf16.mxu0 0
      %1810 = vmatpush1.bf16.msra.mxu0 0
      %1811 = vmatprep.subr.bf16.mxu0 0
      %1812 = vmatpush1.bf16.msra.mxu0 0
      %1813 = vmatprep.mubr.bf16.mxu0 0
      %1814 = vmatmul.mubr.bf16.gmra.mrb[0].mxu0 %v1776
      %v1815 = vpop.f32.mrb[0].mxu0
      %v1816 = vadd.f32 %v1770, %v1815
      %v1817 = vpop.f32.mrb[0].mxu0
      %v1818 = vpop.f32.mrb[0].mxu0
      %v1819 = vpop.f32.mrb[0].mxu0
      %1820 = vdwg.mxu0
      %1821 = vrot.lane.b32.xlu0 %v1497, 112
      %v1822 = vpop.permute.xlu0 %1821
      %1823 = vrot.lane.b32.xlu0 %v1497, 80
      %v1824 = vpop.permute.xlu0 %1823
      %v1826 = vsel %vm1501, %v1822, 0
      %v1829 = vsel %vm1501, %v1824, 0
      %1831 = vmatprep.subr.bf16.mxu0 0
      %1832 = vmatpush1.bf16.xpose.msra.mxu0 %v1829
      %1833 = vmatprep.subr.bf16.mxu0 0
      %1834 = vmatpush1.bf16.xpose.msra.mxu0 0
      %1835 = vmatprep.subr.bf16.mxu0 0
      %1836 = vmatpush1.bf16.xpose.msra.mxu0 0
      %1837 = vmatprep.subr.bf16.mxu0 0
      %1838 = vmatpush1.bf16.xpose.msra.mxu0 0
      %1839 = vmatprep.subr.bf16.mxu0 0
      %1840 = vmatpush1.bf16.xpose.msra.mxu0 0
      %1841 = vmatprep.subr.bf16.mxu0 0
      %1842 = vmatpush1.bf16.xpose.msra.mxu0 0
      %1843 = vmatprep.subr.bf16.mxu0 0
      %1844 = vmatpush1.bf16.xpose.msra.mxu0 0
      %1845 = vmatprep.subr.bf16.mxu0 0
      %1846 = vmatpush1.bf16.xpose.msra.mxu0 0
      %1847 = vmatprep.subr.bf16.mxu0 0
      %1848 = vmatpush1.bf16.xpose.msra.mxu0 0
      %1849 = vmatprep.subr.bf16.mxu0 0
      %1850 = vmatpush1.bf16.xpose.msra.mxu0 0
      %1851 = vmatprep.subr.bf16.mxu0 0
      %1852 = vmatpush1.bf16.xpose.msra.mxu0 0
      %1853 = vmatprep.subr.bf16.mxu0 0
      %1854 = vmatpush1.bf16.xpose.msra.mxu0 0
      %1855 = vmatprep.subr.bf16.mxu0 0
      %1856 = vmatpush1.bf16.xpose.msra.mxu0 0
      %1857 = vmatprep.subr.bf16.mxu0 0
      %1858 = vmatpush1.bf16.xpose.msra.mxu0 0
      %1859 = vmatprep.subr.bf16.mxu0 0
      %1860 = vmatpush1.bf16.xpose.msra.mxu0 0
      %1861 = vmatprep.subr.bf16.mxu0 0
      %1862 = vmatpush1.bf16.xpose.msra.mxu0 0
      %1863 = vmatprep.mubr.bf16.mxu0 0
      %1864 = vmatmul.mubr.bf16.gmra.mrb[0].mxu0 %v1826
      %v1865 = vpop.f32.mrb[0].mxu0
      %v1866 = vadd.f32 0.0, %v1865
      %v1867 = vpop.f32.mrb[0].mxu0
      %v1868 = vpop.f32.mrb[0].mxu0
      %v1869 = vpop.f32.mrb[0].mxu0
      %1870 = vdwg.mxu0
      %v1871 = vmul.f32 %v1866, 0.35355338
      %v1872 = vadd.f32 %v1871, %v1398
      %v1873 = vsel %vm1501, %v1872, -inf
      %1874 = vmax.xlane.f32.xlu0 %v1873
      %v1875 = vpop.xlane.xlu0 %1874
      %v1876 = vsub.f32 %v1872, %v1875
      %v1877 = vmul.f32 %v1876, 1.442695
      %v1878 = vpow.pop %v1877
      %v1879 = vsel %vm1501, %v1878, 0.0
      %1880 = vadd.xlane.f32.xlu0 %v1879
      %v1881 = vpop.xlane.xlu0 %1880
      %v1882 = vrcp.pop %v1881
      %v1883 = vmul.f32 %v1878, %v1882
      %v1884 = vmul.f32 %v1883, %v1396
      %v1885 = vpack.c.bf16 %v1884, %v1884
      %1886 = vrot.lane.b32.xlu0 %v1497, 48
      %v1887 = vpop.permute.xlu0 %1886
      %v1889 = vsel %vm1501, %v1885, 0
      %v1892 = vsel %vm1568, %v1887, 0
      %1894 = vmatprep.subr.bf16.mxu0 0
      %1895 = vmatpush1.bf16.msra.mxu0 %v1892
      %1896 = vmatprep.subr.bf16.mxu0 0
      %1897 = vmatpush1.bf16.msra.mxu0 0
      %1898 = vmatprep.subr.bf16.mxu0 0
      %1899 = vmatpush1.bf16.msra.mxu0 0
      %1900 = vmatprep.subr.bf16.mxu0 0
      %1901 = vmatpush1.bf16.msra.mxu0 0
      %1902 = vmatprep.subr.bf16.mxu0 0
      %1903 = vmatpush1.bf16.msra.mxu0 0
      %1904 = vmatprep.subr.bf16.mxu0 0
      %1905 = vmatpush1.bf16.msra.mxu0 0
      %1906 = vmatprep.subr.bf16.mxu0 0
      %1907 = vmatpush1.bf16.msra.mxu0 0
      %1908 = vmatprep.subr.bf16.mxu0 0
      %1909 = vmatpush1.bf16.msra.mxu0 0
      %1910 = vmatprep.subr.bf16.mxu0 0
      %1911 = vmatpush1.bf16.msra.mxu0 0
      %1912 = vmatprep.subr.bf16.mxu0 0
      %1913 = vmatpush1.bf16.msra.mxu0 0
      %1914 = vmatprep.subr.bf16.mxu0 0
      %1915 = vmatpush1.bf16.msra.mxu0 0
      %1916 = vmatprep.subr.bf16.mxu0 0
      %1917 = vmatpush1.bf16.msra.mxu0 0
      %1918 = vmatprep.subr.bf16.mxu0 0
      %1919 = vmatpush1.bf16.msra.mxu0 0
      %1920 = vmatprep.subr.bf16.mxu0 0
      %1921 = vmatpush1.bf16.msra.mxu0 0
      %1922 = vmatprep.subr.bf16.mxu0 0
      %1923 = vmatpush1.bf16.msra.mxu0 0
      %1924 = vmatprep.subr.bf16.mxu0 0
      %1925 = vmatpush1.bf16.msra.mxu0 0
      %1926 = vmatprep.mubr.bf16.mxu0 0
      %1927 = vmatmul.mubr.bf16.gmra.mrb[0].mxu0 %v1889
      %v1928 = vpop.f32.mrb[0].mxu0
      %v1929 = vadd.f32 0.0, %v1928
      %v1930 = vpop.f32.mrb[0].mxu0
      %v1931 = vpop.f32.mrb[0].mxu0
      %v1932 = vpop.f32.mrb[0].mxu0
      %1933 = vdwg.mxu0
      %v1934 = vpack.c.bf16 %v1929, %v1929
      %v1935 = vld [vmem:[%s1234 + $0x8] sm:$0xf]
      %v1937 = vsel %vm1501, %v1934, 0
      %v1940 = vsel %vm1568, %v1935, 0
      %1942 = vmatprep.subr.bf16.mxu0 0
      %1943 = vmatpush1.bf16.msra.mxu0 %v1940
      %1944 = vmatprep.subr.bf16.mxu0 0
      %1945 = vmatpush1.bf16.msra.mxu0 0
      %1946 = vmatprep.subr.bf16.mxu0 0
      %1947 = vmatpush1.bf16.msra.mxu0 0
      %1948 = vmatprep.subr.bf16.mxu0 0
      %1949 = vmatpush1.bf16.msra.mxu0 0
      %1950 = vmatprep.subr.bf16.mxu0 0
      %1951 = vmatpush1.bf16.msra.mxu0 0
      %1952 = vmatprep.subr.bf16.mxu0 0
      %1953 = vmatpush1.bf16.msra.mxu0 0
      %1954 = vmatprep.subr.bf16.mxu0 0
      %1955 = vmatpush1.bf16.msra.mxu0 0
      %1956 = vmatprep.subr.bf16.mxu0 0
      %1957 = vmatpush1.bf16.msra.mxu0 0
      %1958 = vmatprep.subr.bf16.mxu0 0
      %1959 = vmatpush1.bf16.msra.mxu0 0
      %1960 = vmatprep.subr.bf16.mxu0 0
      %1961 = vmatpush1.bf16.msra.mxu0 0
      %1962 = vmatprep.subr.bf16.mxu0 0
      %1963 = vmatpush1.bf16.msra.mxu0 0
      %1964 = vmatprep.subr.bf16.mxu0 0
      %1965 = vmatpush1.bf16.msra.mxu0 0
      %1966 = vmatprep.subr.bf16.mxu0 0
      %1967 = vmatpush1.bf16.msra.mxu0 0
      %1968 = vmatprep.subr.bf16.mxu0 0
      %1969 = vmatpush1.bf16.msra.mxu0 0
      %1970 = vmatprep.subr.bf16.mxu0 0
      %1971 = vmatpush1.bf16.msra.mxu0 0
      %1972 = vmatprep.subr.bf16.mxu0 0
      %1973 = vmatpush1.bf16.msra.mxu0 0
      %1974 = vmatprep.mubr.bf16.mxu0 0
      %1975 = vmatmul.mubr.bf16.gmra.mrb[0].mxu0 %v1937
      %v1976 = vpop.f32.mrb[0].mxu0
      %v1977 = vadd.f32 0.0, %v1976
      %v1978 = vpop.f32.mrb[0].mxu0
      %v1979 = vpop.f32.mrb[0].mxu0
      %v1980 = vpop.f32.mrb[0].mxu0
      %1981 = vdwg.mxu0
      %v1982 = vadd.f32 %v1816, %v1977
      %1983 = vrot.lane.b32.xlu0 %v1497, 104
      %v1984 = vpop.permute.xlu0 %1983
      %1985 = vrot.lane.b32.xlu0 %v1497, 72
      %v1986 = vpop.permute.xlu0 %1985
      %v1988 = vsel %vm1501, %v1984, 0
      %v1991 = vsel %vm1501, %v1986, 0
      %1993 = vmatprep.subr.bf16.mxu0 0
      %1994 = vmatpush1.bf16.xpose.msra.mxu0 %v1991
      %1995 = vmatprep.subr.bf16.mxu0 0
      %1996 = vmatpush1.bf16.xpose.msra.mxu0 0
      %1997 = vmatprep.subr.bf16.mxu0 0
      %1998 = vmatpush1.bf16.xpose.msra.mxu0 0
      %1999 = vmatprep.subr.bf16.mxu0 0
      %2000 = vmatpush1.bf16.xpose.msra.mxu0 0
      %2001 = vmatprep.subr.bf16.mxu0 0
      %2002 = vmatpush1.bf16.xpose.msra.mxu0 0
      %2003 = vmatprep.subr.bf16.mxu0 0
      %2004 = vmatpush1.bf16.xpose.msra.mxu0 0
      %2005 = vmatprep.subr.bf16.mxu0 0
      %2006 = vmatpush1.bf16.xpose.msra.mxu0 0
      %2007 = vmatprep.subr.bf16.mxu0 0
      %2008 = vmatpush1.bf16.xpose.msra.mxu0 0
      %2009 = vmatprep.subr.bf16.mxu0 0
      %2010 = vmatpush1.bf16.xpose.msra.mxu0 0
      %2011 = vmatprep.subr.bf16.mxu0 0
      %2012 = vmatpush1.bf16.xpose.msra.mxu0 0
      %2013 = vmatprep.subr.bf16.mxu0 0
      %2014 = vmatpush1.bf16.xpose.msra.mxu0 0
      %2015 = vmatprep.subr.bf16.mxu0 0
      %2016 = vmatpush1.bf16.xpose.msra.mxu0 0
      %2017 = vmatprep.subr.bf16.mxu0 0
      %2018 = vmatpush1.bf16.xpose.msra.mxu0 0
      %2019 = vmatprep.subr.bf16.mxu0 0
      %2020 = vmatpush1.bf16.xpose.msra.mxu0 0
      %2021 = vmatprep.subr.bf16.mxu0 0
      %2022 = vmatpush1.bf16.xpose.msra.mxu0 0
      %2023 = vmatprep.subr.bf16.mxu0 0
      %2024 = vmatpush1.bf16.xpose.msra.mxu0 0
      %2025 = vmatprep.mubr.bf16.mxu0 0
      %2026 = vmatmul.mubr.bf16.gmra.mrb[0].mxu0 %v1988
      %v2027 = vpop.f32.mrb[0].mxu0
      %v2028 = vadd.f32 0.0, %v2027
      %v2029 = vpop.f32.mrb[0].mxu0
      %v2030 = vpop.f32.mrb[0].mxu0
      %v2031 = vpop.f32.mrb[0].mxu0
      %2032 = vdwg.mxu0
      %v2033 = vmul.f32 %v2028, 0.35355338
      %v2034 = vadd.f32 %v2033, %v1398
      %v2035 = vsel %vm1501, %v2034, -inf
      %2036 = vmax.xlane.f32.xlu0 %v2035
      %v2037 = vpop.xlane.xlu0 %2036
      %v2038 = vsub.f32 %v2034, %v2037
      %v2039 = vmul.f32 %v2038, 1.442695
      %v2040 = vpow.pop %v2039
      %v2041 = vsel %vm1501, %v2040, 0.0
      %2042 = vadd.xlane.f32.xlu0 %v2041
      %v2043 = vpop.xlane.xlu0 %2042
      %v2044 = vrcp.pop %v2043
      %v2045 = vmul.f32 %v2040, %v2044
      %v2046 = vmul.f32 %v2045, %v1396
      %v2047 = vpack.c.bf16 %v2046, %v2046
      %2048 = vrot.lane.b32.xlu0 %v1497, 40
      %v2049 = vpop.permute.xlu0 %2048
      %v2051 = vsel %vm1501, %v2047, 0
      %v2054 = vsel %vm1568, %v2049, 0
      %2056 = vmatprep.subr.bf16.mxu0 0
      %2057 = vmatpush1.bf16.msra.mxu0 %v2054
      %2058 = vmatprep.subr.bf16.mxu0 0
      %2059 = vmatpush1.bf16.msra.mxu0 0
      %2060 = vmatprep.subr.bf16.mxu0 0
      %2061 = vmatpush1.bf16.msra.mxu0 0
      %2062 = vmatprep.subr.bf16.mxu0 0
      %2063 = vmatpush1.bf16.msra.mxu0 0
      %2064 = vmatprep.subr.bf16.mxu0 0
      %2065 = vmatpush1.bf16.msra.mxu0 0
      %2066 = vmatprep.subr.bf16.mxu0 0
      %2067 = vmatpush1.bf16.msra.mxu0 0
      %2068 = vmatprep.subr.bf16.mxu0 0
      %2069 = vmatpush1.bf16.msra.mxu0 0
      %2070 = vmatprep.subr.bf16.mxu0 0
      %2071 = vmatpush1.bf16.msra.mxu0 0
      %2072 = vmatprep.subr.bf16.mxu0 0
      %2073 = vmatpush1.bf16.msra.mxu0 0
      %2074 = vmatprep.subr.bf16.mxu0 0
      %2075 = vmatpush1.bf16.msra.mxu0 0
      %2076 = vmatprep.subr.bf16.mxu0 0
      %2077 = vmatpush1.bf16.msra.mxu0 0
      %2078 = vmatprep.subr.bf16.mxu0 0
      %2079 = vmatpush1.bf16.msra.mxu0 0
      %2080 = vmatprep.subr.bf16.mxu0 0
      %2081 = vmatpush1.bf16.msra.mxu0 0
      %2082 = vmatprep.subr.bf16.mxu0 0
      %2083 = vmatpush1.bf16.msra.mxu0 0
      %2084 = vmatprep.subr.bf16.mxu0 0
      %2085 = vmatpush1.bf16.msra.mxu0 0
      %2086 = vmatprep.subr.bf16.mxu0 0
      %2087 = vmatpush1.bf16.msra.mxu0 0
      %2088 = vmatprep.mubr.bf16.mxu0 0
      %2089 = vmatmul.mubr.bf16.gmra.mrb[0].mxu0 %v2051
      %v2090 = vpop.f32.mrb[0].mxu0
      %v2091 = vadd.f32 0.0, %v2090
      %v2092 = vpop.f32.mrb[0].mxu0
      %v2093 = vpop.f32.mrb[0].mxu0
      %v2094 = vpop.f32.mrb[0].mxu0
      %2095 = vdwg.mxu0
      %v2096 = vpack.c.bf16 %v2091, %v2091
      %v2097 = vld [vmem:[%s1234 + $0xc] sm:$0xf]
      %v2099 = vsel %vm1501, %v2096, 0
      %v2102 = vsel %vm1568, %v2097, 0
      %2104 = vmatprep.subr.bf16.mxu0 0
      %2105 = vmatpush1.bf16.msra.mxu0 %v2102
      %2106 = vmatprep.subr.bf16.mxu0 0
      %2107 = vmatpush1.bf16.msra.mxu0 0
      %2108 = vmatprep.subr.bf16.mxu0 0
      %2109 = vmatpush1.bf16.msra.mxu0 0
      %2110 = vmatprep.subr.bf16.mxu0 0
      %2111 = vmatpush1.bf16.msra.mxu0 0
      %2112 = vmatprep.subr.bf16.mxu0 0
      %2113 = vmatpush1.bf16.msra.mxu0 0
      %2114 = vmatprep.subr.bf16.mxu0 0
      %2115 = vmatpush1.bf16.msra.mxu0 0
      %2116 = vmatprep.subr.bf16.mxu0 0
      %2117 = vmatpush1.bf16.msra.mxu0 0
      %2118 = vmatprep.subr.bf16.mxu0 0
      %2119 = vmatpush1.bf16.msra.mxu0 0
      %2120 = vmatprep.subr.bf16.mxu0 0
      %2121 = vmatpush1.bf16.msra.mxu0 0
      %2122 = vmatprep.subr.bf16.mxu0 0
      %2123 = vmatpush1.bf16.msra.mxu0 0
      %2124 = vmatprep.subr.bf16.mxu0 0
      %2125 = vmatpush1.bf16.msra.mxu0 0
      %2126 = vmatprep.subr.bf16.mxu0 0
      %2127 = vmatpush1.bf16.msra.mxu0 0
      %2128 = vmatprep.subr.bf16.mxu0 0
      %2129 = vmatpush1.bf16.msra.mxu0 0
      %2130 = vmatprep.subr.bf16.mxu0 0
      %2131 = vmatpush1.bf16.msra.mxu0 0
      %2132 = vmatprep.subr.bf16.mxu0 0
      %2133 = vmatpush1.bf16.msra.mxu0 0
      %2134 = vmatprep.subr.bf16.mxu0 0
      %2135 = vmatpush1.bf16.msra.mxu0 0
      %2136 = vmatprep.mubr.bf16.mxu0 0
      %2137 = vmatmul.mubr.bf16.gmra.mrb[0].mxu0 %v2099
      %v2138 = vpop.f32.mrb[0].mxu0
      %v2139 = vadd.f32 0.0, %v2138
      %v2140 = vpop.f32.mrb[0].mxu0
      %v2141 = vpop.f32.mrb[0].mxu0
      %v2142 = vpop.f32.mrb[0].mxu0
      %2143 = vdwg.mxu0
      %v2144 = vadd.f32 %v1982, %v2139
      %v2145 = vadd.f32 %v1395, %v2144
      %v2146 = vld [vmem:[%s1253] sm:$0x1]
      %v2148 = vlaneseq
      %v2149 = vshrl.u32 %v2148, 7
      %v2150 = vsub.s32 0, %v2149
      %v2151 = vrot.slane %v2146, %v2150
      %v2153 = vadd.f32 %v2145, %v2151
      %2154 = vst.msk [vmem:[%s1384] sm:$0xff] %vm1401, %v2153
      %s2155 = scalar_lea.vmem %s1384, 8
      %v2156 = vld [vmem:[%s2155] sm:$0xff]
      %s2157 = scalar_lea.vmem %s2, 8
      %v2158 = vld [vmem:[%s2157] sm:$0xff]
      %v2159 = vsub.f32 %v2158, 1.0
      %v2160 = vmul.f32 %v2159, 1e+30
      %v2161 = vld [vmem:[%s1154] sm:$0x1]
      %v2162 = vld [vmem:[%s1173] sm:$0x1]
      %v2163 = vsel %vm1401, %v2156, 0.0
      %2164 = vadd.xlane.f32.xlu0 %v2163
      %v2165 = vpop.xlane.xlu0 %2164
      %v2166 = vmul.f32 %v2165, %v1405
      %v2167 = vsub.f32 %v2156, %v2166
      %v2168 = vmul.f32 %v2167, %v2167
      %v2169 = vsel %vm1401, %v2168, 0.0
      %2170 = vadd.xlane.f32.xlu0 %v2169
      %v2171 = vpop.xlane.xlu0 %2170
      %v2172 = vmul.f32 %v2171, %v1405
      %v2173 = vadd.f32 %v2172, 1e-12
      %v2174 = vrsqrt.pop %v2173
      %v2175 = vmul.f32 %v2167, %v2174
      %v2177 = vlaneseq
      %v2178 = vshrl.u32 %v2177, 7
      %v2179 = vsub.s32 0, %v2178
      %v2180 = vrot.slane %v2161, %v2179
      %v2182 = vmul.f32 %v2175, %v2180
      %v2184 = vlaneseq
      %v2185 = vshrl.u32 %v2184, 7
      %v2186 = vsub.s32 0, %v2185
      %v2187 = vrot.slane %v2162, %v2186
      %v2189 = vadd.f32 %v2182, %v2187
      %v2190 = vpack.c.bf16 %v2189, %v2189
      %v2191 = vld [vmem:[%s1194] sm:$0xf]
      %v2192 = vld [vmem:[%s1194 + $0x4] sm:$0xf]
      %v2193 = vld [vmem:[%s1194 + $0x8] sm:$0xf]
      %v2194 = vld [vmem:[%s1194 + $0xc] sm:$0xf]
      %v2195 = vld [vmem:[%s1213] sm:$0x1]
      %v2197 = vlaneseq
      %v2198 = vshrl.u32 %v2197, 7
      %v2199 = vsub.s32 0, %v2198
      %v2200 = vrot.slane %v2195, %v2199
      %v2206 = vunpack.c.l.b16 %v2191
      %v2207 = vunpack.c.l.b16 %v2192
      %v2208 = vunpack.c.l.b16 %v2193
      %v2209 = vunpack.c.l.b16 %v2194
      %v2210 = vpack.c.b16 %v2207, %v2206
      %v2211 = vpack.c.b16 %v2209, %v2208
      %v2215 = vsel %vm1401, %v2190, 0
      %2217 = vmatprep.subr.bf16.mxu0 0
      %2218 = vmatpush1.bf16.msra.mxu0 %v2210
      %2219 = vmatprep.subr.bf16.mxu0 0
      %2220 = vmatpush1.bf16.msra.mxu0 %v2211
      %2221 = vmatprep.subr.bf16.mxu0 0
      %2222 = vmatpush1.bf16.msra.mxu0 0
      %2223 = vmatprep.subr.bf16.mxu0 0
      %2224 = vmatpush1.bf16.msra.mxu0 0
      %2225 = vmatprep.subr.bf16.mxu0 0
      %2226 = vmatpush1.bf16.msra.mxu0 0
      %2227 = vmatprep.subr.bf16.mxu0 0
      %2228 = vmatpush1.bf16.msra.mxu0 0
      %2229 = vmatprep.subr.bf16.mxu0 0
      %2230 = vmatpush1.bf16.msra.mxu0 0
      %2231 = vmatprep.subr.bf16.mxu0 0
      %2232 = vmatpush1.bf16.msra.mxu0 0
      %2233 = vmatprep.subr.bf16.mxu0 0
      %2234 = vmatpush1.bf16.msra.mxu0 0
      %2235 = vmatprep.subr.bf16.mxu0 0
      %2236 = vmatpush1.bf16.msra.mxu0 0
      %2237 = vmatprep.subr.bf16.mxu0 0
      %2238 = vmatpush1.bf16.msra.mxu0 0
      %2239 = vmatprep.subr.bf16.mxu0 0
      %2240 = vmatpush1.bf16.msra.mxu0 0
      %2241 = vmatprep.subr.bf16.mxu0 0
      %2242 = vmatpush1.bf16.msra.mxu0 0
      %2243 = vmatprep.subr.bf16.mxu0 0
      %2244 = vmatpush1.bf16.msra.mxu0 0
      %2245 = vmatprep.subr.bf16.mxu0 0
      %2246 = vmatpush1.bf16.msra.mxu0 0
      %2247 = vmatprep.subr.bf16.mxu0 0
      %2248 = vmatpush1.bf16.msra.mxu0 0
      %2249 = vmatprep.mubr.bf16.mxu0 0
      %2250 = vmatmul.mubr.bf16.gmra.mrb[0].mxu0 %v2215
      %v2251 = vpop.f32.mrb[0].mxu0
      %v2252 = vadd.f32 %v2200, %v2251
      %v2253 = vpop.f32.mrb[0].mxu0
      %v2254 = vpop.f32.mrb[0].mxu0
      %v2255 = vpop.f32.mrb[0].mxu0
      %2256 = vdwg.mxu0
      %v2257 = vpack.c.bf16 %v2252, %v2252
      %2259 = vrot.lane.b32.xlu0 %v2257, 96
      %v2260 = vpop.permute.xlu0 %2259
      %v2262 = vsel %vm1501, %v2257, 0
      %v2265 = vsel %vm1501, %v2260, 0
      %2267 = vmatprep.subr.bf16.mxu0 0
      %2268 = vmatpush1.bf16.xpose.msra.mxu0 %v2265
      %2269 = vmatprep.subr.bf16.mxu0 0
      %2270 = vmatpush1.bf16.xpose.msra.mxu0 0
      %2271 = vmatprep.subr.bf16.mxu0 0
      %2272 = vmatpush1.bf16.xpose.msra.mxu0 0
      %2273 = vmatprep.subr.bf16.mxu0 0
      %2274 = vmatpush1.bf16.xpose.msra.mxu0 0
      %2275 = vmatprep.subr.bf16.mxu0 0
      %2276 = vmatpush1.bf16.xpose.msra.mxu0 0
      %2277 = vmatprep.subr.bf16.mxu0 0
      %2278 = vmatpush1.bf16.xpose.msra.mxu0 0
      %2279 = vmatprep.subr.bf16.mxu0 0
      %2280 = vmatpush1.bf16.xpose.msra.mxu0 0
      %2281 = vmatprep.subr.bf16.mxu0 0
      %2282 = vmatpush1.bf16.xpose.msra.mxu0 0
      %2283 = vmatprep.subr.bf16.mxu0 0
      %2284 = vmatpush1.bf16.xpose.msra.mxu0 0
      %2285 = vmatprep.subr.bf16.mxu0 0
      %2286 = vmatpush1.bf16.xpose.msra.mxu0 0
      %2287 = vmatprep.subr.bf16.mxu0 0
      %2288 = vmatpush1.bf16.xpose.msra.mxu0 0
      %2289 = vmatprep.subr.bf16.mxu0 0
      %2290 = vmatpush1.bf16.xpose.msra.mxu0 0
      %2291 = vmatprep.subr.bf16.mxu0 0
      %2292 = vmatpush1.bf16.xpose.msra.mxu0 0
      %2293 = vmatprep.subr.bf16.mxu0 0
      %2294 = vmatpush1.bf16.xpose.msra.mxu0 0
      %2295 = vmatprep.subr.bf16.mxu0 0
      %2296 = vmatpush1.bf16.xpose.msra.mxu0 0
      %2297 = vmatprep.subr.bf16.mxu0 0
      %2298 = vmatpush1.bf16.xpose.msra.mxu0 0
      %2299 = vmatprep.mubr.bf16.mxu0 0
      %2300 = vmatmul.mubr.bf16.gmra.mrb[0].mxu0 %v2262
      %v2301 = vpop.f32.mrb[0].mxu0
      %v2302 = vadd.f32 0.0, %v2301
      %v2303 = vpop.f32.mrb[0].mxu0
      %v2304 = vpop.f32.mrb[0].mxu0
      %v2305 = vpop.f32.mrb[0].mxu0
      %2306 = vdwg.mxu0
      %v2307 = vmul.f32 %v2302, 0.35355338
      %v2308 = vadd.f32 %v2307, %v2160
      %v2309 = vsel %vm1501, %v2308, -inf
      %2310 = vmax.xlane.f32.xlu0 %v2309
      %v2311 = vpop.xlane.xlu0 %2310
      %v2312 = vsub.f32 %v2308, %v2311
      %v2313 = vmul.f32 %v2312, 1.442695
      %v2314 = vpow.pop %v2313
      %v2315 = vsel %vm1501, %v2314, 0.0
      %2316 = vadd.xlane.f32.xlu0 %v2315
      %v2317 = vpop.xlane.xlu0 %2316
      %v2318 = vrcp.pop %v2317
      %v2319 = vmul.f32 %v2314, %v2318
      %v2320 = vmul.f32 %v2319, %v2158
      %v2321 = vpack.c.bf16 %v2320, %v2320
      %2322 = vrot.lane.b32.xlu0 %v2257, 64
      %v2323 = vpop.permute.xlu0 %2322
      %v2325 = vsel %vm1501, %v2321, 0
      %v2328 = vsel %vm1568, %v2323, 0
      %2330 = vmatprep.subr.bf16.mxu0 0
      %2331 = vmatpush1.bf16.msra.mxu0 %v2328
      %2332 = vmatprep.subr.bf16.mxu0 0
      %2333 = vmatpush1.bf16.msra.mxu0 0
      %2334 = vmatprep.subr.bf16.mxu0 0
      %2335 = vmatpush1.bf16.msra.mxu0 0
      %2336 = vmatprep.subr.bf16.mxu0 0
      %2337 = vmatpush1.bf16.msra.mxu0 0
      %2338 = vmatprep.subr.bf16.mxu0 0
      %2339 = vmatpush1.bf16.msra.mxu0 0
      %2340 = vmatprep.subr.bf16.mxu0 0
      %2341 = vmatpush1.bf16.msra.mxu0 0
      %2342 = vmatprep.subr.bf16.mxu0 0
      %2343 = vmatpush1.bf16.msra.mxu0 0
      %2344 = vmatprep.subr.bf16.mxu0 0
      %2345 = vmatpush1.bf16.msra.mxu0 0
      %2346 = vmatprep.subr.bf16.mxu0 0
      %2347 = vmatpush1.bf16.msra.mxu0 0
      %2348 = vmatprep.subr.bf16.mxu0 0
      %2349 = vmatpush1.bf16.msra.mxu0 0
      %2350 = vmatprep.subr.bf16.mxu0 0
      %2351 = vmatpush1.bf16.msra.mxu0 0
      %2352 = vmatprep.subr.bf16.mxu0 0
      %2353 = vmatpush1.bf16.msra.mxu0 0
      %2354 = vmatprep.subr.bf16.mxu0 0
      %2355 = vmatpush1.bf16.msra.mxu0 0
      %2356 = vmatprep.subr.bf16.mxu0 0
      %2357 = vmatpush1.bf16.msra.mxu0 0
      %2358 = vmatprep.subr.bf16.mxu0 0
      %2359 = vmatpush1.bf16.msra.mxu0 0
      %2360 = vmatprep.subr.bf16.mxu0 0
      %2361 = vmatpush1.bf16.msra.mxu0 0
      %2362 = vmatprep.mubr.bf16.mxu0 0
      %2363 = vmatmul.mubr.bf16.gmra.mrb[0].mxu0 %v2325
      %v2364 = vpop.f32.mrb[0].mxu0
      %v2365 = vadd.f32 0.0, %v2364
      %v2366 = vpop.f32.mrb[0].mxu0
      %v2367 = vpop.f32.mrb[0].mxu0
      %v2368 = vpop.f32.mrb[0].mxu0
      %2369 = vdwg.mxu0
      %v2370 = vpack.c.bf16 %v2365, %v2365
      %v2371 = vld [vmem:[%s1234] sm:$0xf]
      %2372 = vrot.lane.b32.xlu0 %v2257, 120
      %v2373 = vpop.permute.xlu0 %2372
      %2374 = vrot.lane.b32.xlu0 %v2257, 88
      %v2375 = vpop.permute.xlu0 %2374
      %v2377 = vsel %vm1501, %v2373, 0
      %v2380 = vsel %vm1501, %v2375, 0
      %2382 = vmatprep.subr.bf16.mxu0 0
      %2383 = vmatpush1.bf16.xpose.msra.mxu0 %v2380
      %2384 = vmatprep.subr.bf16.mxu0 0
      %2385 = vmatpush1.bf16.xpose.msra.mxu0 0
      %2386 = vmatprep.subr.bf16.mxu0 0
      %2387 = vmatpush1.bf16.xpose.msra.mxu0 0
      %2388 = vmatprep.subr.bf16.mxu0 0
      %2389 = vmatpush1.bf16.xpose.msra.mxu0 0
      %2390 = vmatprep.subr.bf16.mxu0 0
      %2391 = vmatpush1.bf16.xpose.msra.mxu0 0
      %2392 = vmatprep.subr.bf16.mxu0 0
      %2393 = vmatpush1.bf16.xpose.msra.mxu0 0
      %2394 = vmatprep.subr.bf16.mxu0 0
      %2395 = vmatpush1.bf16.xpose.msra.mxu0 0
      %2396 = vmatprep.subr.bf16.mxu0 0
      %2397 = vmatpush1.bf16.xpose.msra.mxu0 0
      %2398 = vmatprep.subr.bf16.mxu0 0
      %2399 = vmatpush1.bf16.xpose.msra.mxu0 0
      %2400 = vmatprep.subr.bf16.mxu0 0
      %2401 = vmatpush1.bf16.xpose.msra.mxu0 0
      %2402 = vmatprep.subr.bf16.mxu0 0
      %2403 = vmatpush1.bf16.xpose.msra.mxu0 0
      %2404 = vmatprep.subr.bf16.mxu0 0
      %2405 = vmatpush1.bf16.xpose.msra.mxu0 0
      %2406 = vmatprep.subr.bf16.mxu0 0
      %2407 = vmatpush1.bf16.xpose.msra.mxu0 0
      %2408 = vmatprep.subr.bf16.mxu0 0
      %2409 = vmatpush1.bf16.xpose.msra.mxu0 0
      %2410 = vmatprep.subr.bf16.mxu0 0
      %2411 = vmatpush1.bf16.xpose.msra.mxu0 0
      %2412 = vmatprep.subr.bf16.mxu0 0
      %2413 = vmatpush1.bf16.xpose.msra.mxu0 0
      %2414 = vmatprep.mubr.bf16.mxu0 0
      %2415 = vmatmul.mubr.bf16.gmra.mrb[0].mxu0 %v2377
      %v2416 = vpop.f32.mrb[0].mxu0
      %v2417 = vadd.f32 0.0, %v2416
      %v2418 = vpop.f32.mrb[0].mxu0
      %v2419 = vpop.f32.mrb[0].mxu0
      %v2420 = vpop.f32.mrb[0].mxu0
      %2421 = vdwg.mxu0
      %v2422 = vmul.f32 %v2417, 0.35355338
      %v2423 = vadd.f32 %v2422, %v2160
      %v2424 = vsel %vm1501, %v2423, -inf
      %2425 = vmax.xlane.f32.xlu0 %v2424
      %v2426 = vpop.xlane.xlu0 %2425
      %v2427 = vsub.f32 %v2423, %v2426
      %v2428 = vmul.f32 %v2427, 1.442695
      %v2429 = vpow.pop %v2428
      %v2430 = vsel %vm1501, %v2429, 0.0
      %2431 = vadd.xlane.f32.xlu0 %v2430
      %v2432 = vpop.xlane.xlu0 %2431
      %v2433 = vrcp.pop %v2432
      %v2434 = vmul.f32 %v2429, %v2433
      %v2435 = vmul.f32 %v2434, %v2158
      %v2436 = vpack.c.bf16 %v2435, %v2435
      %2437 = vrot.lane.b32.xlu0 %v2257, 56
      %v2438 = vpop.permute.xlu0 %2437
      %v2440 = vsel %vm1501, %v2436, 0
      %v2443 = vsel %vm1568, %v2438, 0
      %2445 = vmatprep.subr.bf16.mxu0 0
      %2446 = vmatpush1.bf16.msra.mxu0 %v2443
      %2447 = vmatprep.subr.bf16.mxu0 0
      %2448 = vmatpush1.bf16.msra.mxu0 0
      %2449 = vmatprep.subr.bf16.mxu0 0
      %2450 = vmatpush1.bf16.msra.mxu0 0
      %2451 = vmatprep.subr.bf16.mxu0 0
      %2452 = vmatpush1.bf16.msra.mxu0 0
      %2453 = vmatprep.subr.bf16.mxu0 0
      %2454 = vmatpush1.bf16.msra.mxu0 0
      %2455 = vmatprep.subr.bf16.mxu0 0
      %2456 = vmatpush1.bf16.msra.mxu0 0
      %2457 = vmatprep.subr.bf16.mxu0 0
      %2458 = vmatpush1.bf16.msra.mxu0 0
      %2459 = vmatprep.subr.bf16.mxu0 0
      %2460 = vmatpush1.bf16.msra.mxu0 0
      %2461 = vmatprep.subr.bf16.mxu0 0
      %2462 = vmatpush1.bf16.msra.mxu0 0
      %2463 = vmatprep.subr.bf16.mxu0 0
      %2464 = vmatpush1.bf16.msra.mxu0 0
      %2465 = vmatprep.subr.bf16.mxu0 0
      %2466 = vmatpush1.bf16.msra.mxu0 0
      %2467 = vmatprep.subr.bf16.mxu0 0
      %2468 = vmatpush1.bf16.msra.mxu0 0
      %2469 = vmatprep.subr.bf16.mxu0 0
      %2470 = vmatpush1.bf16.msra.mxu0 0
      %2471 = vmatprep.subr.bf16.mxu0 0
      %2472 = vmatpush1.bf16.msra.mxu0 0
      %2473 = vmatprep.subr.bf16.mxu0 0
      %2474 = vmatpush1.bf16.msra.mxu0 0
      %2475 = vmatprep.subr.bf16.mxu0 0
      %2476 = vmatpush1.bf16.msra.mxu0 0
      %2477 = vmatprep.mubr.bf16.mxu0 0
      %2478 = vmatmul.mubr.bf16.gmra.mrb[0].mxu0 %v2440
      %v2479 = vpop.f32.mrb[0].mxu0
      %v2480 = vadd.f32 0.0, %v2479
      %v2481 = vpop.f32.mrb[0].mxu0
      %v2482 = vpop.f32.mrb[0].mxu0
      %v2483 = vpop.f32.mrb[0].mxu0
      %2484 = vdwg.mxu0
      %v2485 = vpack.c.bf16 %v2480, %v2480
      %v2486 = vld [vmem:[%s1234 + $0x4] sm:$0xf]
      %v2488 = vsel %vm1501, %v2485, 0
      %v2491 = vsel %vm1568, %v2486, 0
      %2493 = vmatprep.subr.bf16.mxu0 0
      %2494 = vmatpush1.bf16.msra.mxu0 %v2491
      %2495 = vmatprep.subr.bf16.mxu0 0
      %2496 = vmatpush1.bf16.msra.mxu0 0
      %2497 = vmatprep.subr.bf16.mxu0 0
      %2498 = vmatpush1.bf16.msra.mxu0 0
      %2499 = vmatprep.subr.bf16.mxu0 0
      %2500 = vmatpush1.bf16.msra.mxu0 0
      %2501 = vmatprep.subr.bf16.mxu0 0
      %2502 = vmatpush1.bf16.msra.mxu0 0
      %2503 = vmatprep.subr.bf16.mxu0 0
      %2504 = vmatpush1.bf16.msra.mxu0 0
      %2505 = vmatprep.subr.bf16.mxu0 0
      %2506 = vmatpush1.bf16.msra.mxu0 0
      %2507 = vmatprep.subr.bf16.mxu0 0
      %2508 = vmatpush1.bf16.msra.mxu0 0
      %2509 = vmatprep.subr.bf16.mxu0 0
      %2510 = vmatpush1.bf16.msra.mxu0 0
      %2511 = vmatprep.subr.bf16.mxu0 0
      %2512 = vmatpush1.bf16.msra.mxu0 0
      %2513 = vmatprep.subr.bf16.mxu0 0
      %2514 = vmatpush1.bf16.msra.mxu0 0
      %2515 = vmatprep.subr.bf16.mxu0 0
      %2516 = vmatpush1.bf16.msra.mxu0 0
      %2517 = vmatprep.subr.bf16.mxu0 0
      %2518 = vmatpush1.bf16.msra.mxu0 0
      %2519 = vmatprep.subr.bf16.mxu0 0
      %2520 = vmatpush1.bf16.msra.mxu0 0
      %2521 = vmatprep.subr.bf16.mxu0 0
      %2522 = vmatpush1.bf16.msra.mxu0 0
      %2523 = vmatprep.subr.bf16.mxu0 0
      %2524 = vmatpush1.bf16.msra.mxu0 0
      %2525 = vmatprep.mubr.bf16.mxu0 0
      %2526 = vmatmul.mubr.bf16.gmra.mrb[0].mxu0 %v2488
      %v2527 = vpop.f32.mrb[0].mxu0
      %v2528 = vadd.f32 0.0, %v2527
      %v2529 = vpop.f32.mrb[0].mxu0
      %v2530 = vpop.f32.mrb[0].mxu0
      %v2531 = vpop.f32.mrb[0].mxu0
      %2532 = vdwg.mxu0
      %v2534 = vsel %vm1501, %v2370, 0
      %v2537 = vsel %vm1568, %v2371, 0
      %2539 = vmatprep.subr.bf16.mxu0 0
      %2540 = vmatpush1.bf16.msra.mxu0 %v2537
      %2541 = vmatprep.subr.bf16.mxu0 0
      %2542 = vmatpush1.bf16.msra.mxu0 0
      %2543 = vmatprep.subr.bf16.mxu0 0
      %2544 = vmatpush1.bf16.msra.mxu0 0
      %2545 = vmatprep.subr.bf16.mxu0 0
      %2546 = vmatpush1.bf16.msra.mxu0 0
      %2547 = vmatprep.subr.bf16.mxu0 0
      %2548 = vmatpush1.bf16.msra.mxu0 0
      %2549 = vmatprep.subr.bf16.mxu0 0
      %2550 = vmatpush1.bf16.msra.mxu0 0
      %2551 = vmatprep.subr.bf16.mxu0 0
      %2552 = vmatpush1.bf16.msra.mxu0 0
      %2553 = vmatprep.subr.bf16.mxu0 0
      %2554 = vmatpush1.bf16.msra.mxu0 0
      %2555 = vmatprep.subr.bf16.mxu0 0
      %2556 = vmatpush1.bf16.msra.mxu0 0
      %2557 = vmatprep.subr.bf16.mxu0 0
      %2558 = vmatpush1.bf16.msra.mxu0 0
      %2559 = vmatprep.subr.bf16.mxu0 0
      %2560 = vmatpush1.bf16.msra.mxu0 0
      %2561 = vmatprep.subr.bf16.mxu0 0
      %2562 = vmatpush1.bf16.msra.mxu0 0
      %2563 = vmatprep.subr.bf16.mxu0 0
      %2564 = vmatpush1.bf16.msra.mxu0 0
      %2565 = vmatprep.subr.bf16.mxu0 0
      %2566 = vmatpush1.bf16.msra.mxu0 0
      %2567 = vmatprep.subr.bf16.mxu0 0
      %2568 = vmatpush1.bf16.msra.mxu0 0
      %2569 = vmatprep.subr.bf16.mxu0 0
      %2570 = vmatpush1.bf16.msra.mxu0 0
      %2571 = vmatprep.mubr.bf16.mxu0 0
      %2572 = vmatmul.mubr.bf16.gmra.mrb[0].mxu0 %v2534
      %v2573 = vpop.f32.mrb[0].mxu0
      %v2574 = vadd.f32 %v2528, %v2573
      %v2575 = vpop.f32.mrb[0].mxu0
      %v2576 = vpop.f32.mrb[0].mxu0
      %v2577 = vpop.f32.mrb[0].mxu0
      %2578 = vdwg.mxu0
      %2579 = vrot.lane.b32.xlu0 %v2257, 112
      %v2580 = vpop.permute.xlu0 %2579
      %2581 = vrot.lane.b32.xlu0 %v2257, 80
      %v2582 = vpop.permute.xlu0 %2581
      %v2584 = vsel %vm1501, %v2580, 0
      %v2587 = vsel %vm1501, %v2582, 0
      %2589 = vmatprep.subr.bf16.mxu0 0
      %2590 = vmatpush1.bf16.xpose.msra.mxu0 %v2587
      %2591 = vmatprep.subr.bf16.mxu0 0
      %2592 = vmatpush1.bf16.xpose.msra.mxu0 0
      %2593 = vmatprep.subr.bf16.mxu0 0
      %2594 = vmatpush1.bf16.xpose.msra.mxu0 0
      %2595 = vmatprep.subr.bf16.mxu0 0
      %2596 = vmatpush1.bf16.xpose.msra.mxu0 0
      %2597 = vmatprep.subr.bf16.mxu0 0
      %2598 = vmatpush1.bf16.xpose.msra.mxu0 0
      %2599 = vmatprep.subr.bf16.mxu0 0
      %2600 = vmatpush1.bf16.xpose.msra.mxu0 0
      %2601 = vmatprep.subr.bf16.mxu0 0
      %2602 = vmatpush1.bf16.xpose.msra.mxu0 0
      %2603 = vmatprep.subr.bf16.mxu0 0
      %2604 = vmatpush1.bf16.xpose.msra.mxu0 0
      %2605 = vmatprep.subr.bf16.mxu0 0
      %2606 = vmatpush1.bf16.xpose.msra.mxu0 0
      %2607 = vmatprep.subr.bf16.mxu0 0
      %2608 = vmatpush1.bf16.xpose.msra.mxu0 0
      %2609 = vmatprep.subr.bf16.mxu0 0
      %2610 = vmatpush1.bf16.xpose.msra.mxu0 0
      %2611 = vmatprep.subr.bf16.mxu0 0
      %2612 = vmatpush1.bf16.xpose.msra.mxu0 0
      %2613 = vmatprep.subr.bf16.mxu0 0
      %2614 = vmatpush1.bf16.xpose.msra.mxu0 0
      %2615 = vmatprep.subr.bf16.mxu0 0
      %2616 = vmatpush1.bf16.xpose.msra.mxu0 0
      %2617 = vmatprep.subr.bf16.mxu0 0
      %2618 = vmatpush1.bf16.xpose.msra.mxu0 0
      %2619 = vmatprep.subr.bf16.mxu0 0
      %2620 = vmatpush1.bf16.xpose.msra.mxu0 0
      %2621 = vmatprep.mubr.bf16.mxu0 0
      %2622 = vmatmul.mubr.bf16.gmra.mrb[0].mxu0 %v2584
      %v2623 = vpop.f32.mrb[0].mxu0
      %v2624 = vadd.f32 0.0, %v2623
      %v2625 = vpop.f32.mrb[0].mxu0
      %v2626 = vpop.f32.mrb[0].mxu0
      %v2627 = vpop.f32.mrb[0].mxu0
      %2628 = vdwg.mxu0
      %v2629 = vmul.f32 %v2624, 0.35355338
      %v2630 = vadd.f32 %v2629, %v2160
      %v2631 = vsel %vm1501, %v2630, -inf
      %2632 = vmax.xlane.f32.xlu0 %v2631
      %v2633 = vpop.xlane.xlu0 %2632
      %v2634 = vsub.f32 %v2630, %v2633
      %v2635 = vmul.f32 %v2634, 1.442695
      %v2636 = vpow.pop %v2635
      %v2637 = vsel %vm1501, %v2636, 0.0
      %2638 = vadd.xlane.f32.xlu0 %v2637
      %v2639 = vpop.xlane.xlu0 %2638
      %v2640 = vrcp.pop %v2639
      %v2641 = vmul.f32 %v2636, %v2640
      %v2642 = vmul.f32 %v2641, %v2158
      %v2643 = vpack.c.bf16 %v2642, %v2642
      %2644 = vrot.lane.b32.xlu0 %v2257, 48
      %v2645 = vpop.permute.xlu0 %2644
      %v2647 = vsel %vm1501, %v2643, 0
      %v2650 = vsel %vm1568, %v2645, 0
      %2652 = vmatprep.subr.bf16.mxu0 0
      %2653 = vmatpush1.bf16.msra.mxu0 %v2650
      %2654 = vmatprep.subr.bf16.mxu0 0
      %2655 = vmatpush1.bf16.msra.mxu0 0
      %2656 = vmatprep.subr.bf16.mxu0 0
      %2657 = vmatpush1.bf16.msra.mxu0 0
      %2658 = vmatprep.subr.bf16.mxu0 0
      %2659 = vmatpush1.bf16.msra.mxu0 0
      %2660 = vmatprep.subr.bf16.mxu0 0
      %2661 = vmatpush1.bf16.msra.mxu0 0
      %2662 = vmatprep.subr.bf16.mxu0 0
      %2663 = vmatpush1.bf16.msra.mxu0 0
      %2664 = vmatprep.subr.bf16.mxu0 0
      %2665 = vmatpush1.bf16.msra.mxu0 0
      %2666 = vmatprep.subr.bf16.mxu0 0
      %2667 = vmatpush1.bf16.msra.mxu0 0
      %2668 = vmatprep.subr.bf16.mxu0 0
      %2669 = vmatpush1.bf16.msra.mxu0 0
      %2670 = vmatprep.subr.bf16.mxu0 0
      %2671 = vmatpush1.bf16.msra.mxu0 0
      %2672 = vmatprep.subr.bf16.mxu0 0
      %2673 = vmatpush1.bf16.msra.mxu0 0
      %2674 = vmatprep.subr.bf16.mxu0 0
      %2675 = vmatpush1.bf16.msra.mxu0 0
      %2676 = vmatprep.subr.bf16.mxu0 0
      %2677 = vmatpush1.bf16.msra.mxu0 0
      %2678 = vmatprep.subr.bf16.mxu0 0
      %2679 = vmatpush1.bf16.msra.mxu0 0
      %2680 = vmatprep.subr.bf16.mxu0 0
      %2681 = vmatpush1.bf16.msra.mxu0 0
      %2682 = vmatprep.subr.bf16.mxu0 0
      %2683 = vmatpush1.bf16.msra.mxu0 0
      %2684 = vmatprep.mubr.bf16.mxu0 0
      %2685 = vmatmul.mubr.bf16.gmra.mrb[0].mxu0 %v2647
      %v2686 = vpop.f32.mrb[0].mxu0
      %v2687 = vadd.f32 0.0, %v2686
      %v2688 = vpop.f32.mrb[0].mxu0
      %v2689 = vpop.f32.mrb[0].mxu0
      %v2690 = vpop.f32.mrb[0].mxu0
      %2691 = vdwg.mxu0
      %v2692 = vpack.c.bf16 %v2687, %v2687
      %v2693 = vld [vmem:[%s1234 + $0x8] sm:$0xf]
      %v2695 = vsel %vm1501, %v2692, 0
      %v2698 = vsel %vm1568, %v2693, 0
      %2700 = vmatprep.subr.bf16.mxu0 0
      %2701 = vmatpush1.bf16.msra.mxu0 %v2698
      %2702 = vmatprep.subr.bf16.mxu0 0
      %2703 = vmatpush1.bf16.msra.mxu0 0
      %2704 = vmatprep.subr.bf16.mxu0 0
      %2705 = vmatpush1.bf16.msra.mxu0 0
      %2706 = vmatprep.subr.bf16.mxu0 0
      %2707 = vmatpush1.bf16.msra.mxu0 0
      %2708 = vmatprep.subr.bf16.mxu0 0
      %2709 = vmatpush1.bf16.msra.mxu0 0
      %2710 = vmatprep.subr.bf16.mxu0 0
      %2711 = vmatpush1.bf16.msra.mxu0 0
      %2712 = vmatprep.subr.bf16.mxu0 0
      %2713 = vmatpush1.bf16.msra.mxu0 0
      %2714 = vmatprep.subr.bf16.mxu0 0
      %2715 = vmatpush1.bf16.msra.mxu0 0
      %2716 = vmatprep.subr.bf16.mxu0 0
      %2717 = vmatpush1.bf16.msra.mxu0 0
      %2718 = vmatprep.subr.bf16.mxu0 0
      %2719 = vmatpush1.bf16.msra.mxu0 0
      %2720 = vmatprep.subr.bf16.mxu0 0
      %2721 = vmatpush1.bf16.msra.mxu0 0
      %2722 = vmatprep.subr.bf16.mxu0 0
      %2723 = vmatpush1.bf16.msra.mxu0 0
      %2724 = vmatprep.subr.bf16.mxu0 0
      %2725 = vmatpush1.bf16.msra.mxu0 0
      %2726 = vmatprep.subr.bf16.mxu0 0
      %2727 = vmatpush1.bf16.msra.mxu0 0
      %2728 = vmatprep.subr.bf16.mxu0 0
      %2729 = vmatpush1.bf16.msra.mxu0 0
      %2730 = vmatprep.subr.bf16.mxu0 0
      %2731 = vmatpush1.bf16.msra.mxu0 0
      %2732 = vmatprep.mubr.bf16.mxu0 0
      %2733 = vmatmul.mubr.bf16.gmra.mrb[0].mxu0 %v2695
      %v2734 = vpop.f32.mrb[0].mxu0
      %v2735 = vadd.f32 0.0, %v2734
      %v2736 = vpop.f32.mrb[0].mxu0
      %v2737 = vpop.f32.mrb[0].mxu0
      %v2738 = vpop.f32.mrb[0].mxu0
      %2739 = vdwg.mxu0
      %v2740 = vadd.f32 %v2574, %v2735
      %2741 = vrot.lane.b32.xlu0 %v2257, 104
      %v2742 = vpop.permute.xlu0 %2741
      %2743 = vrot.lane.b32.xlu0 %v2257, 72
      %v2744 = vpop.permute.xlu0 %2743
      %v2746 = vsel %vm1501, %v2742, 0
      %v2749 = vsel %vm1501, %v2744, 0
      %2751 = vmatprep.subr.bf16.mxu0 0
      %2752 = vmatpush1.bf16.xpose.msra.mxu0 %v2749
      %2753 = vmatprep.subr.bf16.mxu0 0
      %2754 = vmatpush1.bf16.xpose.msra.mxu0 0
      %2755 = vmatprep.subr.bf16.mxu0 0
      %2756 = vmatpush1.bf16.xpose.msra.mxu0 0
      %2757 = vmatprep.subr.bf16.mxu0 0
      %2758 = vmatpush1.bf16.xpose.msra.mxu0 0
      %2759 = vmatprep.subr.bf16.mxu0 0
      %2760 = vmatpush1.bf16.xpose.msra.mxu0 0
      %2761 = vmatprep.subr.bf16.mxu0 0
      %2762 = vmatpush1.bf16.xpose.msra.mxu0 0
      %2763 = vmatprep.subr.bf16.mxu0 0
      %2764 = vmatpush1.bf16.xpose.msra.mxu0 0
      %2765 = vmatprep.subr.bf16.mxu0 0
      %2766 = vmatpush1.bf16.xpose.msra.mxu0 0
      %2767 = vmatprep.subr.bf16.mxu0 0
      %2768 = vmatpush1.bf16.xpose.msra.mxu0 0
      %2769 = vmatprep.subr.bf16.mxu0 0
      %2770 = vmatpush1.bf16.xpose.msra.mxu0 0
      %2771 = vmatprep.subr.bf16.mxu0 0
      %2772 = vmatpush1.bf16.xpose.msra.mxu0 0
      %2773 = vmatprep.subr.bf16.mxu0 0
      %2774 = vmatpush1.bf16.xpose.msra.mxu0 0
      %2775 = vmatprep.subr.bf16.mxu0 0
      %2776 = vmatpush1.bf16.xpose.msra.mxu0 0
      %2777 = vmatprep.subr.bf16.mxu0 0
      %2778 = vmatpush1.bf16.xpose.msra.mxu0 0
      %2779 = vmatprep.subr.bf16.mxu0 0
      %2780 = vmatpush1.bf16.xpose.msra.mxu0 0
      %2781 = vmatprep.subr.bf16.mxu0 0
      %2782 = vmatpush1.bf16.xpose.msra.mxu0 0
      %2783 = vmatprep.mubr.bf16.mxu0 0
      %2784 = vmatmul.mubr.bf16.gmra.mrb[0].mxu0 %v2746
      %v2785 = vpop.f32.mrb[0].mxu0
      %v2786 = vadd.f32 0.0, %v2785
      %v2787 = vpop.f32.mrb[0].mxu0
      %v2788 = vpop.f32.mrb[0].mxu0
      %v2789 = vpop.f32.mrb[0].mxu0
      %2790 = vdwg.mxu0
      %v2791 = vmul.f32 %v2786, 0.35355338
      %v2792 = vadd.f32 %v2791, %v2160
      %v2793 = vsel %vm1501, %v2792, -inf
      %2794 = vmax.xlane.f32.xlu0 %v2793
      %v2795 = vpop.xlane.xlu0 %2794
      %v2796 = vsub.f32 %v2792, %v2795
      %v2797 = vmul.f32 %v2796, 1.442695
      %v2798 = vpow.pop %v2797
      %v2799 = vsel %vm1501, %v2798, 0.0
      %2800 = vadd.xlane.f32.xlu0 %v2799
      %v2801 = vpop.xlane.xlu0 %2800
      %v2802 = vrcp.pop %v2801
      %v2803 = vmul.f32 %v2798, %v2802
      %v2804 = vmul.f32 %v2803, %v2158
      %v2805 = vpack.c.bf16 %v2804, %v2804
      %2806 = vrot.lane.b32.xlu0 %v2257, 40
      %v2807 = vpop.permute.xlu0 %2806
      %v2809 = vsel %vm1501, %v2805, 0
      %v2812 = vsel %vm1568, %v2807, 0
      %2814 = vmatprep.subr.bf16.mxu0 0
      %2815 = vmatpush1.bf16.msra.mxu0 %v2812
      %2816 = vmatprep.subr.bf16.mxu0 0
      %2817 = vmatpush1.bf16.msra.mxu0 0
      %2818 = vmatprep.subr.bf16.mxu0 0
      %2819 = vmatpush1.bf16.msra.mxu0 0
      %2820 = vmatprep.subr.bf16.mxu0 0
      %2821 = vmatpush1.bf16.msra.mxu0 0
      %2822 = vmatprep.subr.bf16.mxu0 0
      %2823 = vmatpush1.bf16.msra.mxu0 0
      %2824 = vmatprep.subr.bf16.mxu0 0
      %2825 = vmatpush1.bf16.msra.mxu0 0
      %2826 = vmatprep.subr.bf16.mxu0 0
      %2827 = vmatpush1.bf16.msra.mxu0 0
      %2828 = vmatprep.subr.bf16.mxu0 0
      %2829 = vmatpush1.bf16.msra.mxu0 0
      %2830 = vmatprep.subr.bf16.mxu0 0
      %2831 = vmatpush1.bf16.msra.mxu0 0
      %2832 = vmatprep.subr.bf16.mxu0 0
      %2833 = vmatpush1.bf16.msra.mxu0 0
      %2834 = vmatprep.subr.bf16.mxu0 0
      %2835 = vmatpush1.bf16.msra.mxu0 0
      %2836 = vmatprep.subr.bf16.mxu0 0
      %2837 = vmatpush1.bf16.msra.mxu0 0
      %2838 = vmatprep.subr.bf16.mxu0 0
      %2839 = vmatpush1.bf16.msra.mxu0 0
      %2840 = vmatprep.subr.bf16.mxu0 0
      %2841 = vmatpush1.bf16.msra.mxu0 0
      %2842 = vmatprep.subr.bf16.mxu0 0
      %2843 = vmatpush1.bf16.msra.mxu0 0
      %2844 = vmatprep.subr.bf16.mxu0 0
      %2845 = vmatpush1.bf16.msra.mxu0 0
      %2846 = vmatprep.mubr.bf16.mxu0 0
      %2847 = vmatmul.mubr.bf16.gmra.mrb[0].mxu0 %v2809
      %v2848 = vpop.f32.mrb[0].mxu0
      %v2849 = vadd.f32 0.0, %v2848
      %v2850 = vpop.f32.mrb[0].mxu0
      %v2851 = vpop.f32.mrb[0].mxu0
      %v2852 = vpop.f32.mrb[0].mxu0
      %2853 = vdwg.mxu0
      %v2854 = vpack.c.bf16 %v2849, %v2849
      %v2855 = vld [vmem:[%s1234 + $0xc] sm:$0xf]
      %v2857 = vsel %vm1501, %v2854, 0
      %v2860 = vsel %vm1568, %v2855, 0
      %2862 = vmatprep.subr.bf16.mxu0 0
      %2863 = vmatpush1.bf16.msra.mxu0 %v2860
      %2864 = vmatprep.subr.bf16.mxu0 0
      %2865 = vmatpush1.bf16.msra.mxu0 0
      %2866 = vmatprep.subr.bf16.mxu0 0
      %2867 = vmatpush1.bf16.msra.mxu0 0
      %2868 = vmatprep.subr.bf16.mxu0 0
      %2869 = vmatpush1.bf16.msra.mxu0 0
      %2870 = vmatprep.subr.bf16.mxu0 0
      %2871 = vmatpush1.bf16.msra.mxu0 0
      %2872 = vmatprep.subr.bf16.mxu0 0
      %2873 = vmatpush1.bf16.msra.mxu0 0
      %2874 = vmatprep.subr.bf16.mxu0 0
      %2875 = vmatpush1.bf16.msra.mxu0 0
      %2876 = vmatprep.subr.bf16.mxu0 0
      %2877 = vmatpush1.bf16.msra.mxu0 0
      %2878 = vmatprep.subr.bf16.mxu0 0
      %2879 = vmatpush1.bf16.msra.mxu0 0
      %2880 = vmatprep.subr.bf16.mxu0 0
      %2881 = vmatpush1.bf16.msra.mxu0 0
      %2882 = vmatprep.subr.bf16.mxu0 0
      %2883 = vmatpush1.bf16.msra.mxu0 0
      %2884 = vmatprep.subr.bf16.mxu0 0
      %2885 = vmatpush1.bf16.msra.mxu0 0
      %2886 = vmatprep.subr.bf16.mxu0 0
      %2887 = vmatpush1.bf16.msra.mxu0 0
      %2888 = vmatprep.subr.bf16.mxu0 0
      %2889 = vmatpush1.bf16.msra.mxu0 0
      %2890 = vmatprep.subr.bf16.mxu0 0
      %2891 = vmatpush1.bf16.msra.mxu0 0
      %2892 = vmatprep.subr.bf16.mxu0 0
      %2893 = vmatpush1.bf16.msra.mxu0 0
      %2894 = vmatprep.mubr.bf16.mxu0 0
      %2895 = vmatmul.mubr.bf16.gmra.mrb[0].mxu0 %v2857
      %v2896 = vpop.f32.mrb[0].mxu0
      %v2897 = vadd.f32 0.0, %v2896
      %v2898 = vpop.f32.mrb[0].mxu0
      %v2899 = vpop.f32.mrb[0].mxu0
      %v2900 = vpop.f32.mrb[0].mxu0
      %2901 = vdwg.mxu0
      %v2902 = vadd.f32 %v2740, %v2897
      %v2903 = vadd.f32 %v2156, %v2902
      %v2904 = vld [vmem:[%s1253] sm:$0x1]
      %v2906 = vlaneseq
      %v2907 = vshrl.u32 %v2906, 7
      %v2908 = vsub.s32 0, %v2907
      %v2909 = vrot.slane %v2904, %v2908
      %v2911 = vadd.f32 %v2903, %v2909
      %2912 = vst.msk [vmem:[%s2155] sm:$0xff] %vm1401, %v2911
      %v2913 = vld [vmem:[%s1384] sm:$0xff]
      %v2914 = vld [vmem:[%s1384 + $0x8] sm:$0xff]
      %v2915 = vld [vmem:[%s1272] sm:$0x1]
      %v2916 = vld [vmem:[%s1291] sm:$0x1]
      %v2917 = vsel %vm1401, %v2913, 0.0
      %2918 = vadd.xlane.f32.xlu0 %v2917
      %v2919 = vpop.xlane.xlu0 %2918
      %v2920 = vsel %vm1401, %v2914, 0.0
      %2921 = vadd.xlane.f32.xlu0 %v2920
      %v2922 = vpop.xlane.xlu0 %2921
      %v2923 = vmul.f32 %v2919, %v1405
      %v2924 = vmul.f32 %v2922, %v1405
      %v2925 = vsub.f32 %v2913, %v2923
      %v2926 = vsub.f32 %v2914, %v2924
      %v2927 = vmul.f32 %v2925, %v2925
      %v2928 = vmul.f32 %v2926, %v2926
      %v2929 = vsel %vm1401, %v2927, 0.0
      %2930 = vadd.xlane.f32.xlu0 %v2929
      %v2931 = vpop.xlane.xlu0 %2930
      %v2932 = vsel %vm1401, %v2928, 0.0
      %2933 = vadd.xlane.f32.xlu0 %v2932
      %v2934 = vpop.xlane.xlu0 %2933
      %v2935 = vmul.f32 %v2931, %v1405
      %v2936 = vmul.f32 %v2934, %v1405
      %v2937 = vadd.f32 %v2935, 1e-12
      %v2938 = vadd.f32 %v2936, 1e-12
      %v2939 = vrsqrt.pop %v2937
      %v2940 = vrsqrt.pop %v2938
      %v2941 = vmul.f32 %v2925, %v2939
      %v2942 = vmul.f32 %v2926, %v2940
      %v2944 = vlaneseq
      %v2945 = vshrl.u32 %v2944, 7
      %v2946 = vsub.s32 0, %v2945
      %v2947 = vrot.slane %v2915, %v2946
      %v2949 = vmul.f32 %v2941, %v2947
      %v2950 = vmul.f32 %v2942, %v2947
      %v2952 = vlaneseq
      %v2953 = vshrl.u32 %v2952, 7
      %v2954 = vsub.s32 0, %v2953
      %v2955 = vrot.slane %v2916, %v2954
      %v2957 = vadd.f32 %v2949, %v2955
      %v2958 = vadd.f32 %v2950, %v2955
      %v2959 = vpack.c.bf16 %v2958, %v2957
      %v2960 = vld [vmem:[%s1312] sm:$0xf]
      %v2961 = vld [vmem:[%s1312 + $0x4] sm:$0xf]
      %v2962 = vld [vmem:[%s1312 + $0x8] sm:$0xf]
      %v2963 = vld [vmem:[%s1312 + $0xc] sm:$0xf]
      %v2964 = vld [vmem:[%s1331] sm:$0x1]
      %v2966 = vlaneseq
      %v2967 = vshrl.u32 %v2966, 7
      %v2968 = vsub.s32 0, %v2967
      %v2969 = vrot.slane %v2964, %v2968
      %v2975 = vunpack.c.l.b16 %v2960
      %v2976 = vunpack.c.l.b16 %v2961
      %v2977 = vunpack.c.l.b16 %v2962
      %v2978 = vunpack.c.l.b16 %v2963
      %v2979 = vpack.c.b16 %v2976, %v2975
      %v2980 = vpack.c.b16 %v2978, %v2977
      %v2984 = vsel %vm1401, %v2959, 0
      %2986 = vmatprep.subr.bf16.mxu0 0
      %2987 = vmatpush1.bf16.msra.mxu0 %v2979
      %2988 = vmatprep.subr.bf16.mxu0 0
      %2989 = vmatpush1.bf16.msra.mxu0 %v2980
      %2990 = vmatprep.subr.bf16.mxu0 0
      %2991 = vmatpush1.bf16.msra.mxu0 0
      %2992 = vmatprep.subr.bf16.mxu0 0
      %2993 = vmatpush1.bf16.msra.mxu0 0
      %2994 = vmatprep.subr.bf16.mxu0 0
      %2995 = vmatpush1.bf16.msra.mxu0 0
      %2996 = vmatprep.subr.bf16.mxu0 0
      %2997 = vmatpush1.bf16.msra.mxu0 0
      %2998 = vmatprep.subr.bf16.mxu0 0
      %2999 = vmatpush1.bf16.msra.mxu0 0
      %3000 = vmatprep.subr.bf16.mxu0 0
      %3001 = vmatpush1.bf16.msra.mxu0 0
      %3002 = vmatprep.subr.bf16.mxu0 0
      %3003 = vmatpush1.bf16.msra.mxu0 0
      %3004 = vmatprep.subr.bf16.mxu0 0
      %3005 = vmatpush1.bf16.msra.mxu0 0
      %3006 = vmatprep.subr.bf16.mxu0 0
      %3007 = vmatpush1.bf16.msra.mxu0 0
      %3008 = vmatprep.subr.bf16.mxu0 0
      %3009 = vmatpush1.bf16.msra.mxu0 0
      %3010 = vmatprep.subr.bf16.mxu0 0
      %3011 = vmatpush1.bf16.msra.mxu0 0
      %3012 = vmatprep.subr.bf16.mxu0 0
      %3013 = vmatpush1.bf16.msra.mxu0 0
      %3014 = vmatprep.subr.bf16.mxu0 0
      %3015 = vmatpush1.bf16.msra.mxu0 0
      %3016 = vmatprep.subr.bf16.mxu0 0
      %3017 = vmatpush1.bf16.msra.mxu0 0
      %3018 = vmatprep.mubr.bf16.mxu0 0
      %3019 = vmatmul.mubr.bf16.gmra.mrb[0].mxu0 %v2984
      %v3020 = vpop.f32.mrb[0].mxu0
      %v3021 = vadd.f32 %v2969, %v3020
      %v3022 = vpop.f32.mrb[0].mxu0
      %v3023 = vpop.f32.mrb[0].mxu0
      %v3024 = vadd.f32 %v2969, %v3023
      %v3025 = vpop.f32.mrb[0].mxu0
      %3026 = vdwg.mxu0
      %v3027 = vmax.f32 %v3021, 0.0
      %v3028 = vmax.f32 %v3024, 0.0
      %v3029 = vpack.c.bf16 %v3028, %v3027
      %v3030 = vld [vmem:[%s1352] sm:$0xf]
      %v3031 = vld [vmem:[%s1352 + $0x4] sm:$0xf]
      %v3032 = vld [vmem:[%s1352 + $0x8] sm:$0xf]
      %v3033 = vld [vmem:[%s1352 + $0xc] sm:$0xf]
      %v3034 = vld [vmem:[%s1352 + $0x10] sm:$0xf]
      %v3035 = vld [vmem:[%s1352 + $0x14] sm:$0xf]
      %v3036 = vld [vmem:[%s1352 + $0x18] sm:$0xf]
      %v3037 = vld [vmem:[%s1352 + $0x1c] sm:$0xf]
      %v3038 = vld [vmem:[%s1371] sm:$0x1]
      %v3040 = vlaneseq
      %v3041 = vshrl.u32 %v3040, 7
      %v3042 = vsub.s32 0, %v3041
      %v3043 = vrot.slane %v3038, %v3042
      %v3053 = vunpack.c.l.b16 %v3030
      %v3054 = vunpack.c.l.b16 %v3031
      %v3055 = vunpack.c.l.b16 %v3032
      %v3056 = vunpack.c.l.b16 %v3033
      %v3057 = vunpack.c.l.b16 %v3034
      %v3058 = vunpack.c.l.b16 %v3035
      %v3059 = vunpack.c.l.b16 %v3036
      %v3060 = vunpack.c.l.b16 %v3037
      %v3061 = vpack.c.b16 %v3054, %v3053
      %v3062 = vpack.c.b16 %v3056, %v3055
      %v3063 = vpack.c.b16 %v3058, %v3057
      %v3064 = vpack.c.b16 %v3060, %v3059
      %vm3069 = vcmask 523264
      %v3071 = vsel %vm3069, %v3029, 0
      %3073 = vmatprep.subr.bf16.mxu0 0
      %3074 = vmatpush1.bf16.msra.mxu0 %v3061
      %3075 = vmatprep.subr.bf16.mxu0 0
      %3076 = vmatpush1.bf16.msra.mxu0 %v3062
      %3077 = vmatprep.subr.bf16.mxu0 0
      %3078 = vmatpush1.bf16.msra.mxu0 %v3063
      %3079 = vmatprep.subr.bf16.mxu0 0
      %3080 = vmatpush1.bf16.msra.mxu0 %v3064
      %3081 = vmatprep.subr.bf16.mxu0 0
      %3082 = vmatpush1.bf16.msra.mxu0 0
      %3083 = vmatprep.subr.bf16.mxu0 0
      %3084 = vmatpush1.bf16.msra.mxu0 0
      %3085 = vmatprep.subr.bf16.mxu0 0
      %3086 = vmatpush1.bf16.msra.mxu0 0
      %3087 = vmatprep.subr.bf16.mxu0 0
      %3088 = vmatpush1.bf16.msra.mxu0 0
      %3089 = vmatprep.subr.bf16.mxu0 0
      %3090 = vmatpush1.bf16.msra.mxu0 0
      %3091 = vmatprep.subr.bf16.mxu0 0
      %3092 = vmatpush1.bf16.msra.mxu0 0
      %3093 = vmatprep.subr.bf16.mxu0 0
      %3094 = vmatpush1.bf16.msra.mxu0 0
      %3095 = vmatprep.subr.bf16.mxu0 0
      %3096 = vmatpush1.bf16.msra.mxu0 0
      %3097 = vmatprep.subr.bf16.mxu0 0
      %3098 = vmatpush1.bf16.msra.mxu0 0
      %3099 = vmatprep.subr.bf16.mxu0 0
      %3100 = vmatpush1.bf16.msra.mxu0 0
      %3101 = vmatprep.subr.bf16.mxu0 0
      %3102 = vmatpush1.bf16.msra.mxu0 0
      %3103 = vmatprep.subr.bf16.mxu0 0
      %3104 = vmatpush1.bf16.msra.mxu0 0
      %3105 = vmatprep.mubr.bf16.mxu0 0
      %3106 = vmatmul.mubr.bf16.gmra.mrb[0].mxu0 %v3071
      %v3107 = vpop.f32.mrb[0].mxu0
      %v3108 = vadd.f32 %v3043, %v3107
      %v3109 = vpop.f32.mrb[0].mxu0
      %v3110 = vpop.f32.mrb[0].mxu0
      %v3111 = vadd.f32 %v3043, %v3110
      %v3112 = vpop.f32.mrb[0].mxu0
      %3113 = vdwg.mxu0
      %v3114 = vadd.f32 %v2913, %v3108
      %v3115 = vadd.f32 %v2914, %v3111
      %3116 = vst.msk [vmem:[%s1384] sm:$0xff] %vm1401, %v3114
      %3117 = vst.msk [vmem:[%s1384 + $0x8] sm:$0xff] %vm1401, %v3115
      %p3118 = scmp.eq.s32.totalorder %s39, 3
      // Predicated region
      $region89: #{encoder_mix_forward.7} parent=83 // pred_check
        %p3119 = pneg %p3118
      $region90: #{encoder_mix_forward.7} parent=83 // pred_check_branch
        %3121 = sbr.rel (%p3119) target = $region92
      $region91: #{encoder_mix_forward.7} parent=83 // pred_region
        %v3122 = vld [vmem:[%s1384] sm:$0xff]
        %v3123 = vld [vmem:[%s1384 + $0x8] sm:$0xff]
        %v3124 = vld [vmem:[%s15] sm:$0x1]
        %v3125 = vld [vmem:[%s16] sm:$0x1]
        %v3126 = vsel %vm1401, %v3122, 0.0
        %3127 = vadd.xlane.f32.xlu0 %v3126
        %v3128 = vpop.xlane.xlu0 %3127
        %v3129 = vsel %vm1401, %v3123, 0.0
        %3130 = vadd.xlane.f32.xlu0 %v3129
        %v3131 = vpop.xlane.xlu0 %3130
        %v3132 = vmul.f32 %v3128, %v1405
        %v3133 = vmul.f32 %v3131, %v1405
        %v3134 = vsub.f32 %v3122, %v3132
        %v3135 = vsub.f32 %v3123, %v3133
        %v3136 = vmul.f32 %v3134, %v3134
        %v3137 = vmul.f32 %v3135, %v3135
        %v3138 = vsel %vm1401, %v3136, 0.0
        %3139 = vadd.xlane.f32.xlu0 %v3138
        %v3140 = vpop.xlane.xlu0 %3139
        %v3141 = vsel %vm1401, %v3137, 0.0
        %3142 = vadd.xlane.f32.xlu0 %v3141
        %v3143 = vpop.xlane.xlu0 %3142
        %v3144 = vmul.f32 %v3140, %v1405
        %v3145 = vmul.f32 %v3143, %v1405
        %v3146 = vadd.f32 %v3144, 1e-12
        %v3147 = vadd.f32 %v3145, 1e-12
        %v3148 = vrsqrt.pop %v3146
        %v3149 = vrsqrt.pop %v3147
        %v3150 = vmul.f32 %v3134, %v3148
        %v3151 = vmul.f32 %v3135, %v3149
        %v3153 = vlaneseq
        %v3154 = vshrl.u32 %v3153, 7
        %v3155 = vsub.s32 0, %v3154
        %v3156 = vrot.slane %v3124, %v3155
        %v3158 = vmul.f32 %v3150, %v3156
        %v3159 = vmul.f32 %v3151, %v3156
        %v3161 = vlaneseq
        %v3162 = vshrl.u32 %v3161, 7
        %v3163 = vsub.s32 0, %v3162
        %v3164 = vrot.slane %v3125, %v3163
        %v3166 = vadd.f32 %v3158, %v3164
        %v3167 = vadd.f32 %v3159, %v3164
        %3168 = vst.msk [vmem:[%s1384] sm:$0xff] %vm1401, %v3166
        %3169 = vst.msk [vmem:[%s1384 + $0x8] sm:$0xff] %vm1401, %v3167
      $region92: #{encoder_mix_forward.7} parent=83 // pred_fallthru
        _
      %p3170 = scmp.lt.s32.totalorder %s38, 1
      %s3171 = scalar_select %p3170, %s38, 1
      %s3172 = smul.addr %s3171, 2
      %s3173 = smul.addr %s3172, 8
      %s3174 = scalar_lea.vmem %s17, %s3173
      // Predicated region
      $region93: #{encoder_mix_forward.7} parent=83 // pred_check
        %p3175 = pneg %p652
      $region94: #{encoder_mix_forward.7} parent=83 // pred_check_branch
        %3177 = sbr.rel (%p3175) target = $region96
      $region95: #{encoder_mix_forward.7} parent=83 // pred_region
        _
      $region96: #{encoder_mix_forward.7} parent=83 // pred_fallthru
        _
    $region84: #{encoder_mix_forward.7} parent=5 // pred_fallthru
      _
    %p3178 = scmp.le.s32.totalorder 2, %s29
    // Predicated region
    $region97: #{encoder_mix_forward.7} parent=5 // pred_check
      %p3179 = pneg %p3178
    $region98: #{encoder_mix_forward.7} parent=5 // pred_check_branch
      %3181 = sbr.rel (%p3179) target = $region100
    $region99: #{encoder_mix_forward.7} parent=5 // pred_region
      %s3182 = ssub.s32 %s29, 2
      // Predicated region
      $region101: #{encoder_mix_forward.7} parent=99 // pred_check
        %p3183 = pneg %p658
      $region102: #{encoder_mix_forward.7} parent=99 // pred_check_branch
        %3185 = sbr.rel (%p3183) target = $region104
      $region103: #{encoder_mix_forward.7} parent=99 // pred_region
        %p3186 = scmp.lt.s32.totalorder %s40, 1
        %s3187 = scalar_select %p3186, %s40, 1
        %s3188 = smul.addr %s3187, 2
        %s3189 = smul.addr %s3188, 8
        %s3190 = scalar_lea.vmem %s17, %s3189
      $region104: #{encoder_mix_forward.7} parent=99 // pred_fallthru
        _
    $region100: #{encoder_mix_forward.7} parent=5 // pred_fallthru
      _
  $region6: #{encoder_mix_forward.7} parent=0 // loop_footer
    %s33 = sadd.s32 1, %s29
  $region7: #{encoder_mix_forward.7} parent=0 // loop_footer_branch
    %28 = sbr.rel target = $region3
  $region8: #{encoder_mix_forward.7} parent=0 // loop_exit
    _

</llo_original>
